<compile_context>
chip_gen: v7x
topology: tpu7x:2x2x1
jax: 0.10.0
libtpu: 0.0.40
codegen_flags: <defaults>
</compile_context>

<pallas_src>
import functools
import math

import jax
import jax.numpy as jnp
from jax.experimental import pallas as pl
from jax.experimental.pallas import tpu as pltpu

_HP = 128   # lane-padded Q/K width
_XP = 128   # lane-padded V / output width


def env_attn_kernel(x_ref, w1_ref, b1_ref, w2_ref, b2_ref, mask_ref, o_ref, *,
                    hp, scale1, scale2):
    """One grid step: TN nodes x E envs flattened into the rows of a 2D tile.

    x_ref   : (TNE, F)        flattened activations for TN nodes
    w*_ref  : (in, 2*HP+XP)   fused + zero-padded QKV weights
    b*_ref  : (1, 2*HP+XP)
    mask_ref: (TNE, TNE)      0 within a node's own E rows, -1e30 across nodes
    o_ref   : (TNE, XP)       lane-dense output block
    """
    mask = mask_ref[...]

    def attn_layer(inp, w_ref, b_ref, scale):
        # Single fused, lane-padded QKV projection on the MXU.
        qkv = jnp.dot(inp, w_ref[...],
                      preferred_element_type=jnp.float32) + b_ref[...]
        q = qkv[:, :hp]              # (TNE, HP)  -- slices on 128-lane boundaries
        k = qkv[:, hp:2 * hp]        # (TNE, HP)
        v = qkv[:, 2 * hp:]          # (TNE, XP)
        # Block-diagonal score matmul: one MXU pass instead of TN micro-matmuls.
        # Padded q/k columns are exactly zero, so the contraction is exact.
        s = jnp.dot(q, k.T, preferred_element_type=jnp.float32) * scale + mask
        m = jnp.max(s, axis=-1, keepdims=True)
        p = jnp.exp(s - m)                                   # masked entries -> 0.0
        inv = pl.reciprocal(jnp.sum(p, axis=-1, keepdims=True))   # exact reciprocal
        a = p * inv
        # Cross-node entries of `a` are exactly zero -> PV is per-node attention.
        return jnp.dot(a, v, preferred_element_type=jnp.float32)  # (TNE, XP)

    x2d = x_ref[...].astype(jnp.float32)
    a1 = attn_layer(x2d, w1_ref, b1_ref, scale1)     # attn1(x, x), XP-padded
    a2 = attn_layer(a1, w2_ref, b2_ref, scale2)      # attn2(a1, a1)
    o_ref[...] = (a1 + a2).astype(o_ref.dtype)       # residual, lane-dense store


def _fuse_qkv(wq, bq, wk, bk, wv, bv, in_pad):
    """Fuse Q/K/V weights into one (in_pad, 2*HP+XP) matrix with zero padding."""
    def pad(a, rows, cols):
        return jnp.pad(a, ((0, rows - a.shape[0]), (0, cols - a.shape[1])))
    w = jnp.concatenate([pad(wq, in_pad, _HP), pad(wk, in_pad, _HP),
                         pad(wv, in_pad, _XP)], axis=1)
    b = jnp.concatenate([pad(bq, 1, _HP), pad(bk, 1, _HP),
                         pad(bv, 1, _XP)], axis=1)
    return w, b


def env_attention_mech_forward(x, params, *, tn=32):
    N, E, F = x.shape
    H1 = params["wq1"].shape[1]
    H2 = params["wq2"].shape[1]
    X = params["wv1"].shape[1]
    assert H1 <= _HP and H2 <= _HP and X <= _XP

    # One-time wrapper-side weight fusion + lane padding.  Layer 2 consumes the
    # XP-padded layer-1 output, so its weight rows are zero-padded X -> XP
    # (padded activation columns are zero, so this is exact).
    w1, b1 = _fuse_qkv(params["wq1"], params["bq1"], params["wk1"], params["bk1"],
                       params["wv1"], params["bv1"], in_pad=F)
    w2, b2 = _fuse_qkv(params["wq2"], params["bq2"], params["wk2"], params["bk2"],
                       params["wv2"], params["bv2"], in_pad=_XP)

    # Tiling: TN nodes per grid step, flattened to 2D (TN*E ~ one 256-row MXU tile).
    tn = max(1, min(tn, N))
    n_pad = (-N) % tn
    xp = jnp.pad(x, ((0, n_pad), (0, 0), (0, 0))) if n_pad else x
    Np = N + n_pad
    x2d = xp.reshape(Np * E, F)          # free reshape of contiguous HBM
    tne = tn * E                          # (E=8 keeps this a multiple of 8)

    # Block-diagonal additive mask: 0 within a node's own E envs, -1e30 across
    # nodes, so softmax sees -inf there (exp underflows to exactly 0.0).
    node_id = jnp.arange(tne, dtype=jnp.int32) // E
    mask = jnp.where(node_id[:, None] == node_id[None, :],
                     jnp.float32(0.0), jnp.float32(-1e30))

    kernel = functools.partial(env_attn_kernel, hp=_HP,
                               scale1=1.0 / math.sqrt(H1),
                               scale2=1.0 / math.sqrt(H2))

    W = 2 * _HP + _XP
    flops = 2 * (Np * E) * (F * W + _HP * tne + tne * _XP        # layer 1
                            + _XP * W + _HP * tne + tne * _XP)   # layer 2
    bytes_accessed = 4 * (x2d.size + Np * E * _XP + w1.size + b1.size
                          + w2.size + b2.size + mask.size)
    cost = pl.CostEstimate(flops=int(flops),
                           transcendentals=int(2 * Np * E * tne),
                           bytes_accessed=int(bytes_accessed))

    out2d = pl.pallas_call(
        kernel,
        out_shape=jax.ShapeDtypeStruct((Np * E, _XP), x.dtype),
        grid_spec=pl.GridSpec(
            grid=(Np // tn,),
            in_specs=[
                pl.BlockSpec((tne, F), lambda n: (n, 0)),
                # Weights / bias / mask: whole-array blocks at a constant index
                # (DMA'd once, not re-fetched every grid step).
                pl.BlockSpec(w1.shape, lambda n: (0, 0)),
                pl.BlockSpec(b1.shape, lambda n: (0, 0)),
                pl.BlockSpec(w2.shape, lambda n: (0, 0)),
                pl.BlockSpec(b2.shape, lambda n: (0, 0)),
                pl.BlockSpec(mask.shape, lambda n: (0, 0)),
            ],
            out_specs=pl.BlockSpec((tne, _XP), lambda n: (n, 0)),
        ),
        compiler_params=pltpu.CompilerParams(
            dimension_semantics=("parallel",)),
        cost_estimate=cost,
    )(x2d, w1, b1, w2, b2, mask)

    out = out2d.reshape(Np, E, _XP)
    return out[:N, :, :X]


def _ref_forward(x, p):
    """Pure-JAX reference (mirrors the assumed PyTorch semantics)."""
    def attn(xq, xkv, wq, bq, wk, bk, wv, bv):
        q = xq @ wq + bq
        k = xkv @ wk + bk
        v = xkv @ wv + bv
        s = jnp.einsum("neh,nmh->nem", q, k) * (1.0 / math.sqrt(wq.shape[1]))
        a = jax.nn.softmax(s, axis=-1)
        return jnp.einsum("nem,nmx->nex", a, v)

    a1 = attn(x, x, p["wq1"], p["bq1"], p["wk1"], p["bk1"], p["wv1"], p["bv1"])
    a2 = attn(a1, a1, p["wq2"], p["bq2"], p["wk2"], p["bk2"], p["wv2"], p["bv2"])
    return a1 + a2


def _linear_params(key, d_in, d_out):
    """Deterministic torch.nn.Linear-style init (uniform in +-1/sqrt(d_in))."""
    kw, kb = jax.random.split(key)
    bound = 1.0 / math.sqrt(d_in)
    w = jax.random.uniform(kw, (d_in, d_out), jnp.float32, -bound, bound)
    b = jax.random.uniform(kb, (1, d_out), jnp.float32, -bound, bound)
    return w, b


if __name__ == "__main__":
    tot_nodes, tot_env = 64, 8
    node_features, expanded_size = 16, 32

    key = jax.random.PRNGKey(0)
    keys = jax.random.split(key, 7)

    x = jax.random.normal(keys[0], (tot_nodes, tot_env, node_features), jnp.float32)

    params = {}
    # attn1 = attention_mech(node_features, node_features, expanded_size)
    params["wq1"], params["bq1"] = _linear_params(keys[1], node_features, node_features)
    params["wk1"], params["bk1"] = _linear_params(keys[2], node_features, node_features)
    params["wv1"], params["bv1"] = _linear_params(keys[3], node_features, expanded_size)
    # attn2 = attention_mech(expanded_size, expanded_size, expanded_size)
    params["wq2"], params["bq2"] = _linear_params(keys[4], expanded_size, expanded_size)
    params["wk2"], params["bk2"] = _linear_params(keys[5], expanded_size, expanded_size)
    params["wv2"], params["bv2"] = _linear_params(keys[6], expanded_size, expanded_size)

    out = env_attention_mech_forward(x, params, tn=32)
    out = jax.block_until_ready(out)

    ref = _ref_forward(x, params)
    assert out.shape == (tot_nodes, tot_env, expanded_size), out.shape
    # Exact reciprocal is used now; the remaining tolerance only covers the
    # MXU's default single-pass f32 matmul rounding (applied on both the
    # kernel and the reference) when layer-2 inputs differ in the last ulp.
    err = float(jnp.max(jnp.abs(out - ref)))
    assert jnp.allclose(out, ref, atol=2e-3, rtol=2e-3), err

    print("KERNEL_OK")
</pallas_src>

<mosaic_0001>
module attributes {stable_mosaic.version = 11 : i64} {
  func.func @env_attn_kernel(%arg0: i32, %arg1: memref<256x16xf32, #tpu.memory_space<vmem>>, %arg2: memref<16x384xf32, #tpu.memory_space<vmem>>, %arg3: memref<1x384xf32, #tpu.memory_space<vmem>>, %arg4: memref<128x384xf32, #tpu.memory_space<vmem>>, %arg5: memref<1x384xf32, #tpu.memory_space<vmem>>, %arg6: memref<256x256xf32, #tpu.memory_space<vmem>>, %arg7: memref<256x128xf32, #tpu.memory_space<vmem>>) attributes {dimension_semantics = [#tpu.dimension_semantics<parallel>], iteration_bounds = array<i64: 2>, scalar_prefetch = 0 : i64, scratch_operands = 0 : i64, tpu.core_type = #tpu.core_type<tc>, window_params = [{transform_indices = @transform_0, window_bounds = array<i64: 256, 16>}, {pipeline_mode = #tpu.pipeline_mode<synchronous>, transform_indices = @transform_1, window_bounds = array<i64: 16, 384>}, {pipeline_mode = #tpu.pipeline_mode<synchronous>, transform_indices = @transform_2, window_bounds = array<i64: 1, 384>}, {pipeline_mode = #tpu.pipeline_mode<synchronous>, transform_indices = @transform_3, window_bounds = array<i64: 128, 384>}, {pipeline_mode = #tpu.pipeline_mode<synchronous>, transform_indices = @transform_4, window_bounds = array<i64: 1, 384>}, {pipeline_mode = #tpu.pipeline_mode<synchronous>, transform_indices = @transform_5, window_bounds = array<i64: 256, 256>}, {transform_indices = @transform_6, window_bounds = array<i64: 256, 128>}]} {
    %c0 = arith.constant 0 : index
    %c0_0 = arith.constant 0 : index
    %0 = vector.load %arg6[%c0, %c0_0] : memref<256x256xf32, #tpu.memory_space<vmem>>, vector<256x256xf32>
    %c0_1 = arith.constant 0 : index
    %c0_2 = arith.constant 0 : index
    %1 = vector.load %arg1[%c0_1, %c0_2] : memref<256x16xf32, #tpu.memory_space<vmem>>, vector<256x16xf32>
    %c0_3 = arith.constant 0 : index
    %c0_4 = arith.constant 0 : index
    %2 = vector.load %arg2[%c0_3, %c0_4] : memref<16x384xf32, #tpu.memory_space<vmem>>, vector<16x384xf32>
    %cst = arith.constant dense<0.000000e+00> : vector<256x384xf32>
    %3 = tpu.matmul %1, %2, %cst {dimension_numbers = #tpu.dot_dimension_numbers<[1], [0], [0], [1], [0, 0, 1, 1], [], []>} : vector<256x16xf32>, vector<16x384xf32>, vector<256x384xf32> -> vector<256x384xf32>
    %c0_5 = arith.constant 0 : index
    %c0_6 = arith.constant 0 : index
    %4 = vector.load %arg3[%c0_5, %c0_6] : memref<1x384xf32, #tpu.memory_space<vmem>>, vector<1x384xf32>
    %5 = vector.broadcast %4 : vector<1x384xf32> to vector<256x384xf32>
    %6 = arith.addf %3, %5 : vector<256x384xf32>
    %7 = vector.extract_strided_slice %6 {offsets = [0, 0], sizes = [256, 128], strides = [1, 1]} : vector<256x384xf32> to vector<256x128xf32>
    %8 = vector.extract_strided_slice %6 {offsets = [0, 128], sizes = [256, 128], strides = [1, 1]} : vector<256x384xf32> to vector<256x128xf32>
    %9 = vector.extract_strided_slice %6 {offsets = [0, 256], sizes = [256, 128], strides = [1, 1]} : vector<256x384xf32> to vector<256x128xf32>
    %10 = tpu.transpose %8, [1, 0] : vector<256x128xf32> -> vector<128x256xf32>
    %cst_7 = arith.constant dense<0.000000e+00> : vector<256x256xf32>
    %11 = tpu.matmul %7, %10, %cst_7 {dimension_numbers = #tpu.dot_dimension_numbers<[1], [0], [0], [1], [0, 0, 1, 1], [], []>} : vector<256x128xf32>, vector<128x256xf32>, vector<256x256xf32> -> vector<256x256xf32>
    %cst_8 = arith.constant 2.500000e-01 : f32
    %12 = vector.broadcast %cst_8 : f32 to vector<256x256xf32>
    %13 = arith.mulf %11, %12 : vector<256x256xf32>
    %14 = arith.addf %13, %0 : vector<256x256xf32>
    %cst_9 = arith.constant dense<0xFF800000> : vector<256xf32>
    %15 = vector.multi_reduction <maximumf>, %14, %cst_9 [1] : vector<256x256xf32> to vector<256xf32>
    %16 = vector.shape_cast %15 : vector<256xf32> to vector<256x1xf32>
    %17 = vector.broadcast %16 : vector<256x1xf32> to vector<256x256xf32>
    %18 = arith.subf %14, %17 : vector<256x256xf32>
    %19 = math.exp %18 : vector<256x256xf32>
    %cst_10 = arith.constant dense<0.000000e+00> : vector<256xf32>
    %20 = vector.multi_reduction <add>, %19, %cst_10 [1] : vector<256x256xf32> to vector<256xf32>
    %21 = vector.shape_cast %20 : vector<256xf32> to vector<256x1xf32>
    %22 = tpu.reciprocal %21 : vector<256x1xf32> -> vector<256x1xf32>
    %23 = vector.broadcast %22 : vector<256x1xf32> to vector<256x256xf32>
    %24 = arith.mulf %19, %23 : vector<256x256xf32>
    %cst_11 = arith.constant dense<0.000000e+00> : vector<256x128xf32>
    %25 = tpu.matmul %24, %9, %cst_11 {dimension_numbers = #tpu.dot_dimension_numbers<[1], [0], [0], [1], [0, 0, 1, 1], [], []>} : vector<256x256xf32>, vector<256x128xf32>, vector<256x128xf32> -> vector<256x128xf32>
    %c0_12 = arith.constant 0 : index
    %c0_13 = arith.constant 0 : index
    %26 = vector.load %arg4[%c0_12, %c0_13] : memref<128x384xf32, #tpu.memory_space<vmem>>, vector<128x384xf32>
    %cst_14 = arith.constant dense<0.000000e+00> : vector<256x384xf32>
    %27 = tpu.matmul %25, %26, %cst_14 {dimension_numbers = #tpu.dot_dimension_numbers<[1], [0], [0], [1], [0, 0, 1, 1], [], []>} : vector<256x128xf32>, vector<128x384xf32>, vector<256x384xf32> -> vector<256x384xf32>
    %c0_15 = arith.constant 0 : index
    %c0_16 = arith.constant 0 : index
    %28 = vector.load %arg5[%c0_15, %c0_16] : memref<1x384xf32, #tpu.memory_space<vmem>>, vector<1x384xf32>
    %29 = vector.broadcast %28 : vector<1x384xf32> to vector<256x384xf32>
    %30 = arith.addf %27, %29 : vector<256x384xf32>
    %31 = vector.extract_strided_slice %30 {offsets = [0, 0], sizes = [256, 128], strides = [1, 1]} : vector<256x384xf32> to vector<256x128xf32>
    %32 = vector.extract_strided_slice %30 {offsets = [0, 128], sizes = [256, 128], strides = [1, 1]} : vector<256x384xf32> to vector<256x128xf32>
    %33 = vector.extract_strided_slice %30 {offsets = [0, 256], sizes = [256, 128], strides = [1, 1]} : vector<256x384xf32> to vector<256x128xf32>
    %34 = tpu.transpose %32, [1, 0] : vector<256x128xf32> -> vector<128x256xf32>
    %cst_17 = arith.constant dense<0.000000e+00> : vector<256x256xf32>
    %35 = tpu.matmul %31, %34, %cst_17 {dimension_numbers = #tpu.dot_dimension_numbers<[1], [0], [0], [1], [0, 0, 1, 1], [], []>} : vector<256x128xf32>, vector<128x256xf32>, vector<256x256xf32> -> vector<256x256xf32>
    %cst_18 = arith.constant 0.176776692 : f32
    %36 = vector.broadcast %cst_18 : f32 to vector<256x256xf32>
    %37 = arith.mulf %35, %36 : vector<256x256xf32>
    %38 = arith.addf %37, %0 : vector<256x256xf32>
    %cst_19 = arith.constant dense<0xFF800000> : vector<256xf32>
    %39 = vector.multi_reduction <maximumf>, %38, %cst_19 [1] : vector<256x256xf32> to vector<256xf32>
    %40 = vector.shape_cast %39 : vector<256xf32> to vector<256x1xf32>
    %41 = vector.broadcast %40 : vector<256x1xf32> to vector<256x256xf32>
    %42 = arith.subf %38, %41 : vector<256x256xf32>
    %43 = math.exp %42 : vector<256x256xf32>
    %cst_20 = arith.constant dense<0.000000e+00> : vector<256xf32>
    %44 = vector.multi_reduction <add>, %43, %cst_20 [1] : vector<256x256xf32> to vector<256xf32>
    %45 = vector.shape_cast %44 : vector<256xf32> to vector<256x1xf32>
    %46 = tpu.reciprocal %45 : vector<256x1xf32> -> vector<256x1xf32>
    %47 = vector.broadcast %46 : vector<256x1xf32> to vector<256x256xf32>
    %48 = arith.mulf %43, %47 : vector<256x256xf32>
    %cst_21 = arith.constant dense<0.000000e+00> : vector<256x128xf32>
    %49 = tpu.matmul %48, %33, %cst_21 {dimension_numbers = #tpu.dot_dimension_numbers<[1], [0], [0], [1], [0, 0, 1, 1], [], []>} : vector<256x256xf32>, vector<256x128xf32>, vector<256x128xf32> -> vector<256x128xf32>
    %50 = arith.addf %25, %49 : vector<256x128xf32>
    %c0_22 = arith.constant 0 : index
    %c0_23 = arith.constant 0 : index
    %51 = vector.load %arg7[%c0_22, %c0_23] : memref<256x128xf32, #tpu.memory_space<vmem>>, vector<256x128xf32>
    tpu.vector_store %arg7[%c0_22, %c0_23], %50 {strides = array<i32>} : memref<256x128xf32, #tpu.memory_space<vmem>>, vector<256x128xf32>,
    return
  }
  func.func @transform_0(%arg0: i32) -> (i32, i32) {
    %c0_i32 = arith.constant 0 : i32
    %c0_i32_0 = arith.constant 0 : i32
    return %arg0, %c0_i32 : i32, i32
  }
  func.func @transform_1(%arg0: i32) -> (i32, i32) {
    %c0_i32 = arith.constant 0 : i32
    %c0_i32_0 = arith.constant 0 : i32
    %c0_i32_1 = arith.constant 0 : i32
    return %c0_i32, %c0_i32_0 : i32, i32
  }
  func.func @transform_2(%arg0: i32) -> (i32, i32) {
    %c0_i32 = arith.constant 0 : i32
    %c0_i32_0 = arith.constant 0 : i32
    %c0_i32_1 = arith.constant 0 : i32
    return %c0_i32, %c0_i32_0 : i32, i32
  }
  func.func @transform_3(%arg0: i32) -> (i32, i32) {
    %c0_i32 = arith.constant 0 : i32
    %c0_i32_0 = arith.constant 0 : i32
    %c0_i32_1 = arith.constant 0 : i32
    return %c0_i32, %c0_i32_0 : i32, i32
  }
  func.func @transform_4(%arg0: i32) -> (i32, i32) {
    %c0_i32 = arith.constant 0 : i32
    %c0_i32_0 = arith.constant 0 : i32
    %c0_i32_1 = arith.constant 0 : i32
    return %c0_i32, %c0_i32_0 : i32, i32
  }
  func.func @transform_5(%arg0: i32) -> (i32, i32) {
    %c0_i32 = arith.constant 0 : i32
    %c0_i32_0 = arith.constant 0 : i32
    %c0_i32_1 = arith.constant 0 : i32
    return %c0_i32, %c0_i32_0 : i32, i32
  }
  func.func @transform_6(%arg0: i32) -> (i32, i32) {
    %c0_i32 = arith.constant 0 : i32
    %c0_i32_0 = arith.constant 0 : i32
    return %arg0, %c0_i32 : i32, i32
  }
}

</mosaic_0001>

<llo_original>
// kernel: tpu_custom_call.1
$region0: #{tpu_custom_call.1}
  #allocation0 [shape = 'u32[]', space=smem, size = 0x4, offset = 0x4, fixed_abs, tag = 'smem constant byte address 0x4 - core index']
  #allocation1 [shape = 'u32[144,128]{1,0:T(1,128)}', space=vmem, size = 0x12000, scoped, tag = 'internal scratch']
  %s0 = inlined_call_operand.vmem [shape: f32[512,16], index: 0, kind: input, shape index: {}]
  %s1 = inlined_call_operand.vmem [shape: f32[16,384], index: 1, kind: input, shape index: {}]
  %s2 = inlined_call_operand.vmem [shape: f32[1,384], index: 2, kind: input, shape index: {}]
  %s3 = inlined_call_operand.hbm [shape: f32[128,384], index: 3, kind: input, shape index: {}]
  %s4 = inlined_call_operand.vmem [shape: f32[1,384], index: 4, kind: input, shape index: {}]
  %s5 = inlined_call_operand.vmem [shape: f32[256,256], index: 5, kind: input, shape index: {}]
  %s6 = inlined_call_operand.hbm [shape: f32[512,128], index: 6, kind: output, shape index: {}]
  %s7 = sld [smem:[#allocation0]]
  $region61: #{tpu_custom_call.1} parent=0
    _
  %s9 = ssub.s32 1, %s7
  %s10 = scalar_select 0, %s9, %s7
  $region1: #{tpu_custom_call.1} parent=0
    #allocation2 [shape = 'u8[196608]{0}', space=vmem, size = 0x30000, scoped, tag = 'input window, operand 3, single buffered']
    #allocation3 [shape = 's32[2]{0}', space=sflag, size = 0x8, scoped, tag = 'scoped memory for tpu_custom_call.1']
    #allocation4 [shape = 's32[2]{0}', space=sflag, size = 0x8, scoped, tag = 'scoped memory for tpu_custom_call.1']
    #allocation5 [shape = 'u8[262144]{0}', space=vmem, size = 0x40000, scoped, tag = 'output window, operand 0']
    %11 = vsyncpa [#allocation3], 0
    %12 = vsyncpa [#allocation4], 0
    %s13 = scalar_lea.sflag [#allocation4], 1
    %14 = vsyncpa %s13, 0
    loop: start=0, step=1, limit=4
    $region2: #{tpu_custom_call.1} parent=1 // loop_pre_header
      _
    $region3: #{tpu_custom_call.1} parent=1 // loop_header
      %s16 = sphi 0, %s20
      %p17 = scmp.ge.s32.totalorder %s16, 4
      %s26 = sphi 0, %s28
      %s29 = sphi 0, %s26
      %s30 = sphi 0, %s29
      %s46 = sphi 0, %s30
      %s50 = sphi 0, %s50
      %s52 = sphi 0, %s50
      %s53 = sphi 0, %s52
      %s67 = sphi 0, %s53
      %s71 = sphi 0, %s71
      %s73 = sphi 0, %s71
      %s74 = sphi 0, %s73
      %s88 = sphi 0, %s74
      %s92 = sphi 0, %s92
      %s94 = sphi 0, %s92
      %s95 = sphi 0, %s94
      %s109 = sphi 0, %s95
      %s113 = sphi 0, %s113
      %s115 = sphi 0, %s113
      %s116 = sphi 0, %s115
      %s130 = sphi 0, %s116
      %s134 = sphi 0, %s134
      %s136 = sphi 0, %s134
      %s137 = sphi 0, %s136
      %s151 = sphi 0, %s137
      %s157 = sphi 0, %s159
      %s160 = sphi 0, %s157
      %s161 = sphi 0, %s160
      %s177 = sphi 0, %s161
    $region4: #{tpu_custom_call.1} parent=1 // loop_header_branch
      %19 = sbr.rel (%p17) target = $region8
    $region5: #{tpu_custom_call.1} parent=1 // loop_body
      %s21 = ssub.s32 %s16, 1
      %s22 = ssub.s32 %s16, 2
      %s23 = sadd.s32 %s16, 1
      %s24 = ssub.s32 %s16, %s23
      %p25 = scmp.eq.s32.totalorder %s24, 0
      %s27 = sadd.s32 %s26, 1
      %s28 = scalar_select %p25, %s26, %s27
      %p31 = pneg %p25
      %p32 = scmp.eq.s32.totalorder %s16, 1
      %p33 = por %p31, %p32
      %p34 = scmp.ne.s32.totalorder %s26, %s29
      %p35 = scmp.eq.s32.totalorder %s16, 0
      %p36 = por %p34, %p35
      %p37 = scmp.ne.s32.totalorder %s26, %s29
      %p38 = scmp.eq.s32.totalorder %s21, 1
      %p39 = por %p37, %p38
      %p40 = scmp.ne.s32.totalorder %s29, %s30
      %p41 = scmp.eq.s32.totalorder %s21, 0
      %p42 = por %p40, %p41
      %p43 = scmp.ne.s32.totalorder %s29, %s30
      %p44 = scmp.eq.s32.totalorder %s22, 1
      %p45 = por %p43, %p44
      %p47 = scmp.ne.s32.totalorder %s30, %s46
      %p48 = scmp.eq.s32.totalorder %s22, 0
      %p49 = por %p47, %p48
      %s51 = sadd.s32 %s50, 1
      %p54 = scmp.eq.s32.totalorder %s16, 1
      %p55 = scmp.ne.s32.totalorder %s50, %s52
      %p56 = scmp.eq.s32.totalorder %s16, 0
      %p57 = por %p55, %p56
      %p58 = scmp.ne.s32.totalorder %s50, %s52
      %p59 = scmp.eq.s32.totalorder %s21, 1
      %p60 = por %p58, %p59
      %p61 = scmp.ne.s32.totalorder %s52, %s53
      %p62 = scmp.eq.s32.totalorder %s21, 0
      %p63 = por %p61, %p62
      %p64 = scmp.ne.s32.totalorder %s52, %s53
      %p65 = scmp.eq.s32.totalorder %s22, 1
      %p66 = por %p64, %p65
      %p68 = scmp.ne.s32.totalorder %s53, %s67
      %p69 = scmp.eq.s32.totalorder %s22, 0
      %p70 = por %p68, %p69
      %s72 = sadd.s32 %s71, 1
      %p75 = scmp.eq.s32.totalorder %s16, 1
      %p76 = scmp.ne.s32.totalorder %s71, %s73
      %p77 = scmp.eq.s32.totalorder %s16, 0
      %p78 = por %p76, %p77
      %p79 = scmp.ne.s32.totalorder %s71, %s73
      %p80 = scmp.eq.s32.totalorder %s21, 1
      %p81 = por %p79, %p80
      %p82 = scmp.ne.s32.totalorder %s73, %s74
      %p83 = scmp.eq.s32.totalorder %s21, 0
      %p84 = por %p82, %p83
      %p85 = scmp.ne.s32.totalorder %s73, %s74
      %p86 = scmp.eq.s32.totalorder %s22, 1
      %p87 = por %p85, %p86
      %p89 = scmp.ne.s32.totalorder %s74, %s88
      %p90 = scmp.eq.s32.totalorder %s22, 0
      %p91 = por %p89, %p90
      %s93 = sadd.s32 %s92, 1
      %p96 = scmp.eq.s32.totalorder %s16, 1
      %p97 = scmp.ne.s32.totalorder %s92, %s94
      %p98 = scmp.eq.s32.totalorder %s16, 0
      %p99 = por %p97, %p98
      %p100 = scmp.ne.s32.totalorder %s92, %s94
      %p101 = scmp.eq.s32.totalorder %s21, 1
      %p102 = por %p100, %p101
      %p103 = scmp.ne.s32.totalorder %s94, %s95
      %p104 = scmp.eq.s32.totalorder %s21, 0
      %p105 = por %p103, %p104
      %p106 = scmp.ne.s32.totalorder %s94, %s95
      %p107 = scmp.eq.s32.totalorder %s22, 1
      %p108 = por %p106, %p107
      %p110 = scmp.ne.s32.totalorder %s95, %s109
      %p111 = scmp.eq.s32.totalorder %s22, 0
      %p112 = por %p110, %p111
      %s114 = sadd.s32 %s113, 1
      %p117 = scmp.eq.s32.totalorder %s16, 1
      %p118 = scmp.ne.s32.totalorder %s113, %s115
      %p119 = scmp.eq.s32.totalorder %s16, 0
      %p120 = por %p118, %p119
      %p121 = scmp.ne.s32.totalorder %s113, %s115
      %p122 = scmp.eq.s32.totalorder %s21, 1
      %p123 = por %p121, %p122
      %p124 = scmp.ne.s32.totalorder %s115, %s116
      %p125 = scmp.eq.s32.totalorder %s21, 0
      %p126 = por %p124, %p125
      %p127 = scmp.ne.s32.totalorder %s115, %s116
      %p128 = scmp.eq.s32.totalorder %s22, 1
      %p129 = por %p127, %p128
      %p131 = scmp.ne.s32.totalorder %s116, %s130
      %p132 = scmp.eq.s32.totalorder %s22, 0
      %p133 = por %p131, %p132
      %s135 = sadd.s32 %s134, 1
      %p138 = scmp.eq.s32.totalorder %s16, 1
      %p139 = scmp.ne.s32.totalorder %s134, %s136
      %p140 = scmp.eq.s32.totalorder %s16, 0
      %p141 = por %p139, %p140
      %p142 = scmp.ne.s32.totalorder %s134, %s136
      %p143 = scmp.eq.s32.totalorder %s21, 1
      %p144 = por %p142, %p143
      %p145 = scmp.ne.s32.totalorder %s136, %s137
      %p146 = scmp.eq.s32.totalorder %s21, 0
      %p147 = por %p145, %p146
      %p148 = scmp.ne.s32.totalorder %s136, %s137
      %p149 = scmp.eq.s32.totalorder %s22, 1
      %p150 = por %p148, %p149
      %p152 = scmp.ne.s32.totalorder %s137, %s151
      %p153 = scmp.eq.s32.totalorder %s22, 0
      %p154 = por %p152, %p153
      %s155 = ssub.s32 %s16, %s23
      %p156 = scmp.eq.s32.totalorder %s155, 0
      %s158 = sadd.s32 %s157, 1
      %s159 = scalar_select %p156, %s157, %s158
      %p162 = pneg %p156
      %p163 = scmp.eq.s32.totalorder %s16, 1
      %p164 = por %p162, %p163
      %p165 = scmp.ne.s32.totalorder %s157, %s160
      %p166 = scmp.eq.s32.totalorder %s16, 0
      %p167 = por %p165, %p166
      %p168 = scmp.ne.s32.totalorder %s157, %s160
      %p169 = scmp.eq.s32.totalorder %s21, 1
      %p170 = por %p168, %p169
      %p171 = scmp.ne.s32.totalorder %s160, %s161
      %p172 = scmp.eq.s32.totalorder %s21, 0
      %p173 = por %p171, %p172
      %p174 = scmp.ne.s32.totalorder %s160, %s161
      %p175 = scmp.eq.s32.totalorder %s22, 1
      %p176 = por %p174, %p175
      %p178 = scmp.ne.s32.totalorder %s161, %s177
      %p179 = scmp.eq.s32.totalorder %s22, 0
      %p180 = por %p178, %p179
      %p181 = scmp.le.s32.totalorder 1, %s16
      %p182 = scmp.lt.s32.totalorder %s16, 3
      %p183 = pnand %p181, %p182
      %p184 = pneg %p183
      // Predicated region
      $region9: #{tpu_custom_call.1} parent=5 // pred_check
        _
      $region10: #{tpu_custom_call.1} parent=5 // pred_check_branch
        %186 = sbr.rel (%p183) target = $region12
      $region11: #{tpu_custom_call.1} parent=5 // pred_region
        %s187 = ssub.s32 %s16, 1
        // Predicated region
        $region13: #{tpu_custom_call.1} parent=11 // pred_check
          %p188 = pneg %p63
        $region14: #{tpu_custom_call.1} parent=11 // pred_check_branch
          %190 = sbr.rel (%p188) target = $region16
        $region15: #{tpu_custom_call.1} parent=11 // pred_region
          _
        $region16: #{tpu_custom_call.1} parent=11 // pred_fallthru
          _
        // Predicated region
        $region17: #{tpu_custom_call.1} parent=11 // pred_check
          %p191 = pneg %p84
        $region18: #{tpu_custom_call.1} parent=11 // pred_check_branch
          %193 = sbr.rel (%p191) target = $region20
        $region19: #{tpu_custom_call.1} parent=11 // pred_region
          _
        $region20: #{tpu_custom_call.1} parent=11 // pred_fallthru
          _
        // Predicated region
        $region21: #{tpu_custom_call.1} parent=11 // pred_check
          %p194 = pneg %p105
        $region22: #{tpu_custom_call.1} parent=11 // pred_check_branch
          %196 = sbr.rel (%p194) target = $region24
        $region23: #{tpu_custom_call.1} parent=11 // pred_region
          %s198 = ssub.s32 6144, 6144
          %199 = vsyncadd [#allocation3], %s198
          %s200 = sshll.u32 [#allocation2], 4
          %s201 = int_to_ptr.vmem [resolvable:$true] %s200
          %206 = dma.hbm_to_vmem [thread:$0]  %s3, 6144, %s201, [#allocation3], 384, 384, 24
        $region24: #{tpu_custom_call.1} parent=11 // pred_fallthru
          _
        // Predicated region
        $region25: #{tpu_custom_call.1} parent=11 // pred_check
          %p207 = pneg %p126
        $region26: #{tpu_custom_call.1} parent=11 // pred_check_branch
          %209 = sbr.rel (%p207) target = $region28
        $region27: #{tpu_custom_call.1} parent=11 // pred_region
          _
        $region28: #{tpu_custom_call.1} parent=11 // pred_fallthru
          _
        // Predicated region
        $region29: #{tpu_custom_call.1} parent=11 // pred_check
          %p210 = pneg %p147
        $region30: #{tpu_custom_call.1} parent=11 // pred_check_branch
          %212 = sbr.rel (%p210) target = $region32
        $region31: #{tpu_custom_call.1} parent=11 // pred_region
          _
        $region32: #{tpu_custom_call.1} parent=11 // pred_fallthru
          _
      $region12: #{tpu_custom_call.1} parent=5 // pred_fallthru
        _
      %p213 = scmp.lt.s32.totalorder %s16, 2
      // Predicated region
      $region33: #{tpu_custom_call.1} parent=5 // pred_check
        %p214 = pneg %p213
      $region34: #{tpu_custom_call.1} parent=5 // pred_check_branch
        %216 = sbr.rel (%p214) target = $region36
      $region35: #{tpu_custom_call.1} parent=5 // pred_region
        // Predicated region
        $region37: #{tpu_custom_call.1} parent=35 // pred_check
          %p217 = pneg %p36
        $region38: #{tpu_custom_call.1} parent=35 // pred_check_branch
          %219 = sbr.rel (%p217) target = $region40
        $region39: #{tpu_custom_call.1} parent=35 // pred_region
          %s220 = smul.u32 32, %s16
          %p221 = scmp.lt.s32.totalorder %s220, 63
          %s222 = scalar_select %p221, %s220, 63
          %s223 = smul.addr %s222, 8
          %s224 = scalar_lea.vmem %s0, %s223
          %s225 = smul.u32 32, %s16
        $region40: #{tpu_custom_call.1} parent=35 // pred_fallthru
          _
      $region36: #{tpu_custom_call.1} parent=5 // pred_fallthru
        _
      %p226 = scmp.le.s32.totalorder 1, %s16
      %p227 = scmp.lt.s32.totalorder %s16, 3
      %p228 = pnand %p226, %p227
      %p229 = pneg %p228
      // Predicated region
      $region41: #{tpu_custom_call.1} parent=5 // pred_check
        _
      $region42: #{tpu_custom_call.1} parent=5 // pred_check_branch
        %231 = sbr.rel (%p228) target = $region44
      $region43: #{tpu_custom_call.1} parent=5 // pred_region
        %s232 = ssub.s32 %s16, 1
        // Predicated region
        $region45: #{tpu_custom_call.1} parent=43 // pred_check
          %p233 = pneg %p105
        $region46: #{tpu_custom_call.1} parent=43 // pred_check_branch
          %235 = sbr.rel (%p233) target = $region48
        $region47: #{tpu_custom_call.1} parent=43 // pred_region
          %236 = dma.done [#allocation3], 6144
        $region48: #{tpu_custom_call.1} parent=43 // pred_fallthru
          _
        %s237 = smul.u32 32, %s21
        %p238 = scmp.lt.s32.totalorder %s237, 63
        %s239 = scalar_select %p238, %s237, 63
        %s240 = smul.addr %s239, 8
        %s241 = scalar_lea.vmem %s0, %s240
        %p242 = pneg %p42
        %p243 = pneg %p39
        %p244 = pneg %p63
        %p245 = pneg %p60
        %p246 = pneg %p84
        %p247 = pneg %p81
        %p248 = pneg %p105
        %p249 = pneg %p102
        %p250 = pneg %p126
        %p251 = pneg %p123
        %p252 = pneg %p147
        %p253 = pneg %p144
        %p254 = pneg %p173
        %p255 = pneg %p170
        %s256 = sand.u32 %s160, 1
        %s257 = scalar_lea.sflag [#allocation4], %s256
        %s258 = sand.u32 %s160, 1
        %s259 = smul.addr %s258, 256
        %s260 = scalar_lea.vmem [#allocation5], %s259
        %s261 = smul.u32 32, %s21
        %p262 = scmp.lt.s32.totalorder %s261, 63
        %s263 = scalar_select %p262, %s261, 63
        %s264 = smul.addr %s263, 8
        %s265 = scalar_lea.vmem %s0, %s264
        %s266 = smul.u32 32, %s21
        %s267 = smul.u32 32, %s21
        %v268 = vld [vmem:[%s5] sm:$0xff]
        %v269 = vld [vmem:[%s5 + $0x8] sm:$0xff]
        %v270 = vld [vmem:[%s5 + $0x10] sm:$0xff]
        %v271 = vld [vmem:[%s5 + $0x18] sm:$0xff]
        %v272 = vld [vmem:[%s5 + $0x20] sm:$0xff]
        %v273 = vld [vmem:[%s5 + $0x28] sm:$0xff]
        %v274 = vld [vmem:[%s5 + $0x30] sm:$0xff]
        %v275 = vld [vmem:[%s5 + $0x38] sm:$0xff]
        %v276 = vld [vmem:[%s5 + $0x40] sm:$0xff]
        %v277 = vld [vmem:[%s5 + $0x48] sm:$0xff]
        %v278 = vld [vmem:[%s5 + $0x50] sm:$0xff]
        %v279 = vld [vmem:[%s5 + $0x58] sm:$0xff]
        %v280 = vld [vmem:[%s5 + $0x60] sm:$0xff]
        %v281 = vld [vmem:[%s5 + $0x68] sm:$0xff]
        %v282 = vld [vmem:[%s5 + $0x70] sm:$0xff]
        %v283 = vld [vmem:[%s5 + $0x78] sm:$0xff]
        %v284 = vld [vmem:[%s5 + $0x80] sm:$0xff]
        %v285 = vld [vmem:[%s5 + $0x88] sm:$0xff]
        %v286 = vld [vmem:[%s5 + $0x90] sm:$0xff]
        %v287 = vld [vmem:[%s5 + $0x98] sm:$0xff]
        %v288 = vld [vmem:[%s5 + $0xa0] sm:$0xff]
        %v289 = vld [vmem:[%s5 + $0xa8] sm:$0xff]
        %v290 = vld [vmem:[%s5 + $0xb0] sm:$0xff]
        %v291 = vld [vmem:[%s5 + $0xb8] sm:$0xff]
        %v292 = vld [vmem:[%s5 + $0xc0] sm:$0xff]
        %v293 = vld [vmem:[%s5 + $0xc8] sm:$0xff]
        %v294 = vld [vmem:[%s5 + $0xd0] sm:$0xff]
        %v295 = vld [vmem:[%s5 + $0xd8] sm:$0xff]
        %v296 = vld [vmem:[%s5 + $0xe0] sm:$0xff]
        %v297 = vld [vmem:[%s5 + $0xe8] sm:$0xff]
        %v298 = vld [vmem:[%s5 + $0xf0] sm:$0xff]
        %v299 = vld [vmem:[%s5 + $0xf8] sm:$0xff]
        %v300 = vld [vmem:[%s5 + $0x100] sm:$0xff]
        %v301 = vld [vmem:[%s5 + $0x108] sm:$0xff]
        %v302 = vld [vmem:[%s5 + $0x110] sm:$0xff]
        %v303 = vld [vmem:[%s5 + $0x118] sm:$0xff]
        %v304 = vld [vmem:[%s5 + $0x120] sm:$0xff]
        %v305 = vld [vmem:[%s5 + $0x128] sm:$0xff]
        %v306 = vld [vmem:[%s5 + $0x130] sm:$0xff]
        %v307 = vld [vmem:[%s5 + $0x138] sm:$0xff]
        %v308 = vld [vmem:[%s5 + $0x140] sm:$0xff]
        %v309 = vld [vmem:[%s5 + $0x148] sm:$0xff]
        %v310 = vld [vmem:[%s5 + $0x150] sm:$0xff]
        %v311 = vld [vmem:[%s5 + $0x158] sm:$0xff]
        %v312 = vld [vmem:[%s5 + $0x160] sm:$0xff]
        %v313 = vld [vmem:[%s5 + $0x168] sm:$0xff]
        %v314 = vld [vmem:[%s5 + $0x170] sm:$0xff]
        %v315 = vld [vmem:[%s5 + $0x178] sm:$0xff]
        %v316 = vld [vmem:[%s5 + $0x180] sm:$0xff]
        %v317 = vld [vmem:[%s5 + $0x188] sm:$0xff]
        %v318 = vld [vmem:[%s5 + $0x190] sm:$0xff]
        %v319 = vld [vmem:[%s5 + $0x198] sm:$0xff]
        %v320 = vld [vmem:[%s5 + $0x1a0] sm:$0xff]
        %v321 = vld [vmem:[%s5 + $0x1a8] sm:$0xff]
        %v322 = vld [vmem:[%s5 + $0x1b0] sm:$0xff]
        %v323 = vld [vmem:[%s5 + $0x1b8] sm:$0xff]
        %v324 = vld [vmem:[%s5 + $0x1c0] sm:$0xff]
        %v325 = vld [vmem:[%s5 + $0x1c8] sm:$0xff]
        %v326 = vld [vmem:[%s5 + $0x1d0] sm:$0xff]
        %v327 = vld [vmem:[%s5 + $0x1d8] sm:$0xff]
        %v328 = vld [vmem:[%s5 + $0x1e0] sm:$0xff]
        %v329 = vld [vmem:[%s5 + $0x1e8] sm:$0xff]
        %v330 = vld [vmem:[%s5 + $0x1f0] sm:$0xff]
        %v331 = vld [vmem:[%s5 + $0x1f8] sm:$0xff]
        %v332 = vld [vmem:[%s265] sm:$0xff]
        %v333 = vld [vmem:[%s265 + $0x8] sm:$0xff]
        %v334 = vld [vmem:[%s265 + $0x10] sm:$0xff]
        %v335 = vld [vmem:[%s265 + $0x18] sm:$0xff]
        %v336 = vld [vmem:[%s265 + $0x20] sm:$0xff]
        %v337 = vld [vmem:[%s265 + $0x28] sm:$0xff]
        %v338 = vld [vmem:[%s265 + $0x30] sm:$0xff]
        %v339 = vld [vmem:[%s265 + $0x38] sm:$0xff]
        %v340 = vld [vmem:[%s265 + $0x40] sm:$0xff]
        %v341 = vld [vmem:[%s265 + $0x48] sm:$0xff]
        %v342 = vld [vmem:[%s265 + $0x50] sm:$0xff]
        %v343 = vld [vmem:[%s265 + $0x58] sm:$0xff]
        %v344 = vld [vmem:[%s265 + $0x60] sm:$0xff]
        %v345 = vld [vmem:[%s265 + $0x68] sm:$0xff]
        %v346 = vld [vmem:[%s265 + $0x70] sm:$0xff]
        %v347 = vld [vmem:[%s265 + $0x78] sm:$0xff]
        %v348 = vld [vmem:[%s265 + $0x80] sm:$0xff]
        %v349 = vld [vmem:[%s265 + $0x88] sm:$0xff]
        %v350 = vld [vmem:[%s265 + $0x90] sm:$0xff]
        %v351 = vld [vmem:[%s265 + $0x98] sm:$0xff]
        %v352 = vld [vmem:[%s265 + $0xa0] sm:$0xff]
        %v353 = vld [vmem:[%s265 + $0xa8] sm:$0xff]
        %v354 = vld [vmem:[%s265 + $0xb0] sm:$0xff]
        %v355 = vld [vmem:[%s265 + $0xb8] sm:$0xff]
        %v356 = vld [vmem:[%s265 + $0xc0] sm:$0xff]
        %v357 = vld [vmem:[%s265 + $0xc8] sm:$0xff]
        %v358 = vld [vmem:[%s265 + $0xd0] sm:$0xff]
        %v359 = vld [vmem:[%s265 + $0xd8] sm:$0xff]
        %v360 = vld [vmem:[%s265 + $0xe0] sm:$0xff]
        %v361 = vld [vmem:[%s265 + $0xe8] sm:$0xff]
        %v362 = vld [vmem:[%s265 + $0xf0] sm:$0xff]
        %v363 = vld [vmem:[%s265 + $0xf8] sm:$0xff]
        %v364 = vld [vmem:[%s1] sm:$0xff]
        %v365 = vld [vmem:[%s1 + $0x8] sm:$0xff]
        %v366 = vld [vmem:[%s1 + $0x10] sm:$0xff]
        %v367 = vld [vmem:[%s1 + $0x18] sm:$0xff]
        %v368 = vld [vmem:[%s1 + $0x20] sm:$0xff]
        %v369 = vld [vmem:[%s1 + $0x28] sm:$0xff]
        %v370 = vld [vmem:[%s2] sm:$0x7]
        %v372 = vlaneseq
        %v373 = vshrl.u32 %v372, 7
        %v374 = vsub.s32 0, %v373
        %v375 = vrot.slane %v370, %v374
        %v376 = vlaneseq
        %v377 = vshrl.u32 %v376, 7
        %v378 = vsub.s32 1, %v377
        %v379 = vrot.slane %v370, %v378
        %v380 = vlaneseq
        %v381 = vshrl.u32 %v380, 7
        %v382 = vsub.s32 2, %v381
        %v383 = vrot.slane %v370, %v382
        %vm387 = vcmask 130048
        %v389 = vsel %vm387, %v332, 0
        %v392 = vsel %vm387, %v333, 0
        %v395 = vsel %vm387, %v334, 0
        %v398 = vsel %vm387, %v335, 0
        %v401 = vsel %vm387, %v336, 0
        %v404 = vsel %vm387, %v337, 0
        %v407 = vsel %vm387, %v338, 0
        %v410 = vsel %vm387, %v339, 0
        %v413 = vsel %vm387, %v340, 0
        %v416 = vsel %vm387, %v341, 0
        %v419 = vsel %vm387, %v342, 0
        %v422 = vsel %vm387, %v343, 0
        %v425 = vsel %vm387, %v344, 0
        %v428 = vsel %vm387, %v345, 0
        %v431 = vsel %vm387, %v346, 0
        %v434 = vsel %vm387, %v347, 0
        %v437 = vsel %vm387, %v348, 0
        %v440 = vsel %vm387, %v349, 0
        %v443 = vsel %vm387, %v350, 0
        %v446 = vsel %vm387, %v351, 0
        %v449 = vsel %vm387, %v352, 0
        %v452 = vsel %vm387, %v353, 0
        %v455 = vsel %vm387, %v354, 0
        %v458 = vsel %vm387, %v355, 0
        %v461 = vsel %vm387, %v356, 0
        %v464 = vsel %vm387, %v357, 0
        %v467 = vsel %vm387, %v358, 0
        %v470 = vsel %vm387, %v359, 0
        %v473 = vsel %vm387, %v360, 0
        %v476 = vsel %vm387, %v361, 0
        %v479 = vsel %vm387, %v362, 0
        %v482 = vsel %vm387, %v363, 0
        %484 = vmatprep.subr.mxu0 %v365
        %485 = vmatpush1.msra.mxu0 %v364
        %486 = vmatprep.subr.mxu0 %v368
        %487 = vmatpush1.msra.mxu0 %v367
        %488 = vmatprep.subr.mxu0 0.0
        %489 = vmatpush1.msra.mxu0 0.0
        %490 = vmatprep.subr.mxu0 0.0
        %491 = vmatpush1.msra.mxu0 0.0
        %492 = vmatprep.subr.mxu0 0.0
        %493 = vmatpush1.msra.mxu0 0.0
        %494 = vmatprep.subr.mxu0 0.0
        %495 = vmatpush1.msra.mxu0 0.0
        %496 = vmatprep.subr.mxu0 0.0
        %497 = vmatpush1.msra.mxu0 0.0
        %498 = vmatprep.subr.mxu0 0.0
        %499 = vmatpush1.msra.mxu0 0.0
        %500 = vmatprep.subr.mxu0 0.0
        %501 = vmatpush1.msra.mxu0 0.0
        %502 = vmatprep.subr.mxu0 0.0
        %503 = vmatpush1.msra.mxu0 0.0
        %504 = vmatprep.subr.mxu0 0.0
        %505 = vmatpush1.msra.mxu0 0.0
        %506 = vmatprep.subr.mxu0 0.0
        %507 = vmatpush1.msra.mxu0 0.0
        %508 = vmatprep.subr.mxu0 0.0
        %509 = vmatpush1.msra.mxu0 0.0
        %510 = vmatprep.subr.mxu0 0.0
        %511 = vmatpush1.msra.mxu0 0.0
        %512 = vmatprep.subr.mxu0 0.0
        %513 = vmatpush1.msra.mxu0 0.0
        %514 = vmatprep.subr.mxu0 0.0
        %515 = vmatpush1.msra.mxu0 0.0
        %516 = vmatprep.subr.mxu0 0.0
        %517 = vmatpush1.msra.mxu0 0.0
        %518 = vmatprep.subr.mxu0 0.0
        %519 = vmatpush1.msra.mxu0 0.0
        %520 = vmatprep.subr.mxu0 0.0
        %521 = vmatpush1.msra.mxu0 0.0
        %522 = vmatprep.subr.mxu0 0.0
        %523 = vmatpush1.msra.mxu0 0.0
        %524 = vmatprep.subr.mxu0 0.0
        %525 = vmatpush1.msra.mxu0 0.0
        %526 = vmatprep.subr.mxu0 0.0
        %527 = vmatpush1.msra.mxu0 0.0
        %528 = vmatprep.subr.mxu0 0.0
        %529 = vmatpush1.msra.mxu0 0.0
        %530 = vmatprep.subr.mxu0 0.0
        %531 = vmatpush1.msra.mxu0 0.0
        %532 = vmatprep.subr.mxu0 0.0
        %533 = vmatpush1.msra.mxu0 0.0
        %534 = vmatprep.subr.mxu0 0.0
        %535 = vmatpush1.msra.mxu0 0.0
        %536 = vmatprep.subr.mxu0 0.0
        %537 = vmatpush1.msra.mxu0 0.0
        %538 = vmatprep.subr.mxu0 0.0
        %539 = vmatpush1.msra.mxu0 0.0
        %540 = vmatprep.subr.mxu0 0.0
        %541 = vmatpush1.msra.mxu0 0.0
        %542 = vmatprep.subr.mxu0 0.0
        %543 = vmatpush1.msra.mxu0 0.0
        %544 = vmatprep.subr.mxu0 0.0
        %545 = vmatpush1.msra.mxu0 0.0
        %546 = vmatprep.subr.mxu0 0.0
        %547 = vmatpush1.msra.mxu0 0.0
        %548 = vmatprep.mubr.f32.mxu0 0.0
        %549 = vmatmul.mubr.f32.gmra.mrb[0].mxu0 %v389
        %v550 = vpop.f32.mrb[0].mxu0
        %v551 = vadd.f32 %v375, %v550
        %v552 = vpop.f32.mrb[0].mxu0
        %v553 = vadd.f32 %v379, %v552
        %554 = vmatprep.mubr.f32.mxu0 0.0
        %555 = vmatmul.mubr.f32.gmra.mrb[0].mxu0 %v392
        %v556 = vpop.f32.mrb[0].mxu0
        %v557 = vadd.f32 %v375, %v556
        %v558 = vpop.f32.mrb[0].mxu0
        %v559 = vadd.f32 %v379, %v558
        %560 = vmatprep.mubr.f32.mxu0 0.0
        %561 = vmatmul.mubr.f32.gmra.mrb[0].mxu0 %v395
        %v562 = vpop.f32.mrb[0].mxu0
        %v563 = vadd.f32 %v375, %v562
        %v564 = vpop.f32.mrb[0].mxu0
        %v565 = vadd.f32 %v379, %v564
        %566 = vmatprep.mubr.f32.mxu0 0.0
        %567 = vmatmul.mubr.f32.gmra.mrb[0].mxu0 %v398
        %v568 = vpop.f32.mrb[0].mxu0
        %v569 = vadd.f32 %v375, %v568
        %v570 = vpop.f32.mrb[0].mxu0
        %v571 = vadd.f32 %v379, %v570
        %572 = vmatprep.mubr.f32.mxu0 0.0
        %573 = vmatmul.mubr.f32.gmra.mrb[0].mxu0 %v401
        %v574 = vpop.f32.mrb[0].mxu0
        %v575 = vadd.f32 %v375, %v574
        %v576 = vpop.f32.mrb[0].mxu0
        %v577 = vadd.f32 %v379, %v576
        %578 = vmatprep.mubr.f32.mxu0 0.0
        %579 = vmatmul.mubr.f32.gmra.mrb[0].mxu0 %v404
        %v580 = vpop.f32.mrb[0].mxu0
        %v581 = vadd.f32 %v375, %v580
        %v582 = vpop.f32.mrb[0].mxu0
        %v583 = vadd.f32 %v379, %v582
        %584 = vmatprep.mubr.f32.mxu0 0.0
        %585 = vmatmul.mubr.f32.gmra.mrb[0].mxu0 %v407
        %v586 = vpop.f32.mrb[0].mxu0
        %v587 = vadd.f32 %v375, %v586
        %v588 = vpop.f32.mrb[0].mxu0
        %v589 = vadd.f32 %v379, %v588
        %590 = vmatprep.mubr.f32.mxu0 0.0
        %591 = vmatmul.mubr.f32.gmra.mrb[0].mxu0 %v410
        %v592 = vpop.f32.mrb[0].mxu0
        %v593 = vadd.f32 %v375, %v592
        %v594 = vpop.f32.mrb[0].mxu0
        %v595 = vadd.f32 %v379, %v594
        %596 = vmatprep.mubr.f32.mxu0 0.0
        %597 = vmatmul.mubr.f32.gmra.mrb[0].mxu0 %v413
        %v598 = vpop.f32.mrb[0].mxu0
        %v599 = vadd.f32 %v375, %v598
        %v600 = vpop.f32.mrb[0].mxu0
        %v601 = vadd.f32 %v379, %v600
        %602 = vmatprep.mubr.f32.mxu0 0.0
        %603 = vmatmul.mubr.f32.gmra.mrb[0].mxu0 %v416
        %v604 = vpop.f32.mrb[0].mxu0
        %v605 = vadd.f32 %v375, %v604
        %v606 = vpop.f32.mrb[0].mxu0
        %v607 = vadd.f32 %v379, %v606
        %608 = vmatprep.mubr.f32.mxu0 0.0
        %609 = vmatmul.mubr.f32.gmra.mrb[0].mxu0 %v419
        %v610 = vpop.f32.mrb[0].mxu0
        %v611 = vadd.f32 %v375, %v610
        %v612 = vpop.f32.mrb[0].mxu0
        %v613 = vadd.f32 %v379, %v612
        %614 = vmatprep.mubr.f32.mxu0 0.0
        %615 = vmatmul.mubr.f32.gmra.mrb[0].mxu0 %v422
        %v616 = vpop.f32.mrb[0].mxu0
        %v617 = vadd.f32 %v375, %v616
        %v618 = vpop.f32.mrb[0].mxu0
        %v619 = vadd.f32 %v379, %v618
        %620 = vmatprep.mubr.f32.mxu0 0.0
        %621 = vmatmul.mubr.f32.gmra.mrb[0].mxu0 %v425
        %v622 = vpop.f32.mrb[0].mxu0
        %v623 = vadd.f32 %v375, %v622
        %v624 = vpop.f32.mrb[0].mxu0
        %v625 = vadd.f32 %v379, %v624
        %626 = vmatprep.mubr.f32.mxu0 0.0
        %627 = vmatmul.mubr.f32.gmra.mrb[0].mxu0 %v428
        %v628 = vpop.f32.mrb[0].mxu0
        %v629 = vadd.f32 %v375, %v628
        %v630 = vpop.f32.mrb[0].mxu0
        %v631 = vadd.f32 %v379, %v630
        %632 = vmatprep.mubr.f32.mxu0 0.0
        %633 = vmatmul.mubr.f32.gmra.mrb[0].mxu0 %v431
        %v634 = vpop.f32.mrb[0].mxu0
        %v635 = vadd.f32 %v375, %v634
        %v636 = vpop.f32.mrb[0].mxu0
        %v637 = vadd.f32 %v379, %v636
        %638 = vmatprep.mubr.f32.mxu0 0.0
        %639 = vmatmul.mubr.f32.gmra.mrb[0].mxu0 %v434
        %v640 = vpop.f32.mrb[0].mxu0
        %v641 = vadd.f32 %v375, %v640
        %v642 = vpop.f32.mrb[0].mxu0
        %v643 = vadd.f32 %v379, %v642
        %644 = vmatprep.mubr.f32.mxu0 0.0
        %645 = vmatmul.mubr.f32.gmra.mrb[0].mxu0 %v437
        %v646 = vpop.f32.mrb[0].mxu0
        %v647 = vadd.f32 %v375, %v646
        %v648 = vpop.f32.mrb[0].mxu0
        %v649 = vadd.f32 %v379, %v648
        %650 = vmatprep.mubr.f32.mxu0 0.0
        %651 = vmatmul.mubr.f32.gmra.mrb[0].mxu0 %v440
        %v652 = vpop.f32.mrb[0].mxu0
        %v653 = vadd.f32 %v375, %v652
        %v654 = vpop.f32.mrb[0].mxu0
        %v655 = vadd.f32 %v379, %v654
        %656 = vmatprep.mubr.f32.mxu0 0.0
        %657 = vmatmul.mubr.f32.gmra.mrb[0].mxu0 %v443
        %v658 = vpop.f32.mrb[0].mxu0
        %v659 = vadd.f32 %v375, %v658
        %v660 = vpop.f32.mrb[0].mxu0
        %v661 = vadd.f32 %v379, %v660
        %662 = vmatprep.mubr.f32.mxu0 0.0
        %663 = vmatmul.mubr.f32.gmra.mrb[0].mxu0 %v446
        %v664 = vpop.f32.mrb[0].mxu0
        %v665 = vadd.f32 %v375, %v664
        %v666 = vpop.f32.mrb[0].mxu0
        %v667 = vadd.f32 %v379, %v666
        %668 = vmatprep.mubr.f32.mxu0 0.0
        %669 = vmatmul.mubr.f32.gmra.mrb[0].mxu0 %v449
        %v670 = vpop.f32.mrb[0].mxu0
        %v671 = vadd.f32 %v375, %v670
        %v672 = vpop.f32.mrb[0].mxu0
        %v673 = vadd.f32 %v379, %v672
        %674 = vmatprep.mubr.f32.mxu0 0.0
        %675 = vmatmul.mubr.f32.gmra.mrb[0].mxu0 %v452
        %v676 = vpop.f32.mrb[0].mxu0
        %v677 = vadd.f32 %v375, %v676
        %v678 = vpop.f32.mrb[0].mxu0
        %v679 = vadd.f32 %v379, %v678
        %680 = vmatprep.mubr.f32.mxu0 0.0
        %681 = vmatmul.mubr.f32.gmra.mrb[0].mxu0 %v455
        %v682 = vpop.f32.mrb[0].mxu0
        %v683 = vadd.f32 %v375, %v682
        %v684 = vpop.f32.mrb[0].mxu0
        %v685 = vadd.f32 %v379, %v684
        %686 = vmatprep.mubr.f32.mxu0 0.0
        %687 = vmatmul.mubr.f32.gmra.mrb[0].mxu0 %v458
        %v688 = vpop.f32.mrb[0].mxu0
        %v689 = vadd.f32 %v375, %v688
        %v690 = vpop.f32.mrb[0].mxu0
        %v691 = vadd.f32 %v379, %v690
        %692 = vmatprep.mubr.f32.mxu0 0.0
        %693 = vmatmul.mubr.f32.gmra.mrb[0].mxu0 %v461
        %v694 = vpop.f32.mrb[0].mxu0
        %v695 = vadd.f32 %v375, %v694
        %v696 = vpop.f32.mrb[0].mxu0
        %v697 = vadd.f32 %v379, %v696
        %698 = vmatprep.mubr.f32.mxu0 0.0
        %699 = vmatmul.mubr.f32.gmra.mrb[0].mxu0 %v464
        %v700 = vpop.f32.mrb[0].mxu0
        %v701 = vadd.f32 %v375, %v700
        %v702 = vpop.f32.mrb[0].mxu0
        %v703 = vadd.f32 %v379, %v702
        %704 = vmatprep.mubr.f32.mxu0 0.0
        %705 = vmatmul.mubr.f32.gmra.mrb[0].mxu0 %v467
        %v706 = vpop.f32.mrb[0].mxu0
        %v707 = vadd.f32 %v375, %v706
        %v708 = vpop.f32.mrb[0].mxu0
        %v709 = vadd.f32 %v379, %v708
        %710 = vmatprep.mubr.f32.mxu0 0.0
        %711 = vmatmul.mubr.f32.gmra.mrb[0].mxu0 %v470
        %v712 = vpop.f32.mrb[0].mxu0
        %v713 = vadd.f32 %v375, %v712
        %v714 = vpop.f32.mrb[0].mxu0
        %v715 = vadd.f32 %v379, %v714
        %716 = vmatprep.mubr.f32.mxu0 0.0
        %717 = vmatmul.mubr.f32.gmra.mrb[0].mxu0 %v473
        %v718 = vpop.f32.mrb[0].mxu0
        %v719 = vadd.f32 %v375, %v718
        %v720 = vpop.f32.mrb[0].mxu0
        %v721 = vadd.f32 %v379, %v720
        %722 = vmatprep.mubr.f32.mxu0 0.0
        %723 = vmatmul.mubr.f32.gmra.mrb[0].mxu0 %v476
        %v724 = vpop.f32.mrb[0].mxu0
        %v725 = vadd.f32 %v375, %v724
        %v726 = vpop.f32.mrb[0].mxu0
        %v727 = vadd.f32 %v379, %v726
        %728 = vmatprep.mubr.f32.mxu0 0.0
        %729 = vmatmul.mubr.f32.gmra.mrb[0].mxu0 %v479
        %v730 = vpop.f32.mrb[0].mxu0
        %v731 = vadd.f32 %v375, %v730
        %v732 = vpop.f32.mrb[0].mxu0
        %v733 = vadd.f32 %v379, %v732
        %734 = vmatprep.mubr.f32.mxu0 0.0
        %735 = vmatmul.mubr.f32.gmra.mrb[0].mxu0 %v482
        %v736 = vpop.f32.mrb[0].mxu0
        %v737 = vadd.f32 %v375, %v736
        %v738 = vpop.f32.mrb[0].mxu0
        %v739 = vadd.f32 %v379, %v738
        %740 = vdwg.mxu0
        %741 = vmatprep.subr.mxu0 0.0
        %742 = vmatpush1.msra.mxu0 %v366
        %743 = vmatprep.subr.mxu0 0.0
        %744 = vmatpush1.msra.mxu0 %v369
        %745 = vmatprep.subr.mxu0 0.0
        %746 = vmatpush1.msra.mxu0 0.0
        %747 = vmatprep.subr.mxu0 0.0
        %748 = vmatpush1.msra.mxu0 0.0
        %749 = vmatprep.subr.mxu0 0.0
        %750 = vmatpush1.msra.mxu0 0.0
        %751 = vmatprep.subr.mxu0 0.0
        %752 = vmatpush1.msra.mxu0 0.0
        %753 = vmatprep.subr.mxu0 0.0
        %754 = vmatpush1.msra.mxu0 0.0
        %755 = vmatprep.subr.mxu0 0.0
        %756 = vmatpush1.msra.mxu0 0.0
        %757 = vmatprep.subr.mxu0 0.0
        %758 = vmatpush1.msra.mxu0 0.0
        %759 = vmatprep.subr.mxu0 0.0
        %760 = vmatpush1.msra.mxu0 0.0
        %761 = vmatprep.subr.mxu0 0.0
        %762 = vmatpush1.msra.mxu0 0.0
        %763 = vmatprep.subr.mxu0 0.0
        %764 = vmatpush1.msra.mxu0 0.0
        %765 = vmatprep.subr.mxu0 0.0
        %766 = vmatpush1.msra.mxu0 0.0
        %767 = vmatprep.subr.mxu0 0.0
        %768 = vmatpush1.msra.mxu0 0.0
        %769 = vmatprep.subr.mxu0 0.0
        %770 = vmatpush1.msra.mxu0 0.0
        %771 = vmatprep.subr.mxu0 0.0
        %772 = vmatpush1.msra.mxu0 0.0
        %773 = vmatprep.subr.mxu0 0.0
        %774 = vmatpush1.msra.mxu0 0.0
        %775 = vmatprep.subr.mxu0 0.0
        %776 = vmatpush1.msra.mxu0 0.0
        %777 = vmatprep.subr.mxu0 0.0
        %778 = vmatpush1.msra.mxu0 0.0
        %779 = vmatprep.subr.mxu0 0.0
        %780 = vmatpush1.msra.mxu0 0.0
        %781 = vmatprep.subr.mxu0 0.0
        %782 = vmatpush1.msra.mxu0 0.0
        %783 = vmatprep.subr.mxu0 0.0
        %784 = vmatpush1.msra.mxu0 0.0
        %785 = vmatprep.subr.mxu0 0.0
        %786 = vmatpush1.msra.mxu0 0.0
        %787 = vmatprep.subr.mxu0 0.0
        %788 = vmatpush1.msra.mxu0 0.0
        %789 = vmatprep.subr.mxu0 0.0
        %790 = vmatpush1.msra.mxu0 0.0
        %791 = vmatprep.subr.mxu0 0.0
        %792 = vmatpush1.msra.mxu0 0.0
        %793 = vmatprep.subr.mxu0 0.0
        %794 = vmatpush1.msra.mxu0 0.0
        %795 = vmatprep.subr.mxu0 0.0
        %796 = vmatpush1.msra.mxu0 0.0
        %797 = vmatprep.subr.mxu0 0.0
        %798 = vmatpush1.msra.mxu0 0.0
        %799 = vmatprep.subr.mxu0 0.0
        %800 = vmatpush1.msra.mxu0 0.0
        %801 = vmatprep.subr.mxu0 0.0
        %802 = vmatpush1.msra.mxu0 0.0
        %803 = vmatprep.subr.mxu0 0.0
        %804 = vmatpush1.msra.mxu0 0.0
        %805 = vmatprep.mubr.f32.mxu0 0.0
        %806 = vmatmul.mubr.f32.gmra.mrb[0].mxu0 %v389
        %v807 = vpop.f32.mrb[0].mxu0
        %v808 = vadd.f32 %v383, %v807
        %v809 = vpop.f32.mrb[0].mxu0
        %810 = vmatprep.mubr.f32.mxu0 0.0
        %811 = vmatmul.mubr.f32.gmra.mrb[0].mxu0 %v392
        %v812 = vpop.f32.mrb[0].mxu0
        %v813 = vadd.f32 %v383, %v812
        %v814 = vpop.f32.mrb[0].mxu0
        %815 = vmatprep.mubr.f32.mxu0 0.0
        %816 = vmatmul.mubr.f32.gmra.mrb[0].mxu0 %v395
        %v817 = vpop.f32.mrb[0].mxu0
        %v818 = vadd.f32 %v383, %v817
        %v819 = vpop.f32.mrb[0].mxu0
        %820 = vmatprep.mubr.f32.mxu0 0.0
        %821 = vmatmul.mubr.f32.gmra.mrb[0].mxu0 %v398
        %v822 = vpop.f32.mrb[0].mxu0
        %v823 = vadd.f32 %v383, %v822
        %v824 = vpop.f32.mrb[0].mxu0
        %825 = vmatprep.mubr.f32.mxu0 0.0
        %826 = vmatmul.mubr.f32.gmra.mrb[0].mxu0 %v401
        %v827 = vpop.f32.mrb[0].mxu0
        %v828 = vadd.f32 %v383, %v827
        %v829 = vpop.f32.mrb[0].mxu0
        %830 = vmatprep.mubr.f32.mxu0 0.0
        %831 = vmatmul.mubr.f32.gmra.mrb[0].mxu0 %v404
        %v832 = vpop.f32.mrb[0].mxu0
        %v833 = vadd.f32 %v383, %v832
        %v834 = vpop.f32.mrb[0].mxu0
        %835 = vmatprep.mubr.f32.mxu0 0.0
        %836 = vmatmul.mubr.f32.gmra.mrb[0].mxu0 %v407
        %v837 = vpop.f32.mrb[0].mxu0
        %v838 = vadd.f32 %v383, %v837
        %v839 = vpop.f32.mrb[0].mxu0
        %840 = vmatprep.mubr.f32.mxu0 0.0
        %841 = vmatmul.mubr.f32.gmra.mrb[0].mxu0 %v410
        %v842 = vpop.f32.mrb[0].mxu0
        %v843 = vadd.f32 %v383, %v842
        %v844 = vpop.f32.mrb[0].mxu0
        %845 = vmatprep.mubr.f32.mxu0 0.0
        %846 = vmatmul.mubr.f32.gmra.mrb[0].mxu0 %v413
        %v847 = vpop.f32.mrb[0].mxu0
        %v848 = vadd.f32 %v383, %v847
        %v849 = vpop.f32.mrb[0].mxu0
        %850 = vmatprep.mubr.f32.mxu0 0.0
        %851 = vmatmul.mubr.f32.gmra.mrb[0].mxu0 %v416
        %v852 = vpop.f32.mrb[0].mxu0
        %v853 = vadd.f32 %v383, %v852
        %v854 = vpop.f32.mrb[0].mxu0
        %855 = vmatprep.mubr.f32.mxu0 0.0
        %856 = vmatmul.mubr.f32.gmra.mrb[0].mxu0 %v419
        %v857 = vpop.f32.mrb[0].mxu0
        %v858 = vadd.f32 %v383, %v857
        %v859 = vpop.f32.mrb[0].mxu0
        %860 = vmatprep.mubr.f32.mxu0 0.0
        %861 = vmatmul.mubr.f32.gmra.mrb[0].mxu0 %v422
        %v862 = vpop.f32.mrb[0].mxu0
        %v863 = vadd.f32 %v383, %v862
        %v864 = vpop.f32.mrb[0].mxu0
        %865 = vmatprep.mubr.f32.mxu0 0.0
        %866 = vmatmul.mubr.f32.gmra.mrb[0].mxu0 %v425
        %v867 = vpop.f32.mrb[0].mxu0
        %v868 = vadd.f32 %v383, %v867
        %v869 = vpop.f32.mrb[0].mxu0
        %870 = vmatprep.mubr.f32.mxu0 0.0
        %871 = vmatmul.mubr.f32.gmra.mrb[0].mxu0 %v428
        %v872 = vpop.f32.mrb[0].mxu0
        %v873 = vadd.f32 %v383, %v872
        %v874 = vpop.f32.mrb[0].mxu0
        %875 = vmatprep.mubr.f32.mxu0 0.0
        %876 = vmatmul.mubr.f32.gmra.mrb[0].mxu0 %v431
        %v877 = vpop.f32.mrb[0].mxu0
        %v878 = vadd.f32 %v383, %v877
        %v879 = vpop.f32.mrb[0].mxu0
        %880 = vmatprep.mubr.f32.mxu0 0.0
        %881 = vmatmul.mubr.f32.gmra.mrb[0].mxu0 %v434
        %v882 = vpop.f32.mrb[0].mxu0
        %v883 = vadd.f32 %v383, %v882
        %v884 = vpop.f32.mrb[0].mxu0
        %885 = vmatprep.mubr.f32.mxu0 0.0
        %886 = vmatmul.mubr.f32.gmra.mrb[0].mxu0 %v437
        %v887 = vpop.f32.mrb[0].mxu0
        %v888 = vadd.f32 %v383, %v887
        %v889 = vpop.f32.mrb[0].mxu0
        %890 = vmatprep.mubr.f32.mxu0 0.0
        %891 = vmatmul.mubr.f32.gmra.mrb[0].mxu0 %v440
        %v892 = vpop.f32.mrb[0].mxu0
        %v893 = vadd.f32 %v383, %v892
        %v894 = vpop.f32.mrb[0].mxu0
        %895 = vmatprep.mubr.f32.mxu0 0.0
        %896 = vmatmul.mubr.f32.gmra.mrb[0].mxu0 %v443
        %v897 = vpop.f32.mrb[0].mxu0
        %v898 = vadd.f32 %v383, %v897
        %v899 = vpop.f32.mrb[0].mxu0
        %900 = vmatprep.mubr.f32.mxu0 0.0
        %901 = vmatmul.mubr.f32.gmra.mrb[0].mxu0 %v446
        %v902 = vpop.f32.mrb[0].mxu0
        %v903 = vadd.f32 %v383, %v902
        %v904 = vpop.f32.mrb[0].mxu0
        %905 = vmatprep.mubr.f32.mxu0 0.0
        %906 = vmatmul.mubr.f32.gmra.mrb[0].mxu0 %v449
        %v907 = vpop.f32.mrb[0].mxu0
        %v908 = vadd.f32 %v383, %v907
        %v909 = vpop.f32.mrb[0].mxu0
        %910 = vmatprep.mubr.f32.mxu0 0.0
        %911 = vmatmul.mubr.f32.gmra.mrb[0].mxu0 %v452
        %v912 = vpop.f32.mrb[0].mxu0
        %v913 = vadd.f32 %v383, %v912
        %v914 = vpop.f32.mrb[0].mxu0
        %915 = vmatprep.mubr.f32.mxu0 0.0
        %916 = vmatmul.mubr.f32.gmra.mrb[0].mxu0 %v455
        %v917 = vpop.f32.mrb[0].mxu0
        %v918 = vadd.f32 %v383, %v917
        %v919 = vpop.f32.mrb[0].mxu0
        %920 = vmatprep.mubr.f32.mxu0 0.0
        %921 = vmatmul.mubr.f32.gmra.mrb[0].mxu0 %v458
        %v922 = vpop.f32.mrb[0].mxu0
        %v923 = vadd.f32 %v383, %v922
        %v924 = vpop.f32.mrb[0].mxu0
        %925 = vmatprep.mubr.f32.mxu0 0.0
        %926 = vmatmul.mubr.f32.gmra.mrb[0].mxu0 %v461
        %v927 = vpop.f32.mrb[0].mxu0
        %v928 = vadd.f32 %v383, %v927
        %v929 = vpop.f32.mrb[0].mxu0
        %930 = vmatprep.mubr.f32.mxu0 0.0
        %931 = vmatmul.mubr.f32.gmra.mrb[0].mxu0 %v464
        %v932 = vpop.f32.mrb[0].mxu0
        %v933 = vadd.f32 %v383, %v932
        %v934 = vpop.f32.mrb[0].mxu0
        %935 = vmatprep.mubr.f32.mxu0 0.0
        %936 = vmatmul.mubr.f32.gmra.mrb[0].mxu0 %v467
        %v937 = vpop.f32.mrb[0].mxu0
        %v938 = vadd.f32 %v383, %v937
        %v939 = vpop.f32.mrb[0].mxu0
        %940 = vmatprep.mubr.f32.mxu0 0.0
        %941 = vmatmul.mubr.f32.gmra.mrb[0].mxu0 %v470
        %v942 = vpop.f32.mrb[0].mxu0
        %v943 = vadd.f32 %v383, %v942
        %v944 = vpop.f32.mrb[0].mxu0
        %945 = vmatprep.mubr.f32.mxu0 0.0
        %946 = vmatmul.mubr.f32.gmra.mrb[0].mxu0 %v473
        %v947 = vpop.f32.mrb[0].mxu0
        %v948 = vadd.f32 %v383, %v947
        %v949 = vpop.f32.mrb[0].mxu0
        %950 = vmatprep.mubr.f32.mxu0 0.0
        %951 = vmatmul.mubr.f32.gmra.mrb[0].mxu0 %v476
        %v952 = vpop.f32.mrb[0].mxu0
        %v953 = vadd.f32 %v383, %v952
        %v954 = vpop.f32.mrb[0].mxu0
        %955 = vmatprep.mubr.f32.mxu0 0.0
        %956 = vmatmul.mubr.f32.gmra.mrb[0].mxu0 %v479
        %v957 = vpop.f32.mrb[0].mxu0
        %v958 = vadd.f32 %v383, %v957
        %v959 = vpop.f32.mrb[0].mxu0
        %960 = vmatprep.mubr.f32.mxu0 0.0
        %961 = vmatmul.mubr.f32.gmra.mrb[0].mxu0 %v482
        %v962 = vpop.f32.mrb[0].mxu0
        %v963 = vadd.f32 %v383, %v962
        %v964 = vpop.f32.mrb[0].mxu0
        %965 = vdwg.mxu0
        %966 = vmatprep.subr.mxu0 0.0
        %967 = vmatpush1.xpose.msra.mxu0 %v553
        %968 = vmatprep.subr.mxu0 0.0
        %969 = vmatpush1.xpose.msra.mxu0 %v559
        %970 = vmatprep.subr.mxu0 0.0
        %971 = vmatpush1.xpose.msra.mxu0 %v565
        %972 = vmatprep.subr.mxu0 0.0
        %973 = vmatpush1.xpose.msra.mxu0 %v571
        %974 = vmatprep.subr.mxu0 0.0
        %975 = vmatpush1.xpose.msra.mxu0 %v577
        %976 = vmatprep.subr.mxu0 0.0
        %977 = vmatpush1.xpose.msra.mxu0 %v583
        %978 = vmatprep.subr.mxu0 0.0
        %979 = vmatpush1.xpose.msra.mxu0 %v589
        %980 = vmatprep.subr.mxu0 0.0
        %981 = vmatpush1.xpose.msra.mxu0 %v595
        %982 = vmatprep.subr.mxu0 0.0
        %983 = vmatpush1.xpose.msra.mxu0 %v601
        %984 = vmatprep.subr.mxu0 0.0
        %985 = vmatpush1.xpose.msra.mxu0 %v607
        %986 = vmatprep.subr.mxu0 0.0
        %987 = vmatpush1.xpose.msra.mxu0 %v613
        %988 = vmatprep.subr.mxu0 0.0
        %989 = vmatpush1.xpose.msra.mxu0 %v619
        %990 = vmatprep.subr.mxu0 0.0
        %991 = vmatpush1.xpose.msra.mxu0 %v625
        %992 = vmatprep.subr.mxu0 0.0
        %993 = vmatpush1.xpose.msra.mxu0 %v631
        %994 = vmatprep.subr.mxu0 0.0
        %995 = vmatpush1.xpose.msra.mxu0 %v637
        %996 = vmatprep.subr.mxu0 0.0
        %997 = vmatpush1.xpose.msra.mxu0 %v643
        %998 = vmatprep.subr.mxu0 0.0
        %999 = vmatpush1.xpose.msra.mxu0 %v649
        %1000 = vmatprep.subr.mxu0 0.0
        %1001 = vmatpush1.xpose.msra.mxu0 %v655
        %1002 = vmatprep.subr.mxu0 0.0
        %1003 = vmatpush1.xpose.msra.mxu0 %v661
        %1004 = vmatprep.subr.mxu0 0.0
        %1005 = vmatpush1.xpose.msra.mxu0 %v667
        %1006 = vmatprep.subr.mxu0 0.0
        %1007 = vmatpush1.xpose.msra.mxu0 %v673
        %1008 = vmatprep.subr.mxu0 0.0
        %1009 = vmatpush1.xpose.msra.mxu0 %v679
        %1010 = vmatprep.subr.mxu0 0.0
        %1011 = vmatpush1.xpose.msra.mxu0 %v685
        %1012 = vmatprep.subr.mxu0 0.0
        %1013 = vmatpush1.xpose.msra.mxu0 %v691
        %1014 = vmatprep.subr.mxu0 0.0
        %1015 = vmatpush1.xpose.msra.mxu0 %v697
        %1016 = vmatprep.subr.mxu0 0.0
        %1017 = vmatpush1.xpose.msra.mxu0 %v703
        %1018 = vmatprep.subr.mxu0 0.0
        %1019 = vmatpush1.xpose.msra.mxu0 %v709
        %1020 = vmatprep.subr.mxu0 0.0
        %1021 = vmatpush1.xpose.msra.mxu0 %v715
        %1022 = vmatprep.subr.mxu0 0.0
        %1023 = vmatpush1.xpose.msra.mxu0 %v721
        %1024 = vmatprep.subr.mxu0 0.0
        %1025 = vmatpush1.xpose.msra.mxu0 %v727
        %1026 = vmatprep.subr.mxu0 0.0
        %1027 = vmatpush1.xpose.msra.mxu0 %v733
        %1028 = vmatprep.subr.mxu0 0.0
        %1029 = vmatpush1.xpose.msra.mxu0 %v739
        %1030 = vmatprep.mubr.f32.mxu0 0.0
        %1031 = vmatmul.mubr.f32.gmra.mrb[0].mxu0 %v551
        %v1032 = vpop.f32.mrb[0].mxu0
        %v1033 = vadd.f32 0.0, %v1032
        %v1034 = vpop.f32.mrb[0].mxu0
        %v1035 = vadd.f32 0.0, %v1034
        %1036 = vmatprep.mubr.f32.mxu0 0.0
        %1037 = vmatmul.mubr.f32.gmra.mrb[0].mxu0 %v557
        %v1038 = vpop.f32.mrb[0].mxu0
        %v1039 = vadd.f32 0.0, %v1038
        %v1040 = vpop.f32.mrb[0].mxu0
        %v1041 = vadd.f32 0.0, %v1040
        %1042 = vmatprep.mubr.f32.mxu0 0.0
        %1043 = vmatmul.mubr.f32.gmra.mrb[0].mxu0 %v563
        %v1044 = vpop.f32.mrb[0].mxu0
        %v1045 = vadd.f32 0.0, %v1044
        %v1046 = vpop.f32.mrb[0].mxu0
        %v1047 = vadd.f32 0.0, %v1046
        %1048 = vmatprep.mubr.f32.mxu0 0.0
        %1049 = vmatmul.mubr.f32.gmra.mrb[0].mxu0 %v569
        %v1050 = vpop.f32.mrb[0].mxu0
        %v1051 = vadd.f32 0.0, %v1050
        %v1052 = vpop.f32.mrb[0].mxu0
        %v1053 = vadd.f32 0.0, %v1052
        %1054 = vmatprep.mubr.f32.mxu0 0.0
        %1055 = vmatmul.mubr.f32.gmra.mrb[0].mxu0 %v575
        %v1056 = vpop.f32.mrb[0].mxu0
        %v1057 = vadd.f32 0.0, %v1056
        %v1058 = vpop.f32.mrb[0].mxu0
        %v1059 = vadd.f32 0.0, %v1058
        %1060 = vmatprep.mubr.f32.mxu0 0.0
        %1061 = vmatmul.mubr.f32.gmra.mrb[0].mxu0 %v581
        %v1062 = vpop.f32.mrb[0].mxu0
        %v1063 = vadd.f32 0.0, %v1062
        %v1064 = vpop.f32.mrb[0].mxu0
        %v1065 = vadd.f32 0.0, %v1064
        %1066 = vmatprep.mubr.f32.mxu0 0.0
        %1067 = vmatmul.mubr.f32.gmra.mrb[0].mxu0 %v587
        %v1068 = vpop.f32.mrb[0].mxu0
        %v1069 = vadd.f32 0.0, %v1068
        %v1070 = vpop.f32.mrb[0].mxu0
        %v1071 = vadd.f32 0.0, %v1070
        %1072 = vmatprep.mubr.f32.mxu0 0.0
        %1073 = vmatmul.mubr.f32.gmra.mrb[0].mxu0 %v593
        %v1074 = vpop.f32.mrb[0].mxu0
        %v1075 = vadd.f32 0.0, %v1074
        %v1076 = vpop.f32.mrb[0].mxu0
        %v1077 = vadd.f32 0.0, %v1076
        %1078 = vmatprep.mubr.f32.mxu0 0.0
        %1079 = vmatmul.mubr.f32.gmra.mrb[0].mxu0 %v599
        %v1080 = vpop.f32.mrb[0].mxu0
        %v1081 = vadd.f32 0.0, %v1080
        %v1082 = vpop.f32.mrb[0].mxu0
        %v1083 = vadd.f32 0.0, %v1082
        %1084 = vmatprep.mubr.f32.mxu0 0.0
        %1085 = vmatmul.mubr.f32.gmra.mrb[0].mxu0 %v605
        %v1086 = vpop.f32.mrb[0].mxu0
        %v1087 = vadd.f32 0.0, %v1086
        %v1088 = vpop.f32.mrb[0].mxu0
        %v1089 = vadd.f32 0.0, %v1088
        %1090 = vmatprep.mubr.f32.mxu0 0.0
        %1091 = vmatmul.mubr.f32.gmra.mrb[0].mxu0 %v611
        %v1092 = vpop.f32.mrb[0].mxu0
        %v1093 = vadd.f32 0.0, %v1092
        %v1094 = vpop.f32.mrb[0].mxu0
        %v1095 = vadd.f32 0.0, %v1094
        %1096 = vmatprep.mubr.f32.mxu0 0.0
        %1097 = vmatmul.mubr.f32.gmra.mrb[0].mxu0 %v617
        %v1098 = vpop.f32.mrb[0].mxu0
        %v1099 = vadd.f32 0.0, %v1098
        %v1100 = vpop.f32.mrb[0].mxu0
        %v1101 = vadd.f32 0.0, %v1100
        %1102 = vmatprep.mubr.f32.mxu0 0.0
        %1103 = vmatmul.mubr.f32.gmra.mrb[0].mxu0 %v623
        %v1104 = vpop.f32.mrb[0].mxu0
        %v1105 = vadd.f32 0.0, %v1104
        %v1106 = vpop.f32.mrb[0].mxu0
        %v1107 = vadd.f32 0.0, %v1106
        %1108 = vmatprep.mubr.f32.mxu0 0.0
        %1109 = vmatmul.mubr.f32.gmra.mrb[0].mxu0 %v629
        %v1110 = vpop.f32.mrb[0].mxu0
        %v1111 = vadd.f32 0.0, %v1110
        %v1112 = vpop.f32.mrb[0].mxu0
        %v1113 = vadd.f32 0.0, %v1112
        %1114 = vmatprep.mubr.f32.mxu0 0.0
        %1115 = vmatmul.mubr.f32.gmra.mrb[0].mxu0 %v635
        %v1116 = vpop.f32.mrb[0].mxu0
        %v1117 = vadd.f32 0.0, %v1116
        %v1118 = vpop.f32.mrb[0].mxu0
        %v1119 = vadd.f32 0.0, %v1118
        %1120 = vmatprep.mubr.f32.mxu0 0.0
        %1121 = vmatmul.mubr.f32.gmra.mrb[0].mxu0 %v641
        %v1122 = vpop.f32.mrb[0].mxu0
        %v1123 = vadd.f32 0.0, %v1122
        %v1124 = vpop.f32.mrb[0].mxu0
        %v1125 = vadd.f32 0.0, %v1124
        %1126 = vmatprep.mubr.f32.mxu0 0.0
        %1127 = vmatmul.mubr.f32.gmra.mrb[0].mxu0 %v647
        %v1128 = vpop.f32.mrb[0].mxu0
        %v1129 = vadd.f32 0.0, %v1128
        %v1130 = vpop.f32.mrb[0].mxu0
        %v1131 = vadd.f32 0.0, %v1130
        %1132 = vmatprep.mubr.f32.mxu0 0.0
        %1133 = vmatmul.mubr.f32.gmra.mrb[0].mxu0 %v653
        %v1134 = vpop.f32.mrb[0].mxu0
        %v1135 = vadd.f32 0.0, %v1134
        %v1136 = vpop.f32.mrb[0].mxu0
        %v1137 = vadd.f32 0.0, %v1136
        %1138 = vmatprep.mubr.f32.mxu0 0.0
        %1139 = vmatmul.mubr.f32.gmra.mrb[0].mxu0 %v659
        %v1140 = vpop.f32.mrb[0].mxu0
        %v1141 = vadd.f32 0.0, %v1140
        %v1142 = vpop.f32.mrb[0].mxu0
        %v1143 = vadd.f32 0.0, %v1142
        %1144 = vmatprep.mubr.f32.mxu0 0.0
        %1145 = vmatmul.mubr.f32.gmra.mrb[0].mxu0 %v665
        %v1146 = vpop.f32.mrb[0].mxu0
        %v1147 = vadd.f32 0.0, %v1146
        %v1148 = vpop.f32.mrb[0].mxu0
        %v1149 = vadd.f32 0.0, %v1148
        %1150 = vmatprep.mubr.f32.mxu0 0.0
        %1151 = vmatmul.mubr.f32.gmra.mrb[0].mxu0 %v671
        %v1152 = vpop.f32.mrb[0].mxu0
        %v1153 = vadd.f32 0.0, %v1152
        %v1154 = vpop.f32.mrb[0].mxu0
        %v1155 = vadd.f32 0.0, %v1154
        %1156 = vmatprep.mubr.f32.mxu0 0.0
        %1157 = vmatmul.mubr.f32.gmra.mrb[0].mxu0 %v677
        %v1158 = vpop.f32.mrb[0].mxu0
        %v1159 = vadd.f32 0.0, %v1158
        %v1160 = vpop.f32.mrb[0].mxu0
        %v1161 = vadd.f32 0.0, %v1160
        %1162 = vmatprep.mubr.f32.mxu0 0.0
        %1163 = vmatmul.mubr.f32.gmra.mrb[0].mxu0 %v683
        %v1164 = vpop.f32.mrb[0].mxu0
        %v1165 = vadd.f32 0.0, %v1164
        %v1166 = vpop.f32.mrb[0].mxu0
        %v1167 = vadd.f32 0.0, %v1166
        %1168 = vmatprep.mubr.f32.mxu0 0.0
        %1169 = vmatmul.mubr.f32.gmra.mrb[0].mxu0 %v689
        %v1170 = vpop.f32.mrb[0].mxu0
        %v1171 = vadd.f32 0.0, %v1170
        %v1172 = vpop.f32.mrb[0].mxu0
        %v1173 = vadd.f32 0.0, %v1172
        %1174 = vmatprep.mubr.f32.mxu0 0.0
        %1175 = vmatmul.mubr.f32.gmra.mrb[0].mxu0 %v695
        %v1176 = vpop.f32.mrb[0].mxu0
        %v1177 = vadd.f32 0.0, %v1176
        %v1178 = vpop.f32.mrb[0].mxu0
        %v1179 = vadd.f32 0.0, %v1178
        %1180 = vmatprep.mubr.f32.mxu0 0.0
        %1181 = vmatmul.mubr.f32.gmra.mrb[0].mxu0 %v701
        %v1182 = vpop.f32.mrb[0].mxu0
        %v1183 = vadd.f32 0.0, %v1182
        %v1184 = vpop.f32.mrb[0].mxu0
        %v1185 = vadd.f32 0.0, %v1184
        %1186 = vmatprep.mubr.f32.mxu0 0.0
        %1187 = vmatmul.mubr.f32.gmra.mrb[0].mxu0 %v707
        %v1188 = vpop.f32.mrb[0].mxu0
        %v1189 = vadd.f32 0.0, %v1188
        %v1190 = vpop.f32.mrb[0].mxu0
        %v1191 = vadd.f32 0.0, %v1190
        %1192 = vmatprep.mubr.f32.mxu0 0.0
        %1193 = vmatmul.mubr.f32.gmra.mrb[0].mxu0 %v713
        %v1194 = vpop.f32.mrb[0].mxu0
        %v1195 = vadd.f32 0.0, %v1194
        %v1196 = vpop.f32.mrb[0].mxu0
        %v1197 = vadd.f32 0.0, %v1196
        %1198 = vmatprep.mubr.f32.mxu0 0.0
        %1199 = vmatmul.mubr.f32.gmra.mrb[0].mxu0 %v719
        %v1200 = vpop.f32.mrb[0].mxu0
        %v1201 = vadd.f32 0.0, %v1200
        %v1202 = vpop.f32.mrb[0].mxu0
        %v1203 = vadd.f32 0.0, %v1202
        %1204 = vmatprep.mubr.f32.mxu0 0.0
        %1205 = vmatmul.mubr.f32.gmra.mrb[0].mxu0 %v725
        %v1206 = vpop.f32.mrb[0].mxu0
        %v1207 = vadd.f32 0.0, %v1206
        %v1208 = vpop.f32.mrb[0].mxu0
        %v1209 = vadd.f32 0.0, %v1208
        %1210 = vmatprep.mubr.f32.mxu0 0.0
        %1211 = vmatmul.mubr.f32.gmra.mrb[0].mxu0 %v731
        %v1212 = vpop.f32.mrb[0].mxu0
        %v1213 = vadd.f32 0.0, %v1212
        %v1214 = vpop.f32.mrb[0].mxu0
        %v1215 = vadd.f32 0.0, %v1214
        %1216 = vmatprep.mubr.f32.mxu0 0.0
        %1217 = vmatmul.mubr.f32.gmra.mrb[0].mxu0 %v737
        %v1218 = vpop.f32.mrb[0].mxu0
        %v1219 = vadd.f32 0.0, %v1218
        %v1220 = vpop.f32.mrb[0].mxu0
        %v1221 = vadd.f32 0.0, %v1220
        %1222 = vdwg.mxu0
        %v1223 = vmul.f32 %v1033, 0.25
        %v1224 = vmul.f32 %v1035, 0.25
        %v1225 = vmul.f32 %v1039, 0.25
        %v1226 = vmul.f32 %v1041, 0.25
        %v1227 = vmul.f32 %v1045, 0.25
        %v1228 = vmul.f32 %v1047, 0.25
        %v1229 = vmul.f32 %v1051, 0.25
        %v1230 = vmul.f32 %v1053, 0.25
        %v1231 = vmul.f32 %v1057, 0.25
        %v1232 = vmul.f32 %v1059, 0.25
        %v1233 = vmul.f32 %v1063, 0.25
        %v1234 = vmul.f32 %v1065, 0.25
        %v1235 = vmul.f32 %v1069, 0.25
        %v1236 = vmul.f32 %v1071, 0.25
        %v1237 = vmul.f32 %v1075, 0.25
        %v1238 = vmul.f32 %v1077, 0.25
        %v1239 = vmul.f32 %v1081, 0.25
        %v1240 = vmul.f32 %v1083, 0.25
        %v1241 = vmul.f32 %v1087, 0.25
        %v1242 = vmul.f32 %v1089, 0.25
        %v1243 = vmul.f32 %v1093, 0.25
        %v1244 = vmul.f32 %v1095, 0.25
        %v1245 = vmul.f32 %v1099, 0.25
        %v1246 = vmul.f32 %v1101, 0.25
        %v1247 = vmul.f32 %v1105, 0.25
        %v1248 = vmul.f32 %v1107, 0.25
        %v1249 = vmul.f32 %v1111, 0.25
        %v1250 = vmul.f32 %v1113, 0.25
        %v1251 = vmul.f32 %v1117, 0.25
        %v1252 = vmul.f32 %v1119, 0.25
        %v1253 = vmul.f32 %v1123, 0.25
        %v1254 = vmul.f32 %v1125, 0.25
        %v1255 = vmul.f32 %v1129, 0.25
        %v1256 = vmul.f32 %v1131, 0.25
        %v1257 = vmul.f32 %v1135, 0.25
        %v1258 = vmul.f32 %v1137, 0.25
        %v1259 = vmul.f32 %v1141, 0.25
        %v1260 = vmul.f32 %v1143, 0.25
        %v1261 = vmul.f32 %v1147, 0.25
        %v1262 = vmul.f32 %v1149, 0.25
        %v1263 = vmul.f32 %v1153, 0.25
        %v1264 = vmul.f32 %v1155, 0.25
        %v1265 = vmul.f32 %v1159, 0.25
        %v1266 = vmul.f32 %v1161, 0.25
        %v1267 = vmul.f32 %v1165, 0.25
        %v1268 = vmul.f32 %v1167, 0.25
        %v1269 = vmul.f32 %v1171, 0.25
        %v1270 = vmul.f32 %v1173, 0.25
        %v1271 = vmul.f32 %v1177, 0.25
        %v1272 = vmul.f32 %v1179, 0.25
        %v1273 = vmul.f32 %v1183, 0.25
        %v1274 = vmul.f32 %v1185, 0.25
        %v1275 = vmul.f32 %v1189, 0.25
        %v1276 = vmul.f32 %v1191, 0.25
        %v1277 = vmul.f32 %v1195, 0.25
        %v1278 = vmul.f32 %v1197, 0.25
        %v1279 = vmul.f32 %v1201, 0.25
        %v1280 = vmul.f32 %v1203, 0.25
        %v1281 = vmul.f32 %v1207, 0.25
        %v1282 = vmul.f32 %v1209, 0.25
        %v1283 = vmul.f32 %v1213, 0.25
        %v1284 = vmul.f32 %v1215, 0.25
        %v1285 = vmul.f32 %v1219, 0.25
        %v1286 = vmul.f32 %v1221, 0.25
        %v1287 = vadd.f32 %v1223, %v268
        %v1288 = vadd.f32 %v1224, %v269
        %v1289 = vadd.f32 %v1225, %v270
        %v1290 = vadd.f32 %v1226, %v271
        %v1291 = vadd.f32 %v1227, %v272
        %v1292 = vadd.f32 %v1228, %v273
        %v1293 = vadd.f32 %v1229, %v274
        %v1294 = vadd.f32 %v1230, %v275
        %v1295 = vadd.f32 %v1231, %v276
        %v1296 = vadd.f32 %v1232, %v277
        %v1297 = vadd.f32 %v1233, %v278
        %v1298 = vadd.f32 %v1234, %v279
        %v1299 = vadd.f32 %v1235, %v280
        %v1300 = vadd.f32 %v1236, %v281
        %v1301 = vadd.f32 %v1237, %v282
        %v1302 = vadd.f32 %v1238, %v283
        %v1303 = vadd.f32 %v1239, %v284
        %v1304 = vadd.f32 %v1240, %v285
        %v1305 = vadd.f32 %v1241, %v286
        %v1306 = vadd.f32 %v1242, %v287
        %v1307 = vadd.f32 %v1243, %v288
        %v1308 = vadd.f32 %v1244, %v289
        %v1309 = vadd.f32 %v1245, %v290
        %v1310 = vadd.f32 %v1246, %v291
        %v1311 = vadd.f32 %v1247, %v292
        %v1312 = vadd.f32 %v1248, %v293
        %v1313 = vadd.f32 %v1249, %v294
        %v1314 = vadd.f32 %v1250, %v295
        %v1315 = vadd.f32 %v1251, %v296
        %v1316 = vadd.f32 %v1252, %v297
        %v1317 = vadd.f32 %v1253, %v298
        %v1318 = vadd.f32 %v1254, %v299
        %v1319 = vadd.f32 %v1255, %v300
        %v1320 = vadd.f32 %v1256, %v301
        %v1321 = vadd.f32 %v1257, %v302
        %v1322 = vadd.f32 %v1258, %v303
        %v1323 = vadd.f32 %v1259, %v304
        %v1324 = vadd.f32 %v1260, %v305
        %v1325 = vadd.f32 %v1261, %v306
        %v1326 = vadd.f32 %v1262, %v307
        %v1327 = vadd.f32 %v1263, %v308
        %v1328 = vadd.f32 %v1264, %v309
        %v1329 = vadd.f32 %v1265, %v310
        %v1330 = vadd.f32 %v1266, %v311
        %v1331 = vadd.f32 %v1267, %v312
        %v1332 = vadd.f32 %v1268, %v313
        %v1333 = vadd.f32 %v1269, %v314
        %v1334 = vadd.f32 %v1270, %v315
        %v1335 = vadd.f32 %v1271, %v316
        %v1336 = vadd.f32 %v1272, %v317
        %v1337 = vadd.f32 %v1273, %v318
        %v1338 = vadd.f32 %v1274, %v319
        %v1339 = vadd.f32 %v1275, %v320
        %v1340 = vadd.f32 %v1276, %v321
        %v1341 = vadd.f32 %v1277, %v322
        %v1342 = vadd.f32 %v1278, %v323
        %v1343 = vadd.f32 %v1279, %v324
        %v1344 = vadd.f32 %v1280, %v325
        %v1345 = vadd.f32 %v1281, %v326
        %v1346 = vadd.f32 %v1282, %v327
        %v1347 = vadd.f32 %v1283, %v328
        %v1348 = vadd.f32 %v1284, %v329
        %v1349 = vadd.f32 %v1285, %v330
        %v1350 = vadd.f32 %v1286, %v331
        %v1351 = vmax.f32 %v1287, %v1288
        %1352 = vmax.xlane.f32.xlu0 %v1351
        %v1353 = vpop.xlane.xlu0 %1352
        %v1354 = vmax.f32 %v1289, %v1290
        %1355 = vmax.xlane.f32.xlu0 %v1354
        %v1356 = vpop.xlane.xlu0 %1355
        %v1357 = vmax.f32 %v1291, %v1292
        %1358 = vmax.xlane.f32.xlu0 %v1357
        %v1359 = vpop.xlane.xlu0 %1358
        %v1360 = vmax.f32 %v1293, %v1294
        %1361 = vmax.xlane.f32.xlu0 %v1360
        %v1362 = vpop.xlane.xlu0 %1361
        %v1363 = vmax.f32 %v1295, %v1296
        %1364 = vmax.xlane.f32.xlu0 %v1363
        %v1365 = vpop.xlane.xlu0 %1364
        %v1366 = vmax.f32 %v1297, %v1298
        %1367 = vmax.xlane.f32.xlu0 %v1366
        %v1368 = vpop.xlane.xlu0 %1367
        %v1369 = vmax.f32 %v1299, %v1300
        %1370 = vmax.xlane.f32.xlu0 %v1369
        %v1371 = vpop.xlane.xlu0 %1370
        %v1372 = vmax.f32 %v1301, %v1302
        %1373 = vmax.xlane.f32.xlu0 %v1372
        %v1374 = vpop.xlane.xlu0 %1373
        %v1375 = vmax.f32 %v1303, %v1304
        %1376 = vmax.xlane.f32.xlu0 %v1375
        %v1377 = vpop.xlane.xlu0 %1376
        %v1378 = vmax.f32 %v1305, %v1306
        %1379 = vmax.xlane.f32.xlu0 %v1378
        %v1380 = vpop.xlane.xlu0 %1379
        %v1381 = vmax.f32 %v1307, %v1308
        %1382 = vmax.xlane.f32.xlu0 %v1381
        %v1383 = vpop.xlane.xlu0 %1382
        %v1384 = vmax.f32 %v1309, %v1310
        %1385 = vmax.xlane.f32.xlu0 %v1384
        %v1386 = vpop.xlane.xlu0 %1385
        %v1387 = vmax.f32 %v1311, %v1312
        %1388 = vmax.xlane.f32.xlu0 %v1387
        %v1389 = vpop.xlane.xlu0 %1388
        %v1390 = vmax.f32 %v1313, %v1314
        %1391 = vmax.xlane.f32.xlu0 %v1390
        %v1392 = vpop.xlane.xlu0 %1391
        %v1393 = vmax.f32 %v1315, %v1316
        %1394 = vmax.xlane.f32.xlu0 %v1393
        %v1395 = vpop.xlane.xlu0 %1394
        %v1396 = vmax.f32 %v1317, %v1318
        %1397 = vmax.xlane.f32.xlu0 %v1396
        %v1398 = vpop.xlane.xlu0 %1397
        %v1399 = vmax.f32 %v1319, %v1320
        %1400 = vmax.xlane.f32.xlu0 %v1399
        %v1401 = vpop.xlane.xlu0 %1400
        %v1402 = vmax.f32 %v1321, %v1322
        %1403 = vmax.xlane.f32.xlu0 %v1402
        %v1404 = vpop.xlane.xlu0 %1403
        %v1405 = vmax.f32 %v1323, %v1324
        %1406 = vmax.xlane.f32.xlu0 %v1405
        %v1407 = vpop.xlane.xlu0 %1406
        %v1408 = vmax.f32 %v1325, %v1326
        %1409 = vmax.xlane.f32.xlu0 %v1408
        %v1410 = vpop.xlane.xlu0 %1409
        %v1411 = vmax.f32 %v1327, %v1328
        %1412 = vmax.xlane.f32.xlu0 %v1411
        %v1413 = vpop.xlane.xlu0 %1412
        %v1414 = vmax.f32 %v1329, %v1330
        %1415 = vmax.xlane.f32.xlu0 %v1414
        %v1416 = vpop.xlane.xlu0 %1415
        %v1417 = vmax.f32 %v1331, %v1332
        %1418 = vmax.xlane.f32.xlu0 %v1417
        %v1419 = vpop.xlane.xlu0 %1418
        %v1420 = vmax.f32 %v1333, %v1334
        %1421 = vmax.xlane.f32.xlu0 %v1420
        %v1422 = vpop.xlane.xlu0 %1421
        %v1423 = vmax.f32 %v1335, %v1336
        %1424 = vmax.xlane.f32.xlu0 %v1423
        %v1425 = vpop.xlane.xlu0 %1424
        %v1426 = vmax.f32 %v1337, %v1338
        %1427 = vmax.xlane.f32.xlu0 %v1426
        %v1428 = vpop.xlane.xlu0 %1427
        %v1429 = vmax.f32 %v1339, %v1340
        %1430 = vmax.xlane.f32.xlu0 %v1429
        %v1431 = vpop.xlane.xlu0 %1430
        %v1432 = vmax.f32 %v1341, %v1342
        %1433 = vmax.xlane.f32.xlu0 %v1432
        %v1434 = vpop.xlane.xlu0 %1433
        %v1435 = vmax.f32 %v1343, %v1344
        %1436 = vmax.xlane.f32.xlu0 %v1435
        %v1437 = vpop.xlane.xlu0 %1436
        %v1438 = vmax.f32 %v1345, %v1346
        %1439 = vmax.xlane.f32.xlu0 %v1438
        %v1440 = vpop.xlane.xlu0 %1439
        %v1441 = vmax.f32 %v1347, %v1348
        %1442 = vmax.xlane.f32.xlu0 %v1441
        %v1443 = vpop.xlane.xlu0 %1442
        %v1444 = vmax.f32 %v1349, %v1350
        %1445 = vmax.xlane.f32.xlu0 %v1444
        %v1446 = vpop.xlane.xlu0 %1445
        %v1447 = vsub.f32 %v1287, %v1353
        %v1448 = vsub.f32 %v1288, %v1353
        %v1449 = vsub.f32 %v1289, %v1356
        %v1450 = vsub.f32 %v1290, %v1356
        %v1451 = vsub.f32 %v1291, %v1359
        %v1452 = vsub.f32 %v1292, %v1359
        %v1453 = vsub.f32 %v1293, %v1362
        %v1454 = vsub.f32 %v1294, %v1362
        %v1455 = vsub.f32 %v1295, %v1365
        %v1456 = vsub.f32 %v1296, %v1365
        %v1457 = vsub.f32 %v1297, %v1368
        %v1458 = vsub.f32 %v1298, %v1368
        %v1459 = vsub.f32 %v1299, %v1371
        %v1460 = vsub.f32 %v1300, %v1371
        %v1461 = vsub.f32 %v1301, %v1374
        %v1462 = vsub.f32 %v1302, %v1374
        %v1463 = vsub.f32 %v1303, %v1377
        %v1464 = vsub.f32 %v1304, %v1377
        %v1465 = vsub.f32 %v1305, %v1380
        %v1466 = vsub.f32 %v1306, %v1380
        %v1467 = vsub.f32 %v1307, %v1383
        %v1468 = vsub.f32 %v1308, %v1383
        %v1469 = vsub.f32 %v1309, %v1386
        %v1470 = vsub.f32 %v1310, %v1386
        %v1471 = vsub.f32 %v1311, %v1389
        %v1472 = vsub.f32 %v1312, %v1389
        %v1473 = vsub.f32 %v1313, %v1392
        %v1474 = vsub.f32 %v1314, %v1392
        %v1475 = vsub.f32 %v1315, %v1395
        %v1476 = vsub.f32 %v1316, %v1395
        %v1477 = vsub.f32 %v1317, %v1398
        %v1478 = vsub.f32 %v1318, %v1398
        %v1479 = vsub.f32 %v1319, %v1401
        %v1480 = vsub.f32 %v1320, %v1401
        %v1481 = vsub.f32 %v1321, %v1404
        %v1482 = vsub.f32 %v1322, %v1404
        %v1483 = vsub.f32 %v1323, %v1407
        %v1484 = vsub.f32 %v1324, %v1407
        %v1485 = vsub.f32 %v1325, %v1410
        %v1486 = vsub.f32 %v1326, %v1410
        %v1487 = vsub.f32 %v1327, %v1413
        %v1488 = vsub.f32 %v1328, %v1413
        %v1489 = vsub.f32 %v1329, %v1416
        %v1490 = vsub.f32 %v1330, %v1416
        %v1491 = vsub.f32 %v1331, %v1419
        %v1492 = vsub.f32 %v1332, %v1419
        %v1493 = vsub.f32 %v1333, %v1422
        %v1494 = vsub.f32 %v1334, %v1422
        %v1495 = vsub.f32 %v1335, %v1425
        %v1496 = vsub.f32 %v1336, %v1425
        %v1497 = vsub.f32 %v1337, %v1428
        %v1498 = vsub.f32 %v1338, %v1428
        %v1499 = vsub.f32 %v1339, %v1431
        %v1500 = vsub.f32 %v1340, %v1431
        %v1501 = vsub.f32 %v1341, %v1434
        %v1502 = vsub.f32 %v1342, %v1434
        %v1503 = vsub.f32 %v1343, %v1437
        %v1504 = vsub.f32 %v1344, %v1437
        %v1505 = vsub.f32 %v1345, %v1440
        %v1506 = vsub.f32 %v1346, %v1440
        %v1507 = vsub.f32 %v1347, %v1443
        %v1508 = vsub.f32 %v1348, %v1443
        %v1509 = vsub.f32 %v1349, %v1446
        %v1510 = vsub.f32 %v1350, %v1446
        %v1511 = vmul.f32 %v1447, 1.442695
        %v1512 = vpow.pop %v1511
        %v1513 = vmul.f32 %v1448, 1.442695
        %v1514 = vpow.pop %v1513
        %v1515 = vmul.f32 %v1449, 1.442695
        %v1516 = vpow.pop %v1515
        %v1517 = vmul.f32 %v1450, 1.442695
        %v1518 = vpow.pop %v1517
        %v1519 = vmul.f32 %v1451, 1.442695
        %v1520 = vpow.pop %v1519
        %v1521 = vmul.f32 %v1452, 1.442695
        %v1522 = vpow.pop %v1521
        %v1523 = vmul.f32 %v1453, 1.442695
        %v1524 = vpow.pop %v1523
        %v1525 = vmul.f32 %v1454, 1.442695
        %v1526 = vpow.pop %v1525
        %v1527 = vmul.f32 %v1455, 1.442695
        %v1528 = vpow.pop %v1527
        %v1529 = vmul.f32 %v1456, 1.442695
        %v1530 = vpow.pop %v1529
        %v1531 = vmul.f32 %v1457, 1.442695
        %v1532 = vpow.pop %v1531
        %v1533 = vmul.f32 %v1458, 1.442695
        %v1534 = vpow.pop %v1533
        %v1535 = vmul.f32 %v1459, 1.442695
        %v1536 = vpow.pop %v1535
        %v1537 = vmul.f32 %v1460, 1.442695
        %v1538 = vpow.pop %v1537
        %v1539 = vmul.f32 %v1461, 1.442695
        %v1540 = vpow.pop %v1539
        %v1541 = vmul.f32 %v1462, 1.442695
        %v1542 = vpow.pop %v1541
        %v1543 = vmul.f32 %v1463, 1.442695
        %v1544 = vpow.pop %v1543
        %v1545 = vmul.f32 %v1464, 1.442695
        %v1546 = vpow.pop %v1545
        %v1547 = vmul.f32 %v1465, 1.442695
        %v1548 = vpow.pop %v1547
        %v1549 = vmul.f32 %v1466, 1.442695
        %v1550 = vpow.pop %v1549
        %v1551 = vmul.f32 %v1467, 1.442695
        %v1552 = vpow.pop %v1551
        %v1553 = vmul.f32 %v1468, 1.442695
        %v1554 = vpow.pop %v1553
        %v1555 = vmul.f32 %v1469, 1.442695
        %v1556 = vpow.pop %v1555
        %v1557 = vmul.f32 %v1470, 1.442695
        %v1558 = vpow.pop %v1557
        %v1559 = vmul.f32 %v1471, 1.442695
        %v1560 = vpow.pop %v1559
        %v1561 = vmul.f32 %v1472, 1.442695
        %v1562 = vpow.pop %v1561
        %v1563 = vmul.f32 %v1473, 1.442695
        %v1564 = vpow.pop %v1563
        %v1565 = vmul.f32 %v1474, 1.442695
        %v1566 = vpow.pop %v1565
        %v1567 = vmul.f32 %v1475, 1.442695
        %v1568 = vpow.pop %v1567
        %v1569 = vmul.f32 %v1476, 1.442695
        %v1570 = vpow.pop %v1569
        %v1571 = vmul.f32 %v1477, 1.442695
        %v1572 = vpow.pop %v1571
        %v1573 = vmul.f32 %v1478, 1.442695
        %v1574 = vpow.pop %v1573
        %v1575 = vmul.f32 %v1479, 1.442695
        %v1576 = vpow.pop %v1575
        %v1577 = vmul.f32 %v1480, 1.442695
        %v1578 = vpow.pop %v1577
        %v1579 = vmul.f32 %v1481, 1.442695
        %v1580 = vpow.pop %v1579
        %v1581 = vmul.f32 %v1482, 1.442695
        %v1582 = vpow.pop %v1581
        %v1583 = vmul.f32 %v1483, 1.442695
        %v1584 = vpow.pop %v1583
        %v1585 = vmul.f32 %v1484, 1.442695
        %v1586 = vpow.pop %v1585
        %v1587 = vmul.f32 %v1485, 1.442695
        %v1588 = vpow.pop %v1587
        %v1589 = vmul.f32 %v1486, 1.442695
        %v1590 = vpow.pop %v1589
        %v1591 = vmul.f32 %v1487, 1.442695
        %v1592 = vpow.pop %v1591
        %v1593 = vmul.f32 %v1488, 1.442695
        %v1594 = vpow.pop %v1593
        %v1595 = vmul.f32 %v1489, 1.442695
        %v1596 = vpow.pop %v1595
        %v1597 = vmul.f32 %v1490, 1.442695
        %v1598 = vpow.pop %v1597
        %v1599 = vmul.f32 %v1491, 1.442695
        %v1600 = vpow.pop %v1599
        %v1601 = vmul.f32 %v1492, 1.442695
        %v1602 = vpow.pop %v1601
        %v1603 = vmul.f32 %v1493, 1.442695
        %v1604 = vpow.pop %v1603
        %v1605 = vmul.f32 %v1494, 1.442695
        %v1606 = vpow.pop %v1605
        %v1607 = vmul.f32 %v1495, 1.442695
        %v1608 = vpow.pop %v1607
        %v1609 = vmul.f32 %v1496, 1.442695
        %v1610 = vpow.pop %v1609
        %v1611 = vmul.f32 %v1497, 1.442695
        %v1612 = vpow.pop %v1611
        %v1613 = vmul.f32 %v1498, 1.442695
        %v1614 = vpow.pop %v1613
        %v1615 = vmul.f32 %v1499, 1.442695
        %v1616 = vpow.pop %v1615
        %v1617 = vmul.f32 %v1500, 1.442695
        %v1618 = vpow.pop %v1617
        %v1619 = vmul.f32 %v1501, 1.442695
        %v1620 = vpow.pop %v1619
        %v1621 = vmul.f32 %v1502, 1.442695
        %v1622 = vpow.pop %v1621
        %v1623 = vmul.f32 %v1503, 1.442695
        %v1624 = vpow.pop %v1623
        %v1625 = vmul.f32 %v1504, 1.442695
        %v1626 = vpow.pop %v1625
        %v1627 = vmul.f32 %v1505, 1.442695
        %v1628 = vpow.pop %v1627
        %v1629 = vmul.f32 %v1506, 1.442695
        %v1630 = vpow.pop %v1629
        %v1631 = vmul.f32 %v1507, 1.442695
        %v1632 = vpow.pop %v1631
        %v1633 = vmul.f32 %v1508, 1.442695
        %v1634 = vpow.pop %v1633
        %v1635 = vmul.f32 %v1509, 1.442695
        %v1636 = vpow.pop %v1635
        %v1637 = vmul.f32 %v1510, 1.442695
        %v1638 = vpow.pop %v1637
        %v1639 = vadd.f32 %v1512, %v1514
        %1640 = vadd.xlane.f32.xlu0 %v1639
        %v1641 = vpop.xlane.xlu0 %1640
        %v1642 = vadd.f32 %v1516, %v1518
        %1643 = vadd.xlane.f32.xlu0 %v1642
        %v1644 = vpop.xlane.xlu0 %1643
        %v1645 = vadd.f32 %v1520, %v1522
        %1646 = vadd.xlane.f32.xlu0 %v1645
        %v1647 = vpop.xlane.xlu0 %1646
        %v1648 = vadd.f32 %v1524, %v1526
        %1649 = vadd.xlane.f32.xlu0 %v1648
        %v1650 = vpop.xlane.xlu0 %1649
        %v1651 = vadd.f32 %v1528, %v1530
        %1652 = vadd.xlane.f32.xlu0 %v1651
        %v1653 = vpop.xlane.xlu0 %1652
        %v1654 = vadd.f32 %v1532, %v1534
        %1655 = vadd.xlane.f32.xlu0 %v1654
        %v1656 = vpop.xlane.xlu0 %1655
        %v1657 = vadd.f32 %v1536, %v1538
        %1658 = vadd.xlane.f32.xlu0 %v1657
        %v1659 = vpop.xlane.xlu0 %1658
        %v1660 = vadd.f32 %v1540, %v1542
        %1661 = vadd.xlane.f32.xlu0 %v1660
        %v1662 = vpop.xlane.xlu0 %1661
        %v1663 = vadd.f32 %v1544, %v1546
        %1664 = vadd.xlane.f32.xlu0 %v1663
        %v1665 = vpop.xlane.xlu0 %1664
        %v1666 = vadd.f32 %v1548, %v1550
        %1667 = vadd.xlane.f32.xlu0 %v1666
        %v1668 = vpop.xlane.xlu0 %1667
        %v1669 = vadd.f32 %v1552, %v1554
        %1670 = vadd.xlane.f32.xlu0 %v1669
        %v1671 = vpop.xlane.xlu0 %1670
        %v1672 = vadd.f32 %v1556, %v1558
        %1673 = vadd.xlane.f32.xlu0 %v1672
        %v1674 = vpop.xlane.xlu0 %1673
        %v1675 = vadd.f32 %v1560, %v1562
        %1676 = vadd.xlane.f32.xlu0 %v1675
        %v1677 = vpop.xlane.xlu0 %1676
        %v1678 = vadd.f32 %v1564, %v1566
        %1679 = vadd.xlane.f32.xlu0 %v1678
        %v1680 = vpop.xlane.xlu0 %1679
        %v1681 = vadd.f32 %v1568, %v1570
        %1682 = vadd.xlane.f32.xlu0 %v1681
        %v1683 = vpop.xlane.xlu0 %1682
        %v1684 = vadd.f32 %v1572, %v1574
        %1685 = vadd.xlane.f32.xlu0 %v1684
        %v1686 = vpop.xlane.xlu0 %1685
        %v1687 = vadd.f32 %v1576, %v1578
        %1688 = vadd.xlane.f32.xlu0 %v1687
        %v1689 = vpop.xlane.xlu0 %1688
        %v1690 = vadd.f32 %v1580, %v1582
        %1691 = vadd.xlane.f32.xlu0 %v1690
        %v1692 = vpop.xlane.xlu0 %1691
        %v1693 = vadd.f32 %v1584, %v1586
        %1694 = vadd.xlane.f32.xlu0 %v1693
        %v1695 = vpop.xlane.xlu0 %1694
        %v1696 = vadd.f32 %v1588, %v1590
        %1697 = vadd.xlane.f32.xlu0 %v1696
        %v1698 = vpop.xlane.xlu0 %1697
        %v1699 = vadd.f32 %v1592, %v1594
        %1700 = vadd.xlane.f32.xlu0 %v1699
        %v1701 = vpop.xlane.xlu0 %1700
        %v1702 = vadd.f32 %v1596, %v1598
        %1703 = vadd.xlane.f32.xlu0 %v1702
        %v1704 = vpop.xlane.xlu0 %1703
        %v1705 = vadd.f32 %v1600, %v1602
        %1706 = vadd.xlane.f32.xlu0 %v1705
        %v1707 = vpop.xlane.xlu0 %1706
        %v1708 = vadd.f32 %v1604, %v1606
        %1709 = vadd.xlane.f32.xlu0 %v1708
        %v1710 = vpop.xlane.xlu0 %1709
        %v1711 = vadd.f32 %v1608, %v1610
        %1712 = vadd.xlane.f32.xlu0 %v1711
        %v1713 = vpop.xlane.xlu0 %1712
        %v1714 = vadd.f32 %v1612, %v1614
        %1715 = vadd.xlane.f32.xlu0 %v1714
        %v1716 = vpop.xlane.xlu0 %1715
        %v1717 = vadd.f32 %v1616, %v1618
        %1718 = vadd.xlane.f32.xlu0 %v1717
        %v1719 = vpop.xlane.xlu0 %1718
        %v1720 = vadd.f32 %v1620, %v1622
        %1721 = vadd.xlane.f32.xlu0 %v1720
        %v1722 = vpop.xlane.xlu0 %1721
        %v1723 = vadd.f32 %v1624, %v1626
        %1724 = vadd.xlane.f32.xlu0 %v1723
        %v1725 = vpop.xlane.xlu0 %1724
        %v1726 = vadd.f32 %v1628, %v1630
        %1727 = vadd.xlane.f32.xlu0 %v1726
        %v1728 = vpop.xlane.xlu0 %1727
        %v1729 = vadd.f32 %v1632, %v1634
        %1730 = vadd.xlane.f32.xlu0 %v1729
        %v1731 = vpop.xlane.xlu0 %1730
        %v1732 = vadd.f32 %v1636, %v1638
        %1733 = vadd.xlane.f32.xlu0 %v1732
        %v1734 = vpop.xlane.xlu0 %1733
        %v1735 = vrcp.pop %v1641
        %v1736 = vrcp.pop %v1644
        %v1737 = vrcp.pop %v1647
        %v1738 = vrcp.pop %v1650
        %v1739 = vrcp.pop %v1653
        %v1740 = vrcp.pop %v1656
        %v1741 = vrcp.pop %v1659
        %v1742 = vrcp.pop %v1662
        %v1743 = vrcp.pop %v1665
        %v1744 = vrcp.pop %v1668
        %v1745 = vrcp.pop %v1671
        %v1746 = vrcp.pop %v1674
        %v1747 = vrcp.pop %v1677
        %v1748 = vrcp.pop %v1680
        %v1749 = vrcp.pop %v1683
        %v1750 = vrcp.pop %v1686
        %v1751 = vrcp.pop %v1689
        %v1752 = vrcp.pop %v1692
        %v1753 = vrcp.pop %v1695
        %v1754 = vrcp.pop %v1698
        %v1755 = vrcp.pop %v1701
        %v1756 = vrcp.pop %v1704
        %v1757 = vrcp.pop %v1707
        %v1758 = vrcp.pop %v1710
        %v1759 = vrcp.pop %v1713
        %v1760 = vrcp.pop %v1716
        %v1761 = vrcp.pop %v1719
        %v1762 = vrcp.pop %v1722
        %v1763 = vrcp.pop %v1725
        %v1764 = vrcp.pop %v1728
        %v1765 = vrcp.pop %v1731
        %v1766 = vrcp.pop %v1734
        %v1767 = vmul.f32 %v1512, %v1735
        %v1768 = vmul.f32 %v1514, %v1735
        %v1769 = vmul.f32 %v1516, %v1736
        %v1770 = vmul.f32 %v1518, %v1736
        %v1771 = vmul.f32 %v1520, %v1737
        %v1772 = vmul.f32 %v1522, %v1737
        %v1773 = vmul.f32 %v1524, %v1738
        %v1774 = vmul.f32 %v1526, %v1738
        %v1775 = vmul.f32 %v1528, %v1739
        %v1776 = vmul.f32 %v1530, %v1739
        %v1777 = vmul.f32 %v1532, %v1740
        %v1778 = vmul.f32 %v1534, %v1740
        %v1779 = vmul.f32 %v1536, %v1741
        %v1780 = vmul.f32 %v1538, %v1741
        %v1781 = vmul.f32 %v1540, %v1742
        %v1782 = vmul.f32 %v1542, %v1742
        %v1783 = vmul.f32 %v1544, %v1743
        %v1784 = vmul.f32 %v1546, %v1743
        %v1785 = vmul.f32 %v1548, %v1744
        %v1786 = vmul.f32 %v1550, %v1744
        %v1787 = vmul.f32 %v1552, %v1745
        %v1788 = vmul.f32 %v1554, %v1745
        %v1789 = vmul.f32 %v1556, %v1746
        %v1790 = vmul.f32 %v1558, %v1746
        %v1791 = vmul.f32 %v1560, %v1747
        %v1792 = vmul.f32 %v1562, %v1747
        %v1793 = vmul.f32 %v1564, %v1748
        %v1794 = vmul.f32 %v1566, %v1748
        %v1795 = vmul.f32 %v1568, %v1749
        %v1796 = vmul.f32 %v1570, %v1749
        %v1797 = vmul.f32 %v1572, %v1750
        %v1798 = vmul.f32 %v1574, %v1750
        %v1799 = vmul.f32 %v1576, %v1751
        %v1800 = vmul.f32 %v1578, %v1751
        %v1801 = vmul.f32 %v1580, %v1752
        %v1802 = vmul.f32 %v1582, %v1752
        %v1803 = vmul.f32 %v1584, %v1753
        %v1804 = vmul.f32 %v1586, %v1753
        %v1805 = vmul.f32 %v1588, %v1754
        %v1806 = vmul.f32 %v1590, %v1754
        %v1807 = vmul.f32 %v1592, %v1755
        %v1808 = vmul.f32 %v1594, %v1755
        %v1809 = vmul.f32 %v1596, %v1756
        %v1810 = vmul.f32 %v1598, %v1756
        %v1811 = vmul.f32 %v1600, %v1757
        %v1812 = vmul.f32 %v1602, %v1757
        %v1813 = vmul.f32 %v1604, %v1758
        %v1814 = vmul.f32 %v1606, %v1758
        %v1815 = vmul.f32 %v1608, %v1759
        %v1816 = vmul.f32 %v1610, %v1759
        %v1817 = vmul.f32 %v1612, %v1760
        %v1818 = vmul.f32 %v1614, %v1760
        %v1819 = vmul.f32 %v1616, %v1761
        %v1820 = vmul.f32 %v1618, %v1761
        %v1821 = vmul.f32 %v1620, %v1762
        %v1822 = vmul.f32 %v1622, %v1762
        %v1823 = vmul.f32 %v1624, %v1763
        %v1824 = vmul.f32 %v1626, %v1763
        %v1825 = vmul.f32 %v1628, %v1764
        %v1826 = vmul.f32 %v1630, %v1764
        %v1827 = vmul.f32 %v1632, %v1765
        %v1828 = vmul.f32 %v1634, %v1765
        %v1829 = vmul.f32 %v1636, %v1766
        %v1830 = vmul.f32 %v1638, %v1766
        %1831 = vmatprep.subr.mxu0 0.0
        %1832 = vmatpush1.msra.mxu0 %v808
        %1833 = vmatprep.subr.mxu0 0.0
        %1834 = vmatpush1.msra.mxu0 %v813
        %1835 = vmatprep.subr.mxu0 0.0
        %1836 = vmatpush1.msra.mxu0 %v818
        %1837 = vmatprep.subr.mxu0 0.0
        %1838 = vmatpush1.msra.mxu0 %v823
        %1839 = vmatprep.subr.mxu0 0.0
        %1840 = vmatpush1.msra.mxu0 %v828
        %1841 = vmatprep.subr.mxu0 0.0
        %1842 = vmatpush1.msra.mxu0 %v833
        %1843 = vmatprep.subr.mxu0 0.0
        %1844 = vmatpush1.msra.mxu0 %v838
        %1845 = vmatprep.subr.mxu0 0.0
        %1846 = vmatpush1.msra.mxu0 %v843
        %1847 = vmatprep.subr.mxu0 0.0
        %1848 = vmatpush1.msra.mxu0 %v848
        %1849 = vmatprep.subr.mxu0 0.0
        %1850 = vmatpush1.msra.mxu0 %v853
        %1851 = vmatprep.subr.mxu0 0.0
        %1852 = vmatpush1.msra.mxu0 %v858
        %1853 = vmatprep.subr.mxu0 0.0
        %1854 = vmatpush1.msra.mxu0 %v863
        %1855 = vmatprep.subr.mxu0 0.0
        %1856 = vmatpush1.msra.mxu0 %v868
        %1857 = vmatprep.subr.mxu0 0.0
        %1858 = vmatpush1.msra.mxu0 %v873
        %1859 = vmatprep.subr.mxu0 0.0
        %1860 = vmatpush1.msra.mxu0 %v878
        %1861 = vmatprep.subr.mxu0 0.0
        %1862 = vmatpush1.msra.mxu0 %v883
        %1863 = vmatprep.subr.mxu0 0.0
        %1864 = vmatpush1.msra.mxu0 %v888
        %1865 = vmatprep.subr.mxu0 0.0
        %1866 = vmatpush1.msra.mxu0 %v893
        %1867 = vmatprep.subr.mxu0 0.0
        %1868 = vmatpush1.msra.mxu0 %v898
        %1869 = vmatprep.subr.mxu0 0.0
        %1870 = vmatpush1.msra.mxu0 %v903
        %1871 = vmatprep.subr.mxu0 0.0
        %1872 = vmatpush1.msra.mxu0 %v908
        %1873 = vmatprep.subr.mxu0 0.0
        %1874 = vmatpush1.msra.mxu0 %v913
        %1875 = vmatprep.subr.mxu0 0.0
        %1876 = vmatpush1.msra.mxu0 %v918
        %1877 = vmatprep.subr.mxu0 0.0
        %1878 = vmatpush1.msra.mxu0 %v923
        %1879 = vmatprep.subr.mxu0 0.0
        %1880 = vmatpush1.msra.mxu0 %v928
        %1881 = vmatprep.subr.mxu0 0.0
        %1882 = vmatpush1.msra.mxu0 %v933
        %1883 = vmatprep.subr.mxu0 0.0
        %1884 = vmatpush1.msra.mxu0 %v938
        %1885 = vmatprep.subr.mxu0 0.0
        %1886 = vmatpush1.msra.mxu0 %v943
        %1887 = vmatprep.subr.mxu0 0.0
        %1888 = vmatpush1.msra.mxu0 %v948
        %1889 = vmatprep.subr.mxu0 0.0
        %1890 = vmatpush1.msra.mxu0 %v953
        %1891 = vmatprep.subr.mxu0 0.0
        %1892 = vmatpush1.msra.mxu0 %v958
        %1893 = vmatprep.subr.mxu0 0.0
        %1894 = vmatpush1.msra.mxu0 %v963
        %1895 = vmatprep.mubr.f32.mxu0 %v1768
        %1896 = vmatmul.mubr.f32.gmra.mrb[0].mxu0 %v1767
        %v1897 = vpop.f32.mrb[0].mxu0
        %v1898 = vadd.f32 0.0, %v1897
        %v1899 = vpop.f32.mrb[0].mxu0
        %1900 = vmatprep.mubr.f32.mxu0 %v1770
        %1901 = vmatmul.mubr.f32.gmra.mrb[0].mxu0 %v1769
        %v1902 = vpop.f32.mrb[0].mxu0
        %v1903 = vadd.f32 0.0, %v1902
        %v1904 = vpop.f32.mrb[0].mxu0
        %1905 = vmatprep.mubr.f32.mxu0 %v1772
        %1906 = vmatmul.mubr.f32.gmra.mrb[0].mxu0 %v1771
        %v1907 = vpop.f32.mrb[0].mxu0
        %v1908 = vadd.f32 0.0, %v1907
        %v1909 = vpop.f32.mrb[0].mxu0
        %1910 = vmatprep.mubr.f32.mxu0 %v1774
        %1911 = vmatmul.mubr.f32.gmra.mrb[0].mxu0 %v1773
        %v1912 = vpop.f32.mrb[0].mxu0
        %v1913 = vadd.f32 0.0, %v1912
        %v1914 = vpop.f32.mrb[0].mxu0
        %1915 = vmatprep.mubr.f32.mxu0 %v1776
        %1916 = vmatmul.mubr.f32.gmra.mrb[0].mxu0 %v1775
        %v1917 = vpop.f32.mrb[0].mxu0
        %v1918 = vadd.f32 0.0, %v1917
        %v1919 = vpop.f32.mrb[0].mxu0
        %1920 = vmatprep.mubr.f32.mxu0 %v1778
        %1921 = vmatmul.mubr.f32.gmra.mrb[0].mxu0 %v1777
        %v1922 = vpop.f32.mrb[0].mxu0
        %v1923 = vadd.f32 0.0, %v1922
        %v1924 = vpop.f32.mrb[0].mxu0
        %1925 = vmatprep.mubr.f32.mxu0 %v1780
        %1926 = vmatmul.mubr.f32.gmra.mrb[0].mxu0 %v1779
        %v1927 = vpop.f32.mrb[0].mxu0
        %v1928 = vadd.f32 0.0, %v1927
        %v1929 = vpop.f32.mrb[0].mxu0
        %1930 = vmatprep.mubr.f32.mxu0 %v1782
        %1931 = vmatmul.mubr.f32.gmra.mrb[0].mxu0 %v1781
        %v1932 = vpop.f32.mrb[0].mxu0
        %v1933 = vadd.f32 0.0, %v1932
        %v1934 = vpop.f32.mrb[0].mxu0
        %1935 = vmatprep.mubr.f32.mxu0 %v1784
        %1936 = vmatmul.mubr.f32.gmra.mrb[0].mxu0 %v1783
        %v1937 = vpop.f32.mrb[0].mxu0
        %v1938 = vadd.f32 0.0, %v1937
        %v1939 = vpop.f32.mrb[0].mxu0
        %1940 = vmatprep.mubr.f32.mxu0 %v1786
        %1941 = vmatmul.mubr.f32.gmra.mrb[0].mxu0 %v1785
        %v1942 = vpop.f32.mrb[0].mxu0
        %v1943 = vadd.f32 0.0, %v1942
        %v1944 = vpop.f32.mrb[0].mxu0
        %1945 = vmatprep.mubr.f32.mxu0 %v1788
        %1946 = vmatmul.mubr.f32.gmra.mrb[0].mxu0 %v1787
        %v1947 = vpop.f32.mrb[0].mxu0
        %v1948 = vadd.f32 0.0, %v1947
        %v1949 = vpop.f32.mrb[0].mxu0
        %1950 = vmatprep.mubr.f32.mxu0 %v1790
        %1951 = vmatmul.mubr.f32.gmra.mrb[0].mxu0 %v1789
        %v1952 = vpop.f32.mrb[0].mxu0
        %v1953 = vadd.f32 0.0, %v1952
        %v1954 = vpop.f32.mrb[0].mxu0
        %1955 = vmatprep.mubr.f32.mxu0 %v1792
        %1956 = vmatmul.mubr.f32.gmra.mrb[0].mxu0 %v1791
        %v1957 = vpop.f32.mrb[0].mxu0
        %v1958 = vadd.f32 0.0, %v1957
        %v1959 = vpop.f32.mrb[0].mxu0
        %1960 = vmatprep.mubr.f32.mxu0 %v1794
        %1961 = vmatmul.mubr.f32.gmra.mrb[0].mxu0 %v1793
        %v1962 = vpop.f32.mrb[0].mxu0
        %v1963 = vadd.f32 0.0, %v1962
        %v1964 = vpop.f32.mrb[0].mxu0
        %1965 = vmatprep.mubr.f32.mxu0 %v1796
        %1966 = vmatmul.mubr.f32.gmra.mrb[0].mxu0 %v1795
        %v1967 = vpop.f32.mrb[0].mxu0
        %v1968 = vadd.f32 0.0, %v1967
        %v1969 = vpop.f32.mrb[0].mxu0
        %1970 = vmatprep.mubr.f32.mxu0 %v1798
        %1971 = vmatmul.mubr.f32.gmra.mrb[0].mxu0 %v1797
        %v1972 = vpop.f32.mrb[0].mxu0
        %v1973 = vadd.f32 0.0, %v1972
        %v1974 = vpop.f32.mrb[0].mxu0
        %1975 = vmatprep.mubr.f32.mxu0 %v1800
        %1976 = vmatmul.mubr.f32.gmra.mrb[0].mxu0 %v1799
        %v1977 = vpop.f32.mrb[0].mxu0
        %v1978 = vadd.f32 0.0, %v1977
        %v1979 = vpop.f32.mrb[0].mxu0
        %1980 = vmatprep.mubr.f32.mxu0 %v1802
        %1981 = vmatmul.mubr.f32.gmra.mrb[0].mxu0 %v1801
        %v1982 = vpop.f32.mrb[0].mxu0
        %v1983 = vadd.f32 0.0, %v1982
        %v1984 = vpop.f32.mrb[0].mxu0
        %1985 = vmatprep.mubr.f32.mxu0 %v1804
        %1986 = vmatmul.mubr.f32.gmra.mrb[0].mxu0 %v1803
        %v1987 = vpop.f32.mrb[0].mxu0
        %v1988 = vadd.f32 0.0, %v1987
        %v1989 = vpop.f32.mrb[0].mxu0
        %1990 = vmatprep.mubr.f32.mxu0 %v1806
        %1991 = vmatmul.mubr.f32.gmra.mrb[0].mxu0 %v1805
        %v1992 = vpop.f32.mrb[0].mxu0
        %v1993 = vadd.f32 0.0, %v1992
        %v1994 = vpop.f32.mrb[0].mxu0
        %1995 = vmatprep.mubr.f32.mxu0 %v1808
        %1996 = vmatmul.mubr.f32.gmra.mrb[0].mxu0 %v1807
        %v1997 = vpop.f32.mrb[0].mxu0
        %v1998 = vadd.f32 0.0, %v1997
        %v1999 = vpop.f32.mrb[0].mxu0
        %2000 = vmatprep.mubr.f32.mxu0 %v1810
        %2001 = vmatmul.mubr.f32.gmra.mrb[0].mxu0 %v1809
        %v2002 = vpop.f32.mrb[0].mxu0
        %v2003 = vadd.f32 0.0, %v2002
        %v2004 = vpop.f32.mrb[0].mxu0
        %2005 = vmatprep.mubr.f32.mxu0 %v1812
        %2006 = vmatmul.mubr.f32.gmra.mrb[0].mxu0 %v1811
        %v2007 = vpop.f32.mrb[0].mxu0
        %v2008 = vadd.f32 0.0, %v2007
        %v2009 = vpop.f32.mrb[0].mxu0
        %2010 = vmatprep.mubr.f32.mxu0 %v1814
        %2011 = vmatmul.mubr.f32.gmra.mrb[0].mxu0 %v1813
        %v2012 = vpop.f32.mrb[0].mxu0
        %v2013 = vadd.f32 0.0, %v2012
        %v2014 = vpop.f32.mrb[0].mxu0
        %2015 = vmatprep.mubr.f32.mxu0 %v1816
        %2016 = vmatmul.mubr.f32.gmra.mrb[0].mxu0 %v1815
        %v2017 = vpop.f32.mrb[0].mxu0
        %v2018 = vadd.f32 0.0, %v2017
        %v2019 = vpop.f32.mrb[0].mxu0
        %2020 = vmatprep.mubr.f32.mxu0 %v1818
        %2021 = vmatmul.mubr.f32.gmra.mrb[0].mxu0 %v1817
        %v2022 = vpop.f32.mrb[0].mxu0
        %v2023 = vadd.f32 0.0, %v2022
        %v2024 = vpop.f32.mrb[0].mxu0
        %2025 = vmatprep.mubr.f32.mxu0 %v1820
        %2026 = vmatmul.mubr.f32.gmra.mrb[0].mxu0 %v1819
        %v2027 = vpop.f32.mrb[0].mxu0
        %v2028 = vadd.f32 0.0, %v2027
        %v2029 = vpop.f32.mrb[0].mxu0
        %2030 = vmatprep.mubr.f32.mxu0 %v1822
        %2031 = vmatmul.mubr.f32.gmra.mrb[0].mxu0 %v1821
        %v2032 = vpop.f32.mrb[0].mxu0
        %v2033 = vadd.f32 0.0, %v2032
        %v2034 = vpop.f32.mrb[0].mxu0
        %2035 = vmatprep.mubr.f32.mxu0 %v1824
        %2036 = vmatmul.mubr.f32.gmra.mrb[0].mxu0 %v1823
        %v2037 = vpop.f32.mrb[0].mxu0
        %v2038 = vadd.f32 0.0, %v2037
        %v2039 = vpop.f32.mrb[0].mxu0
        %2040 = vmatprep.mubr.f32.mxu0 %v1826
        %2041 = vmatmul.mubr.f32.gmra.mrb[0].mxu0 %v1825
        %v2042 = vpop.f32.mrb[0].mxu0
        %v2043 = vadd.f32 0.0, %v2042
        %v2044 = vpop.f32.mrb[0].mxu0
        %2045 = vmatprep.mubr.f32.mxu0 %v1828
        %2046 = vmatmul.mubr.f32.gmra.mrb[0].mxu0 %v1827
        %v2047 = vpop.f32.mrb[0].mxu0
        %v2048 = vadd.f32 0.0, %v2047
        %v2049 = vpop.f32.mrb[0].mxu0
        %2050 = vmatprep.mubr.f32.mxu0 %v1830
        %2051 = vmatmul.mubr.f32.gmra.mrb[0].mxu0 %v1829
        %v2052 = vpop.f32.mrb[0].mxu0
        %v2053 = vadd.f32 0.0, %v2052
        %v2054 = vpop.f32.mrb[0].mxu0
        %2055 = vdwg.mxu0
        %v2056 = vld [vmem:[#allocation2] sm:$0xff]
        %v2057 = vld [vmem:[#allocation2 + $0x8] sm:$0xff]
        %v2058 = vld [vmem:[#allocation2 + $0x10] sm:$0xff]
        %v2059 = vld [vmem:[#allocation2 + $0x18] sm:$0xff]
        %v2060 = vld [vmem:[#allocation2 + $0x20] sm:$0xff]
        %v2061 = vld [vmem:[#allocation2 + $0x28] sm:$0xff]
        %v2062 = vld [vmem:[#allocation2 + $0x30] sm:$0xff]
        %v2063 = vld [vmem:[#allocation2 + $0x38] sm:$0xff]
        %v2064 = vld [vmem:[#allocation2 + $0x40] sm:$0xff]
        %v2065 = vld [vmem:[#allocation2 + $0x48] sm:$0xff]
        %v2066 = vld [vmem:[#allocation2 + $0x50] sm:$0xff]
        %v2067 = vld [vmem:[#allocation2 + $0x58] sm:$0xff]
        %v2068 = vld [vmem:[#allocation2 + $0x60] sm:$0xff]
        %v2069 = vld [vmem:[#allocation2 + $0x68] sm:$0xff]
        %v2070 = vld [vmem:[#allocation2 + $0x70] sm:$0xff]
        %v2071 = vld [vmem:[#allocation2 + $0x78] sm:$0xff]
        %v2072 = vld [vmem:[#allocation2 + $0x80] sm:$0xff]
        %v2073 = vld [vmem:[#allocation2 + $0x88] sm:$0xff]
        %v2074 = vld [vmem:[#allocation2 + $0x90] sm:$0xff]
        %v2075 = vld [vmem:[#allocation2 + $0x98] sm:$0xff]
        %v2076 = vld [vmem:[#allocation2 + $0xa0] sm:$0xff]
        %v2077 = vld [vmem:[#allocation2 + $0xa8] sm:$0xff]
        %v2078 = vld [vmem:[#allocation2 + $0xb0] sm:$0xff]
        %v2079 = vld [vmem:[#allocation2 + $0xb8] sm:$0xff]
        %v2080 = vld [vmem:[#allocation2 + $0xc0] sm:$0xff]
        %v2081 = vld [vmem:[#allocation2 + $0xc8] sm:$0xff]
        %v2082 = vld [vmem:[#allocation2 + $0xd0] sm:$0xff]
        %v2083 = vld [vmem:[#allocation2 + $0xd8] sm:$0xff]
        %v2084 = vld [vmem:[#allocation2 + $0xe0] sm:$0xff]
        %v2085 = vld [vmem:[#allocation2 + $0xe8] sm:$0xff]
        %v2086 = vld [vmem:[#allocation2 + $0xf0] sm:$0xff]
        %v2087 = vld [vmem:[#allocation2 + $0xf8] sm:$0xff]
        %v2088 = vld [vmem:[#allocation2 + $0x100] sm:$0xff]
        %v2089 = vld [vmem:[#allocation2 + $0x108] sm:$0xff]
        %v2090 = vld [vmem:[#allocation2 + $0x110] sm:$0xff]
        %v2091 = vld [vmem:[#allocation2 + $0x118] sm:$0xff]
        %v2092 = vld [vmem:[#allocation2 + $0x120] sm:$0xff]
        %v2093 = vld [vmem:[#allocation2 + $0x128] sm:$0xff]
        %v2094 = vld [vmem:[#allocation2 + $0x130] sm:$0xff]
        %v2095 = vld [vmem:[#allocation2 + $0x138] sm:$0xff]
        %v2096 = vld [vmem:[#allocation2 + $0x140] sm:$0xff]
        %v2097 = vld [vmem:[#allocation2 + $0x148] sm:$0xff]
        %v2098 = vld [vmem:[#allocation2 + $0x150] sm:$0xff]
        %v2099 = vld [vmem:[#allocation2 + $0x158] sm:$0xff]
        %v2100 = vld [vmem:[#allocation2 + $0x160] sm:$0xff]
        %v2101 = vld [vmem:[#allocation2 + $0x168] sm:$0xff]
        %v2102 = vld [vmem:[#allocation2 + $0x170] sm:$0xff]
        %v2103 = vld [vmem:[#allocation2 + $0x178] sm:$0xff]
        %v2104 = vld [vmem:[%s4] sm:$0x7]
        %v2106 = vlaneseq
        %v2107 = vshrl.u32 %v2106, 7
        %v2108 = vsub.s32 0, %v2107
        %v2109 = vrot.slane %v2104, %v2108
        %v2110 = vlaneseq
        %v2111 = vshrl.u32 %v2110, 7
        %v2112 = vsub.s32 1, %v2111
        %v2113 = vrot.slane %v2104, %v2112
        %v2114 = vlaneseq
        %v2115 = vshrl.u32 %v2114, 7
        %v2116 = vsub.s32 2, %v2115
        %v2117 = vrot.slane %v2104, %v2116
        %2121 = vmatprep.subr.mxu0 %v2057
        %2122 = vmatpush1.msra.mxu0 %v2056
        %2123 = vmatprep.subr.mxu0 %v2060
        %2124 = vmatpush1.msra.mxu0 %v2059
        %2125 = vmatprep.subr.mxu0 %v2063
        %2126 = vmatpush1.msra.mxu0 %v2062
        %2127 = vmatprep.subr.mxu0 %v2066
        %2128 = vmatpush1.msra.mxu0 %v2065
        %2129 = vmatprep.subr.mxu0 %v2069
        %2130 = vmatpush1.msra.mxu0 %v2068
        %2131 = vmatprep.subr.mxu0 %v2072
        %2132 = vmatpush1.msra.mxu0 %v2071
        %2133 = vmatprep.subr.mxu0 %v2075
        %2134 = vmatpush1.msra.mxu0 %v2074
        %2135 = vmatprep.subr.mxu0 %v2078
        %2136 = vmatpush1.msra.mxu0 %v2077
        %2137 = vmatprep.subr.mxu0 %v2081
        %2138 = vmatpush1.msra.mxu0 %v2080
        %2139 = vmatprep.subr.mxu0 %v2084
        %2140 = vmatpush1.msra.mxu0 %v2083
        %2141 = vmatprep.subr.mxu0 %v2087
        %2142 = vmatpush1.msra.mxu0 %v2086
        %2143 = vmatprep.subr.mxu0 %v2090
        %2144 = vmatpush1.msra.mxu0 %v2089
        %2145 = vmatprep.subr.mxu0 %v2093
        %2146 = vmatpush1.msra.mxu0 %v2092
        %2147 = vmatprep.subr.mxu0 %v2096
        %2148 = vmatpush1.msra.mxu0 %v2095
        %2149 = vmatprep.subr.mxu0 %v2099
        %2150 = vmatpush1.msra.mxu0 %v2098
        %2151 = vmatprep.subr.mxu0 %v2102
        %2152 = vmatpush1.msra.mxu0 %v2101
        %2153 = vmatprep.subr.mxu0 0.0
        %2154 = vmatpush1.msra.mxu0 0.0
        %2155 = vmatprep.subr.mxu0 0.0
        %2156 = vmatpush1.msra.mxu0 0.0
        %2157 = vmatprep.subr.mxu0 0.0
        %2158 = vmatpush1.msra.mxu0 0.0
        %2159 = vmatprep.subr.mxu0 0.0
        %2160 = vmatpush1.msra.mxu0 0.0
        %2161 = vmatprep.subr.mxu0 0.0
        %2162 = vmatpush1.msra.mxu0 0.0
        %2163 = vmatprep.subr.mxu0 0.0
        %2164 = vmatpush1.msra.mxu0 0.0
        %2165 = vmatprep.subr.mxu0 0.0
        %2166 = vmatpush1.msra.mxu0 0.0
        %2167 = vmatprep.subr.mxu0 0.0
        %2168 = vmatpush1.msra.mxu0 0.0
        %2169 = vmatprep.subr.mxu0 0.0
        %2170 = vmatpush1.msra.mxu0 0.0
        %2171 = vmatprep.subr.mxu0 0.0
        %2172 = vmatpush1.msra.mxu0 0.0
        %2173 = vmatprep.subr.mxu0 0.0
        %2174 = vmatpush1.msra.mxu0 0.0
        %2175 = vmatprep.subr.mxu0 0.0
        %2176 = vmatpush1.msra.mxu0 0.0
        %2177 = vmatprep.subr.mxu0 0.0
        %2178 = vmatpush1.msra.mxu0 0.0
        %2179 = vmatprep.subr.mxu0 0.0
        %2180 = vmatpush1.msra.mxu0 0.0
        %2181 = vmatprep.subr.mxu0 0.0
        %2182 = vmatpush1.msra.mxu0 0.0
        %2183 = vmatprep.subr.mxu0 0.0
        %2184 = vmatpush1.msra.mxu0 0.0
        %2185 = vmatprep.mubr.f32.mxu0 0.0
        %2186 = vmatmul.mubr.f32.gmra.mrb[0].mxu0 %v1898
        %v2187 = vpop.f32.mrb[0].mxu0
        %v2188 = vadd.f32 %v2109, %v2187
        %v2189 = vpop.f32.mrb[0].mxu0
        %v2190 = vadd.f32 %v2113, %v2189
        %2191 = vmatprep.mubr.f32.mxu0 0.0
        %2192 = vmatmul.mubr.f32.gmra.mrb[0].mxu0 %v1903
        %v2193 = vpop.f32.mrb[0].mxu0
        %v2194 = vadd.f32 %v2109, %v2193
        %v2195 = vpop.f32.mrb[0].mxu0
        %v2196 = vadd.f32 %v2113, %v2195
        %2197 = vmatprep.mubr.f32.mxu0 0.0
        %2198 = vmatmul.mubr.f32.gmra.mrb[0].mxu0 %v1908
        %v2199 = vpop.f32.mrb[0].mxu0
        %v2200 = vadd.f32 %v2109, %v2199
        %v2201 = vpop.f32.mrb[0].mxu0
        %v2202 = vadd.f32 %v2113, %v2201
        %2203 = vmatprep.mubr.f32.mxu0 0.0
        %2204 = vmatmul.mubr.f32.gmra.mrb[0].mxu0 %v1913
        %v2205 = vpop.f32.mrb[0].mxu0
        %v2206 = vadd.f32 %v2109, %v2205
        %v2207 = vpop.f32.mrb[0].mxu0
        %v2208 = vadd.f32 %v2113, %v2207
        %2209 = vmatprep.mubr.f32.mxu0 0.0
        %2210 = vmatmul.mubr.f32.gmra.mrb[0].mxu0 %v1918
        %v2211 = vpop.f32.mrb[0].mxu0
        %v2212 = vadd.f32 %v2109, %v2211
        %v2213 = vpop.f32.mrb[0].mxu0
        %v2214 = vadd.f32 %v2113, %v2213
        %2215 = vmatprep.mubr.f32.mxu0 0.0
        %2216 = vmatmul.mubr.f32.gmra.mrb[0].mxu0 %v1923
        %v2217 = vpop.f32.mrb[0].mxu0
        %v2218 = vadd.f32 %v2109, %v2217
        %v2219 = vpop.f32.mrb[0].mxu0
        %v2220 = vadd.f32 %v2113, %v2219
        %2221 = vmatprep.mubr.f32.mxu0 0.0
        %2222 = vmatmul.mubr.f32.gmra.mrb[0].mxu0 %v1928
        %v2223 = vpop.f32.mrb[0].mxu0
        %v2224 = vadd.f32 %v2109, %v2223
        %v2225 = vpop.f32.mrb[0].mxu0
        %v2226 = vadd.f32 %v2113, %v2225
        %2227 = vmatprep.mubr.f32.mxu0 0.0
        %2228 = vmatmul.mubr.f32.gmra.mrb[0].mxu0 %v1933
        %v2229 = vpop.f32.mrb[0].mxu0
        %v2230 = vadd.f32 %v2109, %v2229
        %v2231 = vpop.f32.mrb[0].mxu0
        %v2232 = vadd.f32 %v2113, %v2231
        %2233 = vmatprep.mubr.f32.mxu0 0.0
        %2234 = vmatmul.mubr.f32.gmra.mrb[0].mxu0 %v1938
        %v2235 = vpop.f32.mrb[0].mxu0
        %v2236 = vadd.f32 %v2109, %v2235
        %v2237 = vpop.f32.mrb[0].mxu0
        %v2238 = vadd.f32 %v2113, %v2237
        %2239 = vmatprep.mubr.f32.mxu0 0.0
        %2240 = vmatmul.mubr.f32.gmra.mrb[0].mxu0 %v1943
        %v2241 = vpop.f32.mrb[0].mxu0
        %v2242 = vadd.f32 %v2109, %v2241
        %v2243 = vpop.f32.mrb[0].mxu0
        %v2244 = vadd.f32 %v2113, %v2243
        %2245 = vmatprep.mubr.f32.mxu0 0.0
        %2246 = vmatmul.mubr.f32.gmra.mrb[0].mxu0 %v1948
        %v2247 = vpop.f32.mrb[0].mxu0
        %v2248 = vadd.f32 %v2109, %v2247
        %v2249 = vpop.f32.mrb[0].mxu0
        %v2250 = vadd.f32 %v2113, %v2249
        %2251 = vmatprep.mubr.f32.mxu0 0.0
        %2252 = vmatmul.mubr.f32.gmra.mrb[0].mxu0 %v1953
        %v2253 = vpop.f32.mrb[0].mxu0
        %v2254 = vadd.f32 %v2109, %v2253
        %v2255 = vpop.f32.mrb[0].mxu0
        %v2256 = vadd.f32 %v2113, %v2255
        %2257 = vmatprep.mubr.f32.mxu0 0.0
        %2258 = vmatmul.mubr.f32.gmra.mrb[0].mxu0 %v1958
        %v2259 = vpop.f32.mrb[0].mxu0
        %v2260 = vadd.f32 %v2109, %v2259
        %v2261 = vpop.f32.mrb[0].mxu0
        %v2262 = vadd.f32 %v2113, %v2261
        %2263 = vmatprep.mubr.f32.mxu0 0.0
        %2264 = vmatmul.mubr.f32.gmra.mrb[0].mxu0 %v1963
        %v2265 = vpop.f32.mrb[0].mxu0
        %v2266 = vadd.f32 %v2109, %v2265
        %v2267 = vpop.f32.mrb[0].mxu0
        %v2268 = vadd.f32 %v2113, %v2267
        %2269 = vmatprep.mubr.f32.mxu0 0.0
        %2270 = vmatmul.mubr.f32.gmra.mrb[0].mxu0 %v1968
        %v2271 = vpop.f32.mrb[0].mxu0
        %v2272 = vadd.f32 %v2109, %v2271
        %v2273 = vpop.f32.mrb[0].mxu0
        %v2274 = vadd.f32 %v2113, %v2273
        %2275 = vmatprep.mubr.f32.mxu0 0.0
        %2276 = vmatmul.mubr.f32.gmra.mrb[0].mxu0 %v1973
        %v2277 = vpop.f32.mrb[0].mxu0
        %v2278 = vadd.f32 %v2109, %v2277
        %v2279 = vpop.f32.mrb[0].mxu0
        %v2280 = vadd.f32 %v2113, %v2279
        %2281 = vmatprep.mubr.f32.mxu0 0.0
        %2282 = vmatmul.mubr.f32.gmra.mrb[0].mxu0 %v1978
        %v2283 = vpop.f32.mrb[0].mxu0
        %v2284 = vadd.f32 %v2109, %v2283
        %v2285 = vpop.f32.mrb[0].mxu0
        %v2286 = vadd.f32 %v2113, %v2285
        %2287 = vmatprep.mubr.f32.mxu0 0.0
        %2288 = vmatmul.mubr.f32.gmra.mrb[0].mxu0 %v1983
        %v2289 = vpop.f32.mrb[0].mxu0
        %v2290 = vadd.f32 %v2109, %v2289
        %v2291 = vpop.f32.mrb[0].mxu0
        %v2292 = vadd.f32 %v2113, %v2291
        %2293 = vmatprep.mubr.f32.mxu0 0.0
        %2294 = vmatmul.mubr.f32.gmra.mrb[0].mxu0 %v1988
        %v2295 = vpop.f32.mrb[0].mxu0
        %v2296 = vadd.f32 %v2109, %v2295
        %v2297 = vpop.f32.mrb[0].mxu0
        %v2298 = vadd.f32 %v2113, %v2297
        %2299 = vmatprep.mubr.f32.mxu0 0.0
        %2300 = vmatmul.mubr.f32.gmra.mrb[0].mxu0 %v1993
        %v2301 = vpop.f32.mrb[0].mxu0
        %v2302 = vadd.f32 %v2109, %v2301
        %v2303 = vpop.f32.mrb[0].mxu0
        %v2304 = vadd.f32 %v2113, %v2303
        %2305 = vmatprep.mubr.f32.mxu0 0.0
        %2306 = vmatmul.mubr.f32.gmra.mrb[0].mxu0 %v1998
        %v2307 = vpop.f32.mrb[0].mxu0
        %v2308 = vadd.f32 %v2109, %v2307
        %v2309 = vpop.f32.mrb[0].mxu0
        %v2310 = vadd.f32 %v2113, %v2309
        %2311 = vmatprep.mubr.f32.mxu0 0.0
        %2312 = vmatmul.mubr.f32.gmra.mrb[0].mxu0 %v2003
        %v2313 = vpop.f32.mrb[0].mxu0
        %v2314 = vadd.f32 %v2109, %v2313
        %v2315 = vpop.f32.mrb[0].mxu0
        %v2316 = vadd.f32 %v2113, %v2315
        %2317 = vmatprep.mubr.f32.mxu0 0.0
        %2318 = vmatmul.mubr.f32.gmra.mrb[0].mxu0 %v2008
        %v2319 = vpop.f32.mrb[0].mxu0
        %v2320 = vadd.f32 %v2109, %v2319
        %v2321 = vpop.f32.mrb[0].mxu0
        %v2322 = vadd.f32 %v2113, %v2321
        %2323 = vmatprep.mubr.f32.mxu0 0.0
        %2324 = vmatmul.mubr.f32.gmra.mrb[0].mxu0 %v2013
        %v2325 = vpop.f32.mrb[0].mxu0
        %v2326 = vadd.f32 %v2109, %v2325
        %v2327 = vpop.f32.mrb[0].mxu0
        %v2328 = vadd.f32 %v2113, %v2327
        %2329 = vmatprep.mubr.f32.mxu0 0.0
        %2330 = vmatmul.mubr.f32.gmra.mrb[0].mxu0 %v2018
        %v2331 = vpop.f32.mrb[0].mxu0
        %v2332 = vadd.f32 %v2109, %v2331
        %v2333 = vpop.f32.mrb[0].mxu0
        %v2334 = vadd.f32 %v2113, %v2333
        %2335 = vmatprep.mubr.f32.mxu0 0.0
        %2336 = vmatmul.mubr.f32.gmra.mrb[0].mxu0 %v2023
        %v2337 = vpop.f32.mrb[0].mxu0
        %v2338 = vadd.f32 %v2109, %v2337
        %v2339 = vpop.f32.mrb[0].mxu0
        %v2340 = vadd.f32 %v2113, %v2339
        %2341 = vmatprep.mubr.f32.mxu0 0.0
        %2342 = vmatmul.mubr.f32.gmra.mrb[0].mxu0 %v2028
        %v2343 = vpop.f32.mrb[0].mxu0
        %v2344 = vadd.f32 %v2109, %v2343
        %v2345 = vpop.f32.mrb[0].mxu0
        %v2346 = vadd.f32 %v2113, %v2345
        %2347 = vmatprep.mubr.f32.mxu0 0.0
        %2348 = vmatmul.mubr.f32.gmra.mrb[0].mxu0 %v2033
        %v2349 = vpop.f32.mrb[0].mxu0
        %v2350 = vadd.f32 %v2109, %v2349
        %v2351 = vpop.f32.mrb[0].mxu0
        %v2352 = vadd.f32 %v2113, %v2351
        %2353 = vmatprep.mubr.f32.mxu0 0.0
        %2354 = vmatmul.mubr.f32.gmra.mrb[0].mxu0 %v2038
        %v2355 = vpop.f32.mrb[0].mxu0
        %v2356 = vadd.f32 %v2109, %v2355
        %v2357 = vpop.f32.mrb[0].mxu0
        %v2358 = vadd.f32 %v2113, %v2357
        %2359 = vmatprep.mubr.f32.mxu0 0.0
        %2360 = vmatmul.mubr.f32.gmra.mrb[0].mxu0 %v2043
        %v2361 = vpop.f32.mrb[0].mxu0
        %v2362 = vadd.f32 %v2109, %v2361
        %v2363 = vpop.f32.mrb[0].mxu0
        %v2364 = vadd.f32 %v2113, %v2363
        %2365 = vmatprep.mubr.f32.mxu0 0.0
        %2366 = vmatmul.mubr.f32.gmra.mrb[0].mxu0 %v2048
        %v2367 = vpop.f32.mrb[0].mxu0
        %v2368 = vadd.f32 %v2109, %v2367
        %v2369 = vpop.f32.mrb[0].mxu0
        %v2370 = vadd.f32 %v2113, %v2369
        %2371 = vmatprep.mubr.f32.mxu0 0.0
        %2372 = vmatmul.mubr.f32.gmra.mrb[0].mxu0 %v2053
        %v2373 = vpop.f32.mrb[0].mxu0
        %v2374 = vadd.f32 %v2109, %v2373
        %v2375 = vpop.f32.mrb[0].mxu0
        %v2376 = vadd.f32 %v2113, %v2375
        %2377 = vdwg.mxu0
        %2378 = vmatprep.subr.mxu0 0.0
        %2379 = vmatpush1.msra.mxu0 %v2058
        %2380 = vmatprep.subr.mxu0 0.0
        %2381 = vmatpush1.msra.mxu0 %v2061
        %2382 = vmatprep.subr.mxu0 0.0
        %2383 = vmatpush1.msra.mxu0 %v2064
        %2384 = vmatprep.subr.mxu0 0.0
        %2385 = vmatpush1.msra.mxu0 %v2067
        %2386 = vmatprep.subr.mxu0 0.0
        %2387 = vmatpush1.msra.mxu0 %v2070
        %2388 = vmatprep.subr.mxu0 0.0
        %2389 = vmatpush1.msra.mxu0 %v2073
        %2390 = vmatprep.subr.mxu0 0.0
        %2391 = vmatpush1.msra.mxu0 %v2076
        %2392 = vmatprep.subr.mxu0 0.0
        %2393 = vmatpush1.msra.mxu0 %v2079
        %2394 = vmatprep.subr.mxu0 0.0
        %2395 = vmatpush1.msra.mxu0 %v2082
        %2396 = vmatprep.subr.mxu0 0.0
        %2397 = vmatpush1.msra.mxu0 %v2085
        %2398 = vmatprep.subr.mxu0 0.0
        %2399 = vmatpush1.msra.mxu0 %v2088
        %2400 = vmatprep.subr.mxu0 0.0
        %2401 = vmatpush1.msra.mxu0 %v2091
        %2402 = vmatprep.subr.mxu0 0.0
        %2403 = vmatpush1.msra.mxu0 %v2094
        %2404 = vmatprep.subr.mxu0 0.0
        %2405 = vmatpush1.msra.mxu0 %v2097
        %2406 = vmatprep.subr.mxu0 0.0
        %2407 = vmatpush1.msra.mxu0 %v2100
        %2408 = vmatprep.subr.mxu0 0.0
        %2409 = vmatpush1.msra.mxu0 %v2103
        %2410 = vmatprep.subr.mxu0 0.0
        %2411 = vmatpush1.msra.mxu0 0.0
        %2412 = vmatprep.subr.mxu0 0.0
        %2413 = vmatpush1.msra.mxu0 0.0
        %2414 = vmatprep.subr.mxu0 0.0
        %2415 = vmatpush1.msra.mxu0 0.0
        %2416 = vmatprep.subr.mxu0 0.0
        %2417 = vmatpush1.msra.mxu0 0.0
        %2418 = vmatprep.subr.mxu0 0.0
        %2419 = vmatpush1.msra.mxu0 0.0
        %2420 = vmatprep.subr.mxu0 0.0
        %2421 = vmatpush1.msra.mxu0 0.0
        %2422 = vmatprep.subr.mxu0 0.0
        %2423 = vmatpush1.msra.mxu0 0.0
        %2424 = vmatprep.subr.mxu0 0.0
        %2425 = vmatpush1.msra.mxu0 0.0
        %2426 = vmatprep.subr.mxu0 0.0
        %2427 = vmatpush1.msra.mxu0 0.0
        %2428 = vmatprep.subr.mxu0 0.0
        %2429 = vmatpush1.msra.mxu0 0.0
        %2430 = vmatprep.subr.mxu0 0.0
        %2431 = vmatpush1.msra.mxu0 0.0
        %2432 = vmatprep.subr.mxu0 0.0
        %2433 = vmatpush1.msra.mxu0 0.0
        %2434 = vmatprep.subr.mxu0 0.0
        %2435 = vmatpush1.msra.mxu0 0.0
        %2436 = vmatprep.subr.mxu0 0.0
        %2437 = vmatpush1.msra.mxu0 0.0
        %2438 = vmatprep.subr.mxu0 0.0
        %2439 = vmatpush1.msra.mxu0 0.0
        %2440 = vmatprep.subr.mxu0 0.0
        %2441 = vmatpush1.msra.mxu0 0.0
        %2442 = vmatprep.mubr.f32.mxu0 0.0
        %2443 = vmatmul.mubr.f32.gmra.mrb[0].mxu0 %v1898
        %v2444 = vpop.f32.mrb[0].mxu0
        %v2445 = vadd.f32 %v2117, %v2444
        %v2446 = vpop.f32.mrb[0].mxu0
        %2447 = vmatprep.mubr.f32.mxu0 0.0
        %2448 = vmatmul.mubr.f32.gmra.mrb[0].mxu0 %v1903
        %v2449 = vpop.f32.mrb[0].mxu0
        %v2450 = vadd.f32 %v2117, %v2449
        %v2451 = vpop.f32.mrb[0].mxu0
        %2452 = vmatprep.mubr.f32.mxu0 0.0
        %2453 = vmatmul.mubr.f32.gmra.mrb[0].mxu0 %v1908
        %v2454 = vpop.f32.mrb[0].mxu0
        %v2455 = vadd.f32 %v2117, %v2454
        %v2456 = vpop.f32.mrb[0].mxu0
        %2457 = vmatprep.mubr.f32.mxu0 0.0
        %2458 = vmatmul.mubr.f32.gmra.mrb[0].mxu0 %v1913
        %v2459 = vpop.f32.mrb[0].mxu0
        %v2460 = vadd.f32 %v2117, %v2459
        %v2461 = vpop.f32.mrb[0].mxu0
        %2462 = vmatprep.mubr.f32.mxu0 0.0
        %2463 = vmatmul.mubr.f32.gmra.mrb[0].mxu0 %v1918
        %v2464 = vpop.f32.mrb[0].mxu0
        %v2465 = vadd.f32 %v2117, %v2464
        %v2466 = vpop.f32.mrb[0].mxu0
        %2467 = vmatprep.mubr.f32.mxu0 0.0
        %2468 = vmatmul.mubr.f32.gmra.mrb[0].mxu0 %v1923
        %v2469 = vpop.f32.mrb[0].mxu0
        %v2470 = vadd.f32 %v2117, %v2469
        %v2471 = vpop.f32.mrb[0].mxu0
        %2472 = vmatprep.mubr.f32.mxu0 0.0
        %2473 = vmatmul.mubr.f32.gmra.mrb[0].mxu0 %v1928
        %v2474 = vpop.f32.mrb[0].mxu0
        %v2475 = vadd.f32 %v2117, %v2474
        %v2476 = vpop.f32.mrb[0].mxu0
        %2477 = vmatprep.mubr.f32.mxu0 0.0
        %2478 = vmatmul.mubr.f32.gmra.mrb[0].mxu0 %v1933
        %v2479 = vpop.f32.mrb[0].mxu0
        %v2480 = vadd.f32 %v2117, %v2479
        %v2481 = vpop.f32.mrb[0].mxu0
        %2482 = vmatprep.mubr.f32.mxu0 0.0
        %2483 = vmatmul.mubr.f32.gmra.mrb[0].mxu0 %v1938
        %v2484 = vpop.f32.mrb[0].mxu0
        %v2485 = vadd.f32 %v2117, %v2484
        %v2486 = vpop.f32.mrb[0].mxu0
        %2487 = vmatprep.mubr.f32.mxu0 0.0
        %2488 = vmatmul.mubr.f32.gmra.mrb[0].mxu0 %v1943
        %v2489 = vpop.f32.mrb[0].mxu0
        %v2490 = vadd.f32 %v2117, %v2489
        %v2491 = vpop.f32.mrb[0].mxu0
        %2492 = vmatprep.mubr.f32.mxu0 0.0
        %2493 = vmatmul.mubr.f32.gmra.mrb[0].mxu0 %v1948
        %v2494 = vpop.f32.mrb[0].mxu0
        %v2495 = vadd.f32 %v2117, %v2494
        %v2496 = vpop.f32.mrb[0].mxu0
        %2497 = vmatprep.mubr.f32.mxu0 0.0
        %2498 = vmatmul.mubr.f32.gmra.mrb[0].mxu0 %v1953
        %v2499 = vpop.f32.mrb[0].mxu0
        %v2500 = vadd.f32 %v2117, %v2499
        %v2501 = vpop.f32.mrb[0].mxu0
        %2502 = vmatprep.mubr.f32.mxu0 0.0
        %2503 = vmatmul.mubr.f32.gmra.mrb[0].mxu0 %v1958
        %v2504 = vpop.f32.mrb[0].mxu0
        %v2505 = vadd.f32 %v2117, %v2504
        %v2506 = vpop.f32.mrb[0].mxu0
        %2507 = vmatprep.mubr.f32.mxu0 0.0
        %2508 = vmatmul.mubr.f32.gmra.mrb[0].mxu0 %v1963
        %v2509 = vpop.f32.mrb[0].mxu0
        %v2510 = vadd.f32 %v2117, %v2509
        %v2511 = vpop.f32.mrb[0].mxu0
        %2512 = vmatprep.mubr.f32.mxu0 0.0
        %2513 = vmatmul.mubr.f32.gmra.mrb[0].mxu0 %v1968
        %v2514 = vpop.f32.mrb[0].mxu0
        %v2515 = vadd.f32 %v2117, %v2514
        %v2516 = vpop.f32.mrb[0].mxu0
        %2517 = vmatprep.mubr.f32.mxu0 0.0
        %2518 = vmatmul.mubr.f32.gmra.mrb[0].mxu0 %v1973
        %v2519 = vpop.f32.mrb[0].mxu0
        %v2520 = vadd.f32 %v2117, %v2519
        %v2521 = vpop.f32.mrb[0].mxu0
        %2522 = vmatprep.mubr.f32.mxu0 0.0
        %2523 = vmatmul.mubr.f32.gmra.mrb[0].mxu0 %v1978
        %v2524 = vpop.f32.mrb[0].mxu0
        %v2525 = vadd.f32 %v2117, %v2524
        %v2526 = vpop.f32.mrb[0].mxu0
        %2527 = vmatprep.mubr.f32.mxu0 0.0
        %2528 = vmatmul.mubr.f32.gmra.mrb[0].mxu0 %v1983
        %v2529 = vpop.f32.mrb[0].mxu0
        %v2530 = vadd.f32 %v2117, %v2529
        %v2531 = vpop.f32.mrb[0].mxu0
        %2532 = vmatprep.mubr.f32.mxu0 0.0
        %2533 = vmatmul.mubr.f32.gmra.mrb[0].mxu0 %v1988
        %v2534 = vpop.f32.mrb[0].mxu0
        %v2535 = vadd.f32 %v2117, %v2534
        %v2536 = vpop.f32.mrb[0].mxu0
        %2537 = vmatprep.mubr.f32.mxu0 0.0
        %2538 = vmatmul.mubr.f32.gmra.mrb[0].mxu0 %v1993
        %v2539 = vpop.f32.mrb[0].mxu0
        %v2540 = vadd.f32 %v2117, %v2539
        %v2541 = vpop.f32.mrb[0].mxu0
        %2542 = vmatprep.mubr.f32.mxu0 0.0
        %2543 = vmatmul.mubr.f32.gmra.mrb[0].mxu0 %v1998
        %v2544 = vpop.f32.mrb[0].mxu0
        %v2545 = vadd.f32 %v2117, %v2544
        %v2546 = vpop.f32.mrb[0].mxu0
        %2547 = vmatprep.mubr.f32.mxu0 0.0
        %2548 = vmatmul.mubr.f32.gmra.mrb[0].mxu0 %v2003
        %v2549 = vpop.f32.mrb[0].mxu0
        %v2550 = vadd.f32 %v2117, %v2549
        %v2551 = vpop.f32.mrb[0].mxu0
        %2552 = vmatprep.mubr.f32.mxu0 0.0
        %2553 = vmatmul.mubr.f32.gmra.mrb[0].mxu0 %v2008
        %v2554 = vpop.f32.mrb[0].mxu0
        %v2555 = vadd.f32 %v2117, %v2554
        %v2556 = vpop.f32.mrb[0].mxu0
        %2557 = vmatprep.mubr.f32.mxu0 0.0
        %2558 = vmatmul.mubr.f32.gmra.mrb[0].mxu0 %v2013
        %v2559 = vpop.f32.mrb[0].mxu0
        %v2560 = vadd.f32 %v2117, %v2559
        %v2561 = vpop.f32.mrb[0].mxu0
        %2562 = vmatprep.mubr.f32.mxu0 0.0
        %2563 = vmatmul.mubr.f32.gmra.mrb[0].mxu0 %v2018
        %v2564 = vpop.f32.mrb[0].mxu0
        %v2565 = vadd.f32 %v2117, %v2564
        %v2566 = vpop.f32.mrb[0].mxu0
        %2567 = vmatprep.mubr.f32.mxu0 0.0
        %2568 = vmatmul.mubr.f32.gmra.mrb[0].mxu0 %v2023
        %v2569 = vpop.f32.mrb[0].mxu0
        %v2570 = vadd.f32 %v2117, %v2569
        %v2571 = vpop.f32.mrb[0].mxu0
        %2572 = vmatprep.mubr.f32.mxu0 0.0
        %2573 = vmatmul.mubr.f32.gmra.mrb[0].mxu0 %v2028
        %v2574 = vpop.f32.mrb[0].mxu0
        %v2575 = vadd.f32 %v2117, %v2574
        %v2576 = vpop.f32.mrb[0].mxu0
        %2577 = vmatprep.mubr.f32.mxu0 0.0
        %2578 = vmatmul.mubr.f32.gmra.mrb[0].mxu0 %v2033
        %v2579 = vpop.f32.mrb[0].mxu0
        %v2580 = vadd.f32 %v2117, %v2579
        %v2581 = vpop.f32.mrb[0].mxu0
        %2582 = vmatprep.mubr.f32.mxu0 0.0
        %2583 = vmatmul.mubr.f32.gmra.mrb[0].mxu0 %v2038
        %v2584 = vpop.f32.mrb[0].mxu0
        %v2585 = vadd.f32 %v2117, %v2584
        %v2586 = vpop.f32.mrb[0].mxu0
        %2587 = vmatprep.mubr.f32.mxu0 0.0
        %2588 = vmatmul.mubr.f32.gmra.mrb[0].mxu0 %v2043
        %v2589 = vpop.f32.mrb[0].mxu0
        %v2590 = vadd.f32 %v2117, %v2589
        %v2591 = vpop.f32.mrb[0].mxu0
        %2592 = vmatprep.mubr.f32.mxu0 0.0
        %2593 = vmatmul.mubr.f32.gmra.mrb[0].mxu0 %v2048
        %v2594 = vpop.f32.mrb[0].mxu0
        %v2595 = vadd.f32 %v2117, %v2594
        %v2596 = vpop.f32.mrb[0].mxu0
        %2597 = vmatprep.mubr.f32.mxu0 0.0
        %2598 = vmatmul.mubr.f32.gmra.mrb[0].mxu0 %v2053
        %v2599 = vpop.f32.mrb[0].mxu0
        %v2600 = vadd.f32 %v2117, %v2599
        %v2601 = vpop.f32.mrb[0].mxu0
        %2602 = vdwg.mxu0
        %2603 = vmatprep.subr.mxu0 0.0
        %2604 = vmatpush1.xpose.msra.mxu0 %v2190
        %2605 = vmatprep.subr.mxu0 0.0
        %2606 = vmatpush1.xpose.msra.mxu0 %v2196
        %2607 = vmatprep.subr.mxu0 0.0
        %2608 = vmatpush1.xpose.msra.mxu0 %v2202
        %2609 = vmatprep.subr.mxu0 0.0
        %2610 = vmatpush1.xpose.msra.mxu0 %v2208
        %2611 = vmatprep.subr.mxu0 0.0
        %2612 = vmatpush1.xpose.msra.mxu0 %v2214
        %2613 = vmatprep.subr.mxu0 0.0
        %2614 = vmatpush1.xpose.msra.mxu0 %v2220
        %2615 = vmatprep.subr.mxu0 0.0
        %2616 = vmatpush1.xpose.msra.mxu0 %v2226
        %2617 = vmatprep.subr.mxu0 0.0
        %2618 = vmatpush1.xpose.msra.mxu0 %v2232
        %2619 = vmatprep.subr.mxu0 0.0
        %2620 = vmatpush1.xpose.msra.mxu0 %v2238
        %2621 = vmatprep.subr.mxu0 0.0
        %2622 = vmatpush1.xpose.msra.mxu0 %v2244
        %2623 = vmatprep.subr.mxu0 0.0
        %2624 = vmatpush1.xpose.msra.mxu0 %v2250
        %2625 = vmatprep.subr.mxu0 0.0
        %2626 = vmatpush1.xpose.msra.mxu0 %v2256
        %2627 = vmatprep.subr.mxu0 0.0
        %2628 = vmatpush1.xpose.msra.mxu0 %v2262
        %2629 = vmatprep.subr.mxu0 0.0
        %2630 = vmatpush1.xpose.msra.mxu0 %v2268
        %2631 = vmatprep.subr.mxu0 0.0
        %2632 = vmatpush1.xpose.msra.mxu0 %v2274
        %2633 = vmatprep.subr.mxu0 0.0
        %2634 = vmatpush1.xpose.msra.mxu0 %v2280
        %2635 = vmatprep.subr.mxu0 0.0
        %2636 = vmatpush1.xpose.msra.mxu0 %v2286
        %2637 = vmatprep.subr.mxu0 0.0
        %2638 = vmatpush1.xpose.msra.mxu0 %v2292
        %2639 = vmatprep.subr.mxu0 0.0
        %2640 = vmatpush1.xpose.msra.mxu0 %v2298
        %2641 = vmatprep.subr.mxu0 0.0
        %2642 = vmatpush1.xpose.msra.mxu0 %v2304
        %2643 = vmatprep.subr.mxu0 0.0
        %2644 = vmatpush1.xpose.msra.mxu0 %v2310
        %2645 = vmatprep.subr.mxu0 0.0
        %2646 = vmatpush1.xpose.msra.mxu0 %v2316
        %2647 = vmatprep.subr.mxu0 0.0
        %2648 = vmatpush1.xpose.msra.mxu0 %v2322
        %2649 = vmatprep.subr.mxu0 0.0
        %2650 = vmatpush1.xpose.msra.mxu0 %v2328
        %2651 = vmatprep.subr.mxu0 0.0
        %2652 = vmatpush1.xpose.msra.mxu0 %v2334
        %2653 = vmatprep.subr.mxu0 0.0
        %2654 = vmatpush1.xpose.msra.mxu0 %v2340
        %2655 = vmatprep.subr.mxu0 0.0
        %2656 = vmatpush1.xpose.msra.mxu0 %v2346
        %2657 = vmatprep.subr.mxu0 0.0
        %2658 = vmatpush1.xpose.msra.mxu0 %v2352
        %2659 = vmatprep.subr.mxu0 0.0
        %2660 = vmatpush1.xpose.msra.mxu0 %v2358
        %2661 = vmatprep.subr.mxu0 0.0
        %2662 = vmatpush1.xpose.msra.mxu0 %v2364
        %2663 = vmatprep.subr.mxu0 0.0
        %2664 = vmatpush1.xpose.msra.mxu0 %v2370
        %2665 = vmatprep.subr.mxu0 0.0
        %2666 = vmatpush1.xpose.msra.mxu0 %v2376
        %2667 = vmatprep.mubr.f32.mxu0 0.0
        %2668 = vmatmul.mubr.f32.gmra.mrb[0].mxu0 %v2188
        %v2669 = vpop.f32.mrb[0].mxu0
        %v2670 = vadd.f32 0.0, %v2669
        %v2671 = vpop.f32.mrb[0].mxu0
        %v2672 = vadd.f32 0.0, %v2671
        %2673 = vmatprep.mubr.f32.mxu0 0.0
        %2674 = vmatmul.mubr.f32.gmra.mrb[0].mxu0 %v2194
        %v2675 = vpop.f32.mrb[0].mxu0
        %v2676 = vadd.f32 0.0, %v2675
        %v2677 = vpop.f32.mrb[0].mxu0
        %v2678 = vadd.f32 0.0, %v2677
        %2679 = vmatprep.mubr.f32.mxu0 0.0
        %2680 = vmatmul.mubr.f32.gmra.mrb[0].mxu0 %v2200
        %v2681 = vpop.f32.mrb[0].mxu0
        %v2682 = vadd.f32 0.0, %v2681
        %v2683 = vpop.f32.mrb[0].mxu0
        %v2684 = vadd.f32 0.0, %v2683
        %2685 = vmatprep.mubr.f32.mxu0 0.0
        %2686 = vmatmul.mubr.f32.gmra.mrb[0].mxu0 %v2206
        %v2687 = vpop.f32.mrb[0].mxu0
        %v2688 = vadd.f32 0.0, %v2687
        %v2689 = vpop.f32.mrb[0].mxu0
        %v2690 = vadd.f32 0.0, %v2689
        %2691 = vmatprep.mubr.f32.mxu0 0.0
        %2692 = vmatmul.mubr.f32.gmra.mrb[0].mxu0 %v2212
        %v2693 = vpop.f32.mrb[0].mxu0
        %v2694 = vadd.f32 0.0, %v2693
        %v2695 = vpop.f32.mrb[0].mxu0
        %v2696 = vadd.f32 0.0, %v2695
        %2697 = vmatprep.mubr.f32.mxu0 0.0
        %2698 = vmatmul.mubr.f32.gmra.mrb[0].mxu0 %v2218
        %v2699 = vpop.f32.mrb[0].mxu0
        %v2700 = vadd.f32 0.0, %v2699
        %v2701 = vpop.f32.mrb[0].mxu0
        %v2702 = vadd.f32 0.0, %v2701
        %2703 = vmatprep.mubr.f32.mxu0 0.0
        %2704 = vmatmul.mubr.f32.gmra.mrb[0].mxu0 %v2224
        %v2705 = vpop.f32.mrb[0].mxu0
        %v2706 = vadd.f32 0.0, %v2705
        %v2707 = vpop.f32.mrb[0].mxu0
        %v2708 = vadd.f32 0.0, %v2707
        %2709 = vmatprep.mubr.f32.mxu0 0.0
        %2710 = vmatmul.mubr.f32.gmra.mrb[0].mxu0 %v2230
        %v2711 = vpop.f32.mrb[0].mxu0
        %v2712 = vadd.f32 0.0, %v2711
        %v2713 = vpop.f32.mrb[0].mxu0
        %v2714 = vadd.f32 0.0, %v2713
        %2715 = vmatprep.mubr.f32.mxu0 0.0
        %2716 = vmatmul.mubr.f32.gmra.mrb[0].mxu0 %v2236
        %v2717 = vpop.f32.mrb[0].mxu0
        %v2718 = vadd.f32 0.0, %v2717
        %v2719 = vpop.f32.mrb[0].mxu0
        %v2720 = vadd.f32 0.0, %v2719
        %2721 = vmatprep.mubr.f32.mxu0 0.0
        %2722 = vmatmul.mubr.f32.gmra.mrb[0].mxu0 %v2242
        %v2723 = vpop.f32.mrb[0].mxu0
        %v2724 = vadd.f32 0.0, %v2723
        %v2725 = vpop.f32.mrb[0].mxu0
        %v2726 = vadd.f32 0.0, %v2725
        %2727 = vmatprep.mubr.f32.mxu0 0.0
        %2728 = vmatmul.mubr.f32.gmra.mrb[0].mxu0 %v2248
        %v2729 = vpop.f32.mrb[0].mxu0
        %v2730 = vadd.f32 0.0, %v2729
        %v2731 = vpop.f32.mrb[0].mxu0
        %v2732 = vadd.f32 0.0, %v2731
        %2733 = vmatprep.mubr.f32.mxu0 0.0
        %2734 = vmatmul.mubr.f32.gmra.mrb[0].mxu0 %v2254
        %v2735 = vpop.f32.mrb[0].mxu0
        %v2736 = vadd.f32 0.0, %v2735
        %v2737 = vpop.f32.mrb[0].mxu0
        %v2738 = vadd.f32 0.0, %v2737
        %2739 = vmatprep.mubr.f32.mxu0 0.0
        %2740 = vmatmul.mubr.f32.gmra.mrb[0].mxu0 %v2260
        %v2741 = vpop.f32.mrb[0].mxu0
        %v2742 = vadd.f32 0.0, %v2741
        %v2743 = vpop.f32.mrb[0].mxu0
        %v2744 = vadd.f32 0.0, %v2743
        %2745 = vmatprep.mubr.f32.mxu0 0.0
        %2746 = vmatmul.mubr.f32.gmra.mrb[0].mxu0 %v2266
        %v2747 = vpop.f32.mrb[0].mxu0
        %v2748 = vadd.f32 0.0, %v2747
        %v2749 = vpop.f32.mrb[0].mxu0
        %v2750 = vadd.f32 0.0, %v2749
        %2751 = vmatprep.mubr.f32.mxu0 0.0
        %2752 = vmatmul.mubr.f32.gmra.mrb[0].mxu0 %v2272
        %v2753 = vpop.f32.mrb[0].mxu0
        %v2754 = vadd.f32 0.0, %v2753
        %v2755 = vpop.f32.mrb[0].mxu0
        %v2756 = vadd.f32 0.0, %v2755
        %2757 = vmatprep.mubr.f32.mxu0 0.0
        %2758 = vmatmul.mubr.f32.gmra.mrb[0].mxu0 %v2278
        %v2759 = vpop.f32.mrb[0].mxu0
        %v2760 = vadd.f32 0.0, %v2759
        %v2761 = vpop.f32.mrb[0].mxu0
        %v2762 = vadd.f32 0.0, %v2761
        %2763 = vmatprep.mubr.f32.mxu0 0.0
        %2764 = vmatmul.mubr.f32.gmra.mrb[0].mxu0 %v2284
        %v2765 = vpop.f32.mrb[0].mxu0
        %v2766 = vadd.f32 0.0, %v2765
        %v2767 = vpop.f32.mrb[0].mxu0
        %v2768 = vadd.f32 0.0, %v2767
        %2769 = vmatprep.mubr.f32.mxu0 0.0
        %2770 = vmatmul.mubr.f32.gmra.mrb[0].mxu0 %v2290
        %v2771 = vpop.f32.mrb[0].mxu0
        %v2772 = vadd.f32 0.0, %v2771
        %v2773 = vpop.f32.mrb[0].mxu0
        %v2774 = vadd.f32 0.0, %v2773
        %2775 = vmatprep.mubr.f32.mxu0 0.0
        %2776 = vmatmul.mubr.f32.gmra.mrb[0].mxu0 %v2296
        %v2777 = vpop.f32.mrb[0].mxu0
        %v2778 = vadd.f32 0.0, %v2777
        %v2779 = vpop.f32.mrb[0].mxu0
        %v2780 = vadd.f32 0.0, %v2779
        %2781 = vmatprep.mubr.f32.mxu0 0.0
        %2782 = vmatmul.mubr.f32.gmra.mrb[0].mxu0 %v2302
        %v2783 = vpop.f32.mrb[0].mxu0
        %v2784 = vadd.f32 0.0, %v2783
        %v2785 = vpop.f32.mrb[0].mxu0
        %v2786 = vadd.f32 0.0, %v2785
        %2787 = vmatprep.mubr.f32.mxu0 0.0
        %2788 = vmatmul.mubr.f32.gmra.mrb[0].mxu0 %v2308
        %v2789 = vpop.f32.mrb[0].mxu0
        %v2790 = vadd.f32 0.0, %v2789
        %v2791 = vpop.f32.mrb[0].mxu0
        %v2792 = vadd.f32 0.0, %v2791
        %2793 = vmatprep.mubr.f32.mxu0 0.0
        %2794 = vmatmul.mubr.f32.gmra.mrb[0].mxu0 %v2314
        %v2795 = vpop.f32.mrb[0].mxu0
        %v2796 = vadd.f32 0.0, %v2795
        %v2797 = vpop.f32.mrb[0].mxu0
        %v2798 = vadd.f32 0.0, %v2797
        %2799 = vmatprep.mubr.f32.mxu0 0.0
        %2800 = vmatmul.mubr.f32.gmra.mrb[0].mxu0 %v2320
        %v2801 = vpop.f32.mrb[0].mxu0
        %v2802 = vadd.f32 0.0, %v2801
        %v2803 = vpop.f32.mrb[0].mxu0
        %v2804 = vadd.f32 0.0, %v2803
        %2805 = vmatprep.mubr.f32.mxu0 0.0
        %2806 = vmatmul.mubr.f32.gmra.mrb[0].mxu0 %v2326
        %v2807 = vpop.f32.mrb[0].mxu0
        %v2808 = vadd.f32 0.0, %v2807
        %v2809 = vpop.f32.mrb[0].mxu0
        %v2810 = vadd.f32 0.0, %v2809
        %2811 = vmatprep.mubr.f32.mxu0 0.0
        %2812 = vmatmul.mubr.f32.gmra.mrb[0].mxu0 %v2332
        %v2813 = vpop.f32.mrb[0].mxu0
        %v2814 = vadd.f32 0.0, %v2813
        %v2815 = vpop.f32.mrb[0].mxu0
        %v2816 = vadd.f32 0.0, %v2815
        %2817 = vmatprep.mubr.f32.mxu0 0.0
        %2818 = vmatmul.mubr.f32.gmra.mrb[0].mxu0 %v2338
        %v2819 = vpop.f32.mrb[0].mxu0
        %v2820 = vadd.f32 0.0, %v2819
        %v2821 = vpop.f32.mrb[0].mxu0
        %v2822 = vadd.f32 0.0, %v2821
        %2823 = vmatprep.mubr.f32.mxu0 0.0
        %2824 = vmatmul.mubr.f32.gmra.mrb[0].mxu0 %v2344
        %v2825 = vpop.f32.mrb[0].mxu0
        %v2826 = vadd.f32 0.0, %v2825
        %v2827 = vpop.f32.mrb[0].mxu0
        %v2828 = vadd.f32 0.0, %v2827
        %2829 = vmatprep.mubr.f32.mxu0 0.0
        %2830 = vmatmul.mubr.f32.gmra.mrb[0].mxu0 %v2350
        %v2831 = vpop.f32.mrb[0].mxu0
        %v2832 = vadd.f32 0.0, %v2831
        %v2833 = vpop.f32.mrb[0].mxu0
        %v2834 = vadd.f32 0.0, %v2833
        %2835 = vmatprep.mubr.f32.mxu0 0.0
        %2836 = vmatmul.mubr.f32.gmra.mrb[0].mxu0 %v2356
        %v2837 = vpop.f32.mrb[0].mxu0
        %v2838 = vadd.f32 0.0, %v2837
        %v2839 = vpop.f32.mrb[0].mxu0
        %v2840 = vadd.f32 0.0, %v2839
        %2841 = vmatprep.mubr.f32.mxu0 0.0
        %2842 = vmatmul.mubr.f32.gmra.mrb[0].mxu0 %v2362
        %v2843 = vpop.f32.mrb[0].mxu0
        %v2844 = vadd.f32 0.0, %v2843
        %v2845 = vpop.f32.mrb[0].mxu0
        %v2846 = vadd.f32 0.0, %v2845
        %2847 = vmatprep.mubr.f32.mxu0 0.0
        %2848 = vmatmul.mubr.f32.gmra.mrb[0].mxu0 %v2368
        %v2849 = vpop.f32.mrb[0].mxu0
        %v2850 = vadd.f32 0.0, %v2849
        %v2851 = vpop.f32.mrb[0].mxu0
        %v2852 = vadd.f32 0.0, %v2851
        %2853 = vmatprep.mubr.f32.mxu0 0.0
        %2854 = vmatmul.mubr.f32.gmra.mrb[0].mxu0 %v2374
        %v2855 = vpop.f32.mrb[0].mxu0
        %v2856 = vadd.f32 0.0, %v2855
        %v2857 = vpop.f32.mrb[0].mxu0
        %v2858 = vadd.f32 0.0, %v2857
        %2859 = vdwg.mxu0
        %v2860 = vmul.f32 %v2670, 0.17677669
        %v2861 = vmul.f32 %v2672, 0.17677669
        %v2862 = vmul.f32 %v2676, 0.17677669
        %v2863 = vmul.f32 %v2678, 0.17677669
        %v2864 = vmul.f32 %v2682, 0.17677669
        %v2865 = vmul.f32 %v2684, 0.17677669
        %v2866 = vmul.f32 %v2688, 0.17677669
        %v2867 = vmul.f32 %v2690, 0.17677669
        %v2868 = vmul.f32 %v2694, 0.17677669
        %v2869 = vmul.f32 %v2696, 0.17677669
        %v2870 = vmul.f32 %v2700, 0.17677669
        %v2871 = vmul.f32 %v2702, 0.17677669
        %v2872 = vmul.f32 %v2706, 0.17677669
        %v2873 = vmul.f32 %v2708, 0.17677669
        %v2874 = vmul.f32 %v2712, 0.17677669
        %v2875 = vmul.f32 %v2714, 0.17677669
        %v2876 = vmul.f32 %v2718, 0.17677669
        %v2877 = vmul.f32 %v2720, 0.17677669
        %v2878 = vmul.f32 %v2724, 0.17677669
        %v2879 = vmul.f32 %v2726, 0.17677669
        %v2880 = vmul.f32 %v2730, 0.17677669
        %v2881 = vmul.f32 %v2732, 0.17677669
        %v2882 = vmul.f32 %v2736, 0.17677669
        %v2883 = vmul.f32 %v2738, 0.17677669
        %v2884 = vmul.f32 %v2742, 0.17677669
        %v2885 = vmul.f32 %v2744, 0.17677669
        %v2886 = vmul.f32 %v2748, 0.17677669
        %v2887 = vmul.f32 %v2750, 0.17677669
        %v2888 = vmul.f32 %v2754, 0.17677669
        %v2889 = vmul.f32 %v2756, 0.17677669
        %v2890 = vmul.f32 %v2760, 0.17677669
        %v2891 = vmul.f32 %v2762, 0.17677669
        %v2892 = vmul.f32 %v2766, 0.17677669
        %v2893 = vmul.f32 %v2768, 0.17677669
        %v2894 = vmul.f32 %v2772, 0.17677669
        %v2895 = vmul.f32 %v2774, 0.17677669
        %v2896 = vmul.f32 %v2778, 0.17677669
        %v2897 = vmul.f32 %v2780, 0.17677669
        %v2898 = vmul.f32 %v2784, 0.17677669
        %v2899 = vmul.f32 %v2786, 0.17677669
        %v2900 = vmul.f32 %v2790, 0.17677669
        %v2901 = vmul.f32 %v2792, 0.17677669
        %v2902 = vmul.f32 %v2796, 0.17677669
        %v2903 = vmul.f32 %v2798, 0.17677669
        %v2904 = vmul.f32 %v2802, 0.17677669
        %v2905 = vmul.f32 %v2804, 0.17677669
        %v2906 = vmul.f32 %v2808, 0.17677669
        %v2907 = vmul.f32 %v2810, 0.17677669
        %v2908 = vmul.f32 %v2814, 0.17677669
        %v2909 = vmul.f32 %v2816, 0.17677669
        %v2910 = vmul.f32 %v2820, 0.17677669
        %v2911 = vmul.f32 %v2822, 0.17677669
        %v2912 = vmul.f32 %v2826, 0.17677669
        %v2913 = vmul.f32 %v2828, 0.17677669
        %v2914 = vmul.f32 %v2832, 0.17677669
        %v2915 = vmul.f32 %v2834, 0.17677669
        %v2916 = vmul.f32 %v2838, 0.17677669
        %v2917 = vmul.f32 %v2840, 0.17677669
        %v2918 = vmul.f32 %v2844, 0.17677669
        %v2919 = vmul.f32 %v2846, 0.17677669
        %v2920 = vmul.f32 %v2850, 0.17677669
        %v2921 = vmul.f32 %v2852, 0.17677669
        %v2922 = vmul.f32 %v2856, 0.17677669
        %v2923 = vmul.f32 %v2858, 0.17677669
        %v2924 = vadd.f32 %v2860, %v268
        %v2925 = vadd.f32 %v2861, %v269
        %v2926 = vadd.f32 %v2862, %v270
        %v2927 = vadd.f32 %v2863, %v271
        %v2928 = vadd.f32 %v2864, %v272
        %v2929 = vadd.f32 %v2865, %v273
        %v2930 = vadd.f32 %v2866, %v274
        %v2931 = vadd.f32 %v2867, %v275
        %v2932 = vadd.f32 %v2868, %v276
        %v2933 = vadd.f32 %v2869, %v277
        %v2934 = vadd.f32 %v2870, %v278
        %v2935 = vadd.f32 %v2871, %v279
        %v2936 = vadd.f32 %v2872, %v280
        %v2937 = vadd.f32 %v2873, %v281
        %v2938 = vadd.f32 %v2874, %v282
        %v2939 = vadd.f32 %v2875, %v283
        %v2940 = vadd.f32 %v2876, %v284
        %v2941 = vadd.f32 %v2877, %v285
        %v2942 = vadd.f32 %v2878, %v286
        %v2943 = vadd.f32 %v2879, %v287
        %v2944 = vadd.f32 %v2880, %v288
        %v2945 = vadd.f32 %v2881, %v289
        %v2946 = vadd.f32 %v2882, %v290
        %v2947 = vadd.f32 %v2883, %v291
        %v2948 = vadd.f32 %v2884, %v292
        %v2949 = vadd.f32 %v2885, %v293
        %v2950 = vadd.f32 %v2886, %v294
        %v2951 = vadd.f32 %v2887, %v295
        %v2952 = vadd.f32 %v2888, %v296
        %v2953 = vadd.f32 %v2889, %v297
        %v2954 = vadd.f32 %v2890, %v298
        %v2955 = vadd.f32 %v2891, %v299
        %v2956 = vadd.f32 %v2892, %v300
        %v2957 = vadd.f32 %v2893, %v301
        %v2958 = vadd.f32 %v2894, %v302
        %v2959 = vadd.f32 %v2895, %v303
        %v2960 = vadd.f32 %v2896, %v304
        %v2961 = vadd.f32 %v2897, %v305
        %v2962 = vadd.f32 %v2898, %v306
        %v2963 = vadd.f32 %v2899, %v307
        %v2964 = vadd.f32 %v2900, %v308
        %v2965 = vadd.f32 %v2901, %v309
        %v2966 = vadd.f32 %v2902, %v310
        %v2967 = vadd.f32 %v2903, %v311
        %v2968 = vadd.f32 %v2904, %v312
        %v2969 = vadd.f32 %v2905, %v313
        %v2970 = vadd.f32 %v2906, %v314
        %v2971 = vadd.f32 %v2907, %v315
        %v2972 = vadd.f32 %v2908, %v316
        %v2973 = vadd.f32 %v2909, %v317
        %v2974 = vadd.f32 %v2910, %v318
        %v2975 = vadd.f32 %v2911, %v319
        %v2976 = vadd.f32 %v2912, %v320
        %v2977 = vadd.f32 %v2913, %v321
        %v2978 = vadd.f32 %v2914, %v322
        %v2979 = vadd.f32 %v2915, %v323
        %v2980 = vadd.f32 %v2916, %v324
        %v2981 = vadd.f32 %v2917, %v325
        %v2982 = vadd.f32 %v2918, %v326
        %v2983 = vadd.f32 %v2919, %v327
        %v2984 = vadd.f32 %v2920, %v328
        %v2985 = vadd.f32 %v2921, %v329
        %v2986 = vadd.f32 %v2922, %v330
        %v2987 = vadd.f32 %v2923, %v331
        %v2988 = vmax.f32 %v2924, %v2925
        %2989 = vmax.xlane.f32.xlu0 %v2988
        %v2990 = vpop.xlane.xlu0 %2989
        %v2991 = vmax.f32 %v2926, %v2927
        %2992 = vmax.xlane.f32.xlu0 %v2991
        %v2993 = vpop.xlane.xlu0 %2992
        %v2994 = vmax.f32 %v2928, %v2929
        %2995 = vmax.xlane.f32.xlu0 %v2994
        %v2996 = vpop.xlane.xlu0 %2995
        %v2997 = vmax.f32 %v2930, %v2931
        %2998 = vmax.xlane.f32.xlu0 %v2997
        %v2999 = vpop.xlane.xlu0 %2998
        %v3000 = vmax.f32 %v2932, %v2933
        %3001 = vmax.xlane.f32.xlu0 %v3000
        %v3002 = vpop.xlane.xlu0 %3001
        %v3003 = vmax.f32 %v2934, %v2935
        %3004 = vmax.xlane.f32.xlu0 %v3003
        %v3005 = vpop.xlane.xlu0 %3004
        %v3006 = vmax.f32 %v2936, %v2937
        %3007 = vmax.xlane.f32.xlu0 %v3006
        %v3008 = vpop.xlane.xlu0 %3007
        %v3009 = vmax.f32 %v2938, %v2939
        %3010 = vmax.xlane.f32.xlu0 %v3009
        %v3011 = vpop.xlane.xlu0 %3010
        %v3012 = vmax.f32 %v2940, %v2941
        %3013 = vmax.xlane.f32.xlu0 %v3012
        %v3014 = vpop.xlane.xlu0 %3013
        %v3015 = vmax.f32 %v2942, %v2943
        %3016 = vmax.xlane.f32.xlu0 %v3015
        %v3017 = vpop.xlane.xlu0 %3016
        %v3018 = vmax.f32 %v2944, %v2945
        %3019 = vmax.xlane.f32.xlu0 %v3018
        %v3020 = vpop.xlane.xlu0 %3019
        %v3021 = vmax.f32 %v2946, %v2947
        %3022 = vmax.xlane.f32.xlu0 %v3021
        %v3023 = vpop.xlane.xlu0 %3022
        %v3024 = vmax.f32 %v2948, %v2949
        %3025 = vmax.xlane.f32.xlu0 %v3024
        %v3026 = vpop.xlane.xlu0 %3025
        %v3027 = vmax.f32 %v2950, %v2951
        %3028 = vmax.xlane.f32.xlu0 %v3027
        %v3029 = vpop.xlane.xlu0 %3028
        %v3030 = vmax.f32 %v2952, %v2953
        %3031 = vmax.xlane.f32.xlu0 %v3030
        %v3032 = vpop.xlane.xlu0 %3031
        %v3033 = vmax.f32 %v2954, %v2955
        %3034 = vmax.xlane.f32.xlu0 %v3033
        %v3035 = vpop.xlane.xlu0 %3034
        %v3036 = vmax.f32 %v2956, %v2957
        %3037 = vmax.xlane.f32.xlu0 %v3036
        %v3038 = vpop.xlane.xlu0 %3037
        %v3039 = vmax.f32 %v2958, %v2959
        %3040 = vmax.xlane.f32.xlu0 %v3039
        %v3041 = vpop.xlane.xlu0 %3040
        %v3042 = vmax.f32 %v2960, %v2961
        %3043 = vmax.xlane.f32.xlu0 %v3042
        %v3044 = vpop.xlane.xlu0 %3043
        %v3045 = vmax.f32 %v2962, %v2963
        %3046 = vmax.xlane.f32.xlu0 %v3045
        %v3047 = vpop.xlane.xlu0 %3046
        %v3048 = vmax.f32 %v2964, %v2965
        %3049 = vmax.xlane.f32.xlu0 %v3048
        %v3050 = vpop.xlane.xlu0 %3049
        %v3051 = vmax.f32 %v2966, %v2967
        %3052 = vmax.xlane.f32.xlu0 %v3051
        %v3053 = vpop.xlane.xlu0 %3052
        %v3054 = vmax.f32 %v2968, %v2969
        %3055 = vmax.xlane.f32.xlu0 %v3054
        %v3056 = vpop.xlane.xlu0 %3055
        %v3057 = vmax.f32 %v2970, %v2971
        %3058 = vmax.xlane.f32.xlu0 %v3057
        %v3059 = vpop.xlane.xlu0 %3058
        %v3060 = vmax.f32 %v2972, %v2973
        %3061 = vmax.xlane.f32.xlu0 %v3060
        %v3062 = vpop.xlane.xlu0 %3061
        %v3063 = vmax.f32 %v2974, %v2975
        %3064 = vmax.xlane.f32.xlu0 %v3063
        %v3065 = vpop.xlane.xlu0 %3064
        %v3066 = vmax.f32 %v2976, %v2977
        %3067 = vmax.xlane.f32.xlu0 %v3066
        %v3068 = vpop.xlane.xlu0 %3067
        %v3069 = vmax.f32 %v2978, %v2979
        %3070 = vmax.xlane.f32.xlu0 %v3069
        %v3071 = vpop.xlane.xlu0 %3070
        %v3072 = vmax.f32 %v2980, %v2981
        %3073 = vmax.xlane.f32.xlu0 %v3072
        %v3074 = vpop.xlane.xlu0 %3073
        %v3075 = vmax.f32 %v2982, %v2983
        %3076 = vmax.xlane.f32.xlu0 %v3075
        %v3077 = vpop.xlane.xlu0 %3076
        %v3078 = vmax.f32 %v2984, %v2985
        %3079 = vmax.xlane.f32.xlu0 %v3078
        %v3080 = vpop.xlane.xlu0 %3079
        %v3081 = vmax.f32 %v2986, %v2987
        %3082 = vmax.xlane.f32.xlu0 %v3081
        %v3083 = vpop.xlane.xlu0 %3082
        %v3084 = vsub.f32 %v2924, %v2990
        %v3085 = vsub.f32 %v2925, %v2990
        %v3086 = vsub.f32 %v2926, %v2993
        %v3087 = vsub.f32 %v2927, %v2993
        %v3088 = vsub.f32 %v2928, %v2996
        %v3089 = vsub.f32 %v2929, %v2996
        %v3090 = vsub.f32 %v2930, %v2999
        %v3091 = vsub.f32 %v2931, %v2999
        %v3092 = vsub.f32 %v2932, %v3002
        %v3093 = vsub.f32 %v2933, %v3002
        %v3094 = vsub.f32 %v2934, %v3005
        %v3095 = vsub.f32 %v2935, %v3005
        %v3096 = vsub.f32 %v2936, %v3008
        %v3097 = vsub.f32 %v2937, %v3008
        %v3098 = vsub.f32 %v2938, %v3011
        %v3099 = vsub.f32 %v2939, %v3011
        %v3100 = vsub.f32 %v2940, %v3014
        %v3101 = vsub.f32 %v2941, %v3014
        %v3102 = vsub.f32 %v2942, %v3017
        %v3103 = vsub.f32 %v2943, %v3017
        %v3104 = vsub.f32 %v2944, %v3020
        %v3105 = vsub.f32 %v2945, %v3020
        %v3106 = vsub.f32 %v2946, %v3023
        %v3107 = vsub.f32 %v2947, %v3023
        %v3108 = vsub.f32 %v2948, %v3026
        %v3109 = vsub.f32 %v2949, %v3026
        %v3110 = vsub.f32 %v2950, %v3029
        %v3111 = vsub.f32 %v2951, %v3029
        %v3112 = vsub.f32 %v2952, %v3032
        %v3113 = vsub.f32 %v2953, %v3032
        %v3114 = vsub.f32 %v2954, %v3035
        %v3115 = vsub.f32 %v2955, %v3035
        %v3116 = vsub.f32 %v2956, %v3038
        %v3117 = vsub.f32 %v2957, %v3038
        %v3118 = vsub.f32 %v2958, %v3041
        %v3119 = vsub.f32 %v2959, %v3041
        %v3120 = vsub.f32 %v2960, %v3044
        %v3121 = vsub.f32 %v2961, %v3044
        %v3122 = vsub.f32 %v2962, %v3047
        %v3123 = vsub.f32 %v2963, %v3047
        %v3124 = vsub.f32 %v2964, %v3050
        %v3125 = vsub.f32 %v2965, %v3050
        %v3126 = vsub.f32 %v2966, %v3053
        %v3127 = vsub.f32 %v2967, %v3053
        %v3128 = vsub.f32 %v2968, %v3056
        %v3129 = vsub.f32 %v2969, %v3056
        %v3130 = vsub.f32 %v2970, %v3059
        %v3131 = vsub.f32 %v2971, %v3059
        %v3132 = vsub.f32 %v2972, %v3062
        %v3133 = vsub.f32 %v2973, %v3062
        %v3134 = vsub.f32 %v2974, %v3065
        %v3135 = vsub.f32 %v2975, %v3065
        %v3136 = vsub.f32 %v2976, %v3068
        %v3137 = vsub.f32 %v2977, %v3068
        %v3138 = vsub.f32 %v2978, %v3071
        %v3139 = vsub.f32 %v2979, %v3071
        %v3140 = vsub.f32 %v2980, %v3074
        %v3141 = vsub.f32 %v2981, %v3074
        %v3142 = vsub.f32 %v2982, %v3077
        %v3143 = vsub.f32 %v2983, %v3077
        %v3144 = vsub.f32 %v2984, %v3080
        %v3145 = vsub.f32 %v2985, %v3080
        %v3146 = vsub.f32 %v2986, %v3083
        %v3147 = vsub.f32 %v2987, %v3083
        %v3148 = vmul.f32 %v3084, 1.442695
        %v3149 = vpow.pop %v3148
        %v3150 = vmul.f32 %v3085, 1.442695
        %v3151 = vpow.pop %v3150
        %v3152 = vmul.f32 %v3086, 1.442695
        %v3153 = vpow.pop %v3152
        %v3154 = vmul.f32 %v3087, 1.442695
        %v3155 = vpow.pop %v3154
        %v3156 = vmul.f32 %v3088, 1.442695
        %v3157 = vpow.pop %v3156
        %v3158 = vmul.f32 %v3089, 1.442695
        %v3159 = vpow.pop %v3158
        %v3160 = vmul.f32 %v3090, 1.442695
        %v3161 = vpow.pop %v3160
        %v3162 = vmul.f32 %v3091, 1.442695
        %v3163 = vpow.pop %v3162
        %v3164 = vmul.f32 %v3092, 1.442695
        %v3165 = vpow.pop %v3164
        %v3166 = vmul.f32 %v3093, 1.442695
        %v3167 = vpow.pop %v3166
        %v3168 = vmul.f32 %v3094, 1.442695
        %v3169 = vpow.pop %v3168
        %v3170 = vmul.f32 %v3095, 1.442695
        %v3171 = vpow.pop %v3170
        %v3172 = vmul.f32 %v3096, 1.442695
        %v3173 = vpow.pop %v3172
        %v3174 = vmul.f32 %v3097, 1.442695
        %v3175 = vpow.pop %v3174
        %v3176 = vmul.f32 %v3098, 1.442695
        %v3177 = vpow.pop %v3176
        %v3178 = vmul.f32 %v3099, 1.442695
        %v3179 = vpow.pop %v3178
        %v3180 = vmul.f32 %v3100, 1.442695
        %v3181 = vpow.pop %v3180
        %v3182 = vmul.f32 %v3101, 1.442695
        %v3183 = vpow.pop %v3182
        %v3184 = vmul.f32 %v3102, 1.442695
        %v3185 = vpow.pop %v3184
        %v3186 = vmul.f32 %v3103, 1.442695
        %v3187 = vpow.pop %v3186
        %v3188 = vmul.f32 %v3104, 1.442695
        %v3189 = vpow.pop %v3188
        %v3190 = vmul.f32 %v3105, 1.442695
        %v3191 = vpow.pop %v3190
        %v3192 = vmul.f32 %v3106, 1.442695
        %v3193 = vpow.pop %v3192
        %v3194 = vmul.f32 %v3107, 1.442695
        %v3195 = vpow.pop %v3194
        %v3196 = vmul.f32 %v3108, 1.442695
        %v3197 = vpow.pop %v3196
        %v3198 = vmul.f32 %v3109, 1.442695
        %v3199 = vpow.pop %v3198
        %v3200 = vmul.f32 %v3110, 1.442695
        %v3201 = vpow.pop %v3200
        %v3202 = vmul.f32 %v3111, 1.442695
        %v3203 = vpow.pop %v3202
        %v3204 = vmul.f32 %v3112, 1.442695
        %v3205 = vpow.pop %v3204
        %v3206 = vmul.f32 %v3113, 1.442695
        %v3207 = vpow.pop %v3206
        %v3208 = vmul.f32 %v3114, 1.442695
        %v3209 = vpow.pop %v3208
        %v3210 = vmul.f32 %v3115, 1.442695
        %v3211 = vpow.pop %v3210
        %v3212 = vmul.f32 %v3116, 1.442695
        %v3213 = vpow.pop %v3212
        %v3214 = vmul.f32 %v3117, 1.442695
        %v3215 = vpow.pop %v3214
        %v3216 = vmul.f32 %v3118, 1.442695
        %v3217 = vpow.pop %v3216
        %v3218 = vmul.f32 %v3119, 1.442695
        %v3219 = vpow.pop %v3218
        %v3220 = vmul.f32 %v3120, 1.442695
        %v3221 = vpow.pop %v3220
        %v3222 = vmul.f32 %v3121, 1.442695
        %v3223 = vpow.pop %v3222
        %v3224 = vmul.f32 %v3122, 1.442695
        %v3225 = vpow.pop %v3224
        %v3226 = vmul.f32 %v3123, 1.442695
        %v3227 = vpow.pop %v3226
        %v3228 = vmul.f32 %v3124, 1.442695
        %v3229 = vpow.pop %v3228
        %v3230 = vmul.f32 %v3125, 1.442695
        %v3231 = vpow.pop %v3230
        %v3232 = vmul.f32 %v3126, 1.442695
        %v3233 = vpow.pop %v3232
        %v3234 = vmul.f32 %v3127, 1.442695
        %v3235 = vpow.pop %v3234
        %v3236 = vmul.f32 %v3128, 1.442695
        %v3237 = vpow.pop %v3236
        %v3238 = vmul.f32 %v3129, 1.442695
        %v3239 = vpow.pop %v3238
        %v3240 = vmul.f32 %v3130, 1.442695
        %v3241 = vpow.pop %v3240
        %v3242 = vmul.f32 %v3131, 1.442695
        %v3243 = vpow.pop %v3242
        %v3244 = vmul.f32 %v3132, 1.442695
        %v3245 = vpow.pop %v3244
        %v3246 = vmul.f32 %v3133, 1.442695
        %v3247 = vpow.pop %v3246
        %v3248 = vmul.f32 %v3134, 1.442695
        %v3249 = vpow.pop %v3248
        %v3250 = vmul.f32 %v3135, 1.442695
        %v3251 = vpow.pop %v3250
        %v3252 = vmul.f32 %v3136, 1.442695
        %v3253 = vpow.pop %v3252
        %v3254 = vmul.f32 %v3137, 1.442695
        %v3255 = vpow.pop %v3254
        %v3256 = vmul.f32 %v3138, 1.442695
        %v3257 = vpow.pop %v3256
        %v3258 = vmul.f32 %v3139, 1.442695
        %v3259 = vpow.pop %v3258
        %v3260 = vmul.f32 %v3140, 1.442695
        %v3261 = vpow.pop %v3260
        %v3262 = vmul.f32 %v3141, 1.442695
        %v3263 = vpow.pop %v3262
        %v3264 = vmul.f32 %v3142, 1.442695
        %v3265 = vpow.pop %v3264
        %v3266 = vmul.f32 %v3143, 1.442695
        %v3267 = vpow.pop %v3266
        %v3268 = vmul.f32 %v3144, 1.442695
        %v3269 = vpow.pop %v3268
        %v3270 = vmul.f32 %v3145, 1.442695
        %v3271 = vpow.pop %v3270
        %v3272 = vmul.f32 %v3146, 1.442695
        %v3273 = vpow.pop %v3272
        %v3274 = vmul.f32 %v3147, 1.442695
        %v3275 = vpow.pop %v3274
        %v3276 = vadd.f32 %v3149, %v3151
        %3277 = vadd.xlane.f32.xlu0 %v3276
        %v3278 = vpop.xlane.xlu0 %3277
        %v3279 = vadd.f32 %v3153, %v3155
        %3280 = vadd.xlane.f32.xlu0 %v3279
        %v3281 = vpop.xlane.xlu0 %3280
        %v3282 = vadd.f32 %v3157, %v3159
        %3283 = vadd.xlane.f32.xlu0 %v3282
        %v3284 = vpop.xlane.xlu0 %3283
        %v3285 = vadd.f32 %v3161, %v3163
        %3286 = vadd.xlane.f32.xlu0 %v3285
        %v3287 = vpop.xlane.xlu0 %3286
        %v3288 = vadd.f32 %v3165, %v3167
        %3289 = vadd.xlane.f32.xlu0 %v3288
        %v3290 = vpop.xlane.xlu0 %3289
        %v3291 = vadd.f32 %v3169, %v3171
        %3292 = vadd.xlane.f32.xlu0 %v3291
        %v3293 = vpop.xlane.xlu0 %3292
        %v3294 = vadd.f32 %v3173, %v3175
        %3295 = vadd.xlane.f32.xlu0 %v3294
        %v3296 = vpop.xlane.xlu0 %3295
        %v3297 = vadd.f32 %v3177, %v3179
        %3298 = vadd.xlane.f32.xlu0 %v3297
        %v3299 = vpop.xlane.xlu0 %3298
        %v3300 = vadd.f32 %v3181, %v3183
        %3301 = vadd.xlane.f32.xlu0 %v3300
        %v3302 = vpop.xlane.xlu0 %3301
        %v3303 = vadd.f32 %v3185, %v3187
        %3304 = vadd.xlane.f32.xlu0 %v3303
        %v3305 = vpop.xlane.xlu0 %3304
        %v3306 = vadd.f32 %v3189, %v3191
        %3307 = vadd.xlane.f32.xlu0 %v3306
        %v3308 = vpop.xlane.xlu0 %3307
        %v3309 = vadd.f32 %v3193, %v3195
        %3310 = vadd.xlane.f32.xlu0 %v3309
        %v3311 = vpop.xlane.xlu0 %3310
        %v3312 = vadd.f32 %v3197, %v3199
        %3313 = vadd.xlane.f32.xlu0 %v3312
        %v3314 = vpop.xlane.xlu0 %3313
        %v3315 = vadd.f32 %v3201, %v3203
        %3316 = vadd.xlane.f32.xlu0 %v3315
        %v3317 = vpop.xlane.xlu0 %3316
        %v3318 = vadd.f32 %v3205, %v3207
        %3319 = vadd.xlane.f32.xlu0 %v3318
        %v3320 = vpop.xlane.xlu0 %3319
        %v3321 = vadd.f32 %v3209, %v3211
        %3322 = vadd.xlane.f32.xlu0 %v3321
        %v3323 = vpop.xlane.xlu0 %3322
        %v3324 = vadd.f32 %v3213, %v3215
        %3325 = vadd.xlane.f32.xlu0 %v3324
        %v3326 = vpop.xlane.xlu0 %3325
        %v3327 = vadd.f32 %v3217, %v3219
        %3328 = vadd.xlane.f32.xlu0 %v3327
        %v3329 = vpop.xlane.xlu0 %3328
        %v3330 = vadd.f32 %v3221, %v3223
        %3331 = vadd.xlane.f32.xlu0 %v3330
        %v3332 = vpop.xlane.xlu0 %3331
        %v3333 = vadd.f32 %v3225, %v3227
        %3334 = vadd.xlane.f32.xlu0 %v3333
        %v3335 = vpop.xlane.xlu0 %3334
        %v3336 = vadd.f32 %v3229, %v3231
        %3337 = vadd.xlane.f32.xlu0 %v3336
        %v3338 = vpop.xlane.xlu0 %3337
        %v3339 = vadd.f32 %v3233, %v3235
        %3340 = vadd.xlane.f32.xlu0 %v3339
        %v3341 = vpop.xlane.xlu0 %3340
        %v3342 = vadd.f32 %v3237, %v3239
        %3343 = vadd.xlane.f32.xlu0 %v3342
        %v3344 = vpop.xlane.xlu0 %3343
        %v3345 = vadd.f32 %v3241, %v3243
        %3346 = vadd.xlane.f32.xlu0 %v3345
        %v3347 = vpop.xlane.xlu0 %3346
        %v3348 = vadd.f32 %v3245, %v3247
        %3349 = vadd.xlane.f32.xlu0 %v3348
        %v3350 = vpop.xlane.xlu0 %3349
        %v3351 = vadd.f32 %v3249, %v3251
        %3352 = vadd.xlane.f32.xlu0 %v3351
        %v3353 = vpop.xlane.xlu0 %3352
        %v3354 = vadd.f32 %v3253, %v3255
        %3355 = vadd.xlane.f32.xlu0 %v3354
        %v3356 = vpop.xlane.xlu0 %3355
        %v3357 = vadd.f32 %v3257, %v3259
        %3358 = vadd.xlane.f32.xlu0 %v3357
        %v3359 = vpop.xlane.xlu0 %3358
        %v3360 = vadd.f32 %v3261, %v3263
        %3361 = vadd.xlane.f32.xlu0 %v3360
        %v3362 = vpop.xlane.xlu0 %3361
        %v3363 = vadd.f32 %v3265, %v3267
        %3364 = vadd.xlane.f32.xlu0 %v3363
        %v3365 = vpop.xlane.xlu0 %3364
        %v3366 = vadd.f32 %v3269, %v3271
        %3367 = vadd.xlane.f32.xlu0 %v3366
        %v3368 = vpop.xlane.xlu0 %3367
        %v3369 = vadd.f32 %v3273, %v3275
        %3370 = vadd.xlane.f32.xlu0 %v3369
        %v3371 = vpop.xlane.xlu0 %3370
        %v3372 = vrcp.pop %v3278
        %v3373 = vrcp.pop %v3281
        %v3374 = vrcp.pop %v3284
        %v3375 = vrcp.pop %v3287
        %v3376 = vrcp.pop %v3290
        %v3377 = vrcp.pop %v3293
        %v3378 = vrcp.pop %v3296
        %v3379 = vrcp.pop %v3299
        %v3380 = vrcp.pop %v3302
        %v3381 = vrcp.pop %v3305
        %v3382 = vrcp.pop %v3308
        %v3383 = vrcp.pop %v3311
        %v3384 = vrcp.pop %v3314
        %v3385 = vrcp.pop %v3317
        %v3386 = vrcp.pop %v3320
        %v3387 = vrcp.pop %v3323
        %v3388 = vrcp.pop %v3326
        %v3389 = vrcp.pop %v3329
        %v3390 = vrcp.pop %v3332
        %v3391 = vrcp.pop %v3335
        %v3392 = vrcp.pop %v3338
        %v3393 = vrcp.pop %v3341
        %v3394 = vrcp.pop %v3344
        %v3395 = vrcp.pop %v3347
        %v3396 = vrcp.pop %v3350
        %v3397 = vrcp.pop %v3353
        %v3398 = vrcp.pop %v3356
        %v3399 = vrcp.pop %v3359
        %v3400 = vrcp.pop %v3362
        %v3401 = vrcp.pop %v3365
        %v3402 = vrcp.pop %v3368
        %v3403 = vrcp.pop %v3371
        %v3404 = vmul.f32 %v3149, %v3372
        %v3405 = vmul.f32 %v3151, %v3372
        %v3406 = vmul.f32 %v3153, %v3373
        %v3407 = vmul.f32 %v3155, %v3373
        %v3408 = vmul.f32 %v3157, %v3374
        %v3409 = vmul.f32 %v3159, %v3374
        %v3410 = vmul.f32 %v3161, %v3375
        %v3411 = vmul.f32 %v3163, %v3375
        %v3412 = vmul.f32 %v3165, %v3376
        %v3413 = vmul.f32 %v3167, %v3376
        %v3414 = vmul.f32 %v3169, %v3377
        %v3415 = vmul.f32 %v3171, %v3377
        %v3416 = vmul.f32 %v3173, %v3378
        %v3417 = vmul.f32 %v3175, %v3378
        %v3418 = vmul.f32 %v3177, %v3379
        %v3419 = vmul.f32 %v3179, %v3379
        %v3420 = vmul.f32 %v3181, %v3380
        %v3421 = vmul.f32 %v3183, %v3380
        %v3422 = vmul.f32 %v3185, %v3381
        %v3423 = vmul.f32 %v3187, %v3381
        %v3424 = vmul.f32 %v3189, %v3382
        %v3425 = vmul.f32 %v3191, %v3382
        %v3426 = vmul.f32 %v3193, %v3383
        %v3427 = vmul.f32 %v3195, %v3383
        %v3428 = vmul.f32 %v3197, %v3384
        %v3429 = vmul.f32 %v3199, %v3384
        %v3430 = vmul.f32 %v3201, %v3385
        %v3431 = vmul.f32 %v3203, %v3385
        %v3432 = vmul.f32 %v3205, %v3386
        %v3433 = vmul.f32 %v3207, %v3386
        %v3434 = vmul.f32 %v3209, %v3387
        %v3435 = vmul.f32 %v3211, %v3387
        %v3436 = vmul.f32 %v3213, %v3388
        %v3437 = vmul.f32 %v3215, %v3388
        %v3438 = vmul.f32 %v3217, %v3389
        %v3439 = vmul.f32 %v3219, %v3389
        %v3440 = vmul.f32 %v3221, %v3390
        %v3441 = vmul.f32 %v3223, %v3390
        %v3442 = vmul.f32 %v3225, %v3391
        %v3443 = vmul.f32 %v3227, %v3391
        %v3444 = vmul.f32 %v3229, %v3392
        %v3445 = vmul.f32 %v3231, %v3392
        %v3446 = vmul.f32 %v3233, %v3393
        %v3447 = vmul.f32 %v3235, %v3393
        %v3448 = vmul.f32 %v3237, %v3394
        %v3449 = vmul.f32 %v3239, %v3394
        %v3450 = vmul.f32 %v3241, %v3395
        %v3451 = vmul.f32 %v3243, %v3395
        %v3452 = vmul.f32 %v3245, %v3396
        %v3453 = vmul.f32 %v3247, %v3396
        %v3454 = vmul.f32 %v3249, %v3397
        %v3455 = vmul.f32 %v3251, %v3397
        %v3456 = vmul.f32 %v3253, %v3398
        %v3457 = vmul.f32 %v3255, %v3398
        %v3458 = vmul.f32 %v3257, %v3399
        %v3459 = vmul.f32 %v3259, %v3399
        %v3460 = vmul.f32 %v3261, %v3400
        %v3461 = vmul.f32 %v3263, %v3400
        %v3462 = vmul.f32 %v3265, %v3401
        %v3463 = vmul.f32 %v3267, %v3401
        %v3464 = vmul.f32 %v3269, %v3402
        %v3465 = vmul.f32 %v3271, %v3402
        %v3466 = vmul.f32 %v3273, %v3403
        %v3467 = vmul.f32 %v3275, %v3403
        %3468 = vmatprep.subr.mxu0 0.0
        %3469 = vmatpush1.msra.mxu0 %v2445
        %3470 = vmatprep.subr.mxu0 0.0
        %3471 = vmatpush1.msra.mxu0 %v2450
        %3472 = vmatprep.subr.mxu0 0.0
        %3473 = vmatpush1.msra.mxu0 %v2455
        %3474 = vmatprep.subr.mxu0 0.0
        %3475 = vmatpush1.msra.mxu0 %v2460
        %3476 = vmatprep.subr.mxu0 0.0
        %3477 = vmatpush1.msra.mxu0 %v2465
        %3478 = vmatprep.subr.mxu0 0.0
        %3479 = vmatpush1.msra.mxu0 %v2470
        %3480 = vmatprep.subr.mxu0 0.0
        %3481 = vmatpush1.msra.mxu0 %v2475
        %3482 = vmatprep.subr.mxu0 0.0
        %3483 = vmatpush1.msra.mxu0 %v2480
        %3484 = vmatprep.subr.mxu0 0.0
        %3485 = vmatpush1.msra.mxu0 %v2485
        %3486 = vmatprep.subr.mxu0 0.0
        %3487 = vmatpush1.msra.mxu0 %v2490
        %3488 = vmatprep.subr.mxu0 0.0
        %3489 = vmatpush1.msra.mxu0 %v2495
        %3490 = vmatprep.subr.mxu0 0.0
        %3491 = vmatpush1.msra.mxu0 %v2500
        %3492 = vmatprep.subr.mxu0 0.0
        %3493 = vmatpush1.msra.mxu0 %v2505
        %3494 = vmatprep.subr.mxu0 0.0
        %3495 = vmatpush1.msra.mxu0 %v2510
        %3496 = vmatprep.subr.mxu0 0.0
        %3497 = vmatpush1.msra.mxu0 %v2515
        %3498 = vmatprep.subr.mxu0 0.0
        %3499 = vmatpush1.msra.mxu0 %v2520
        %3500 = vmatprep.subr.mxu0 0.0
        %3501 = vmatpush1.msra.mxu0 %v2525
        %3502 = vmatprep.subr.mxu0 0.0
        %3503 = vmatpush1.msra.mxu0 %v2530
        %3504 = vmatprep.subr.mxu0 0.0
        %3505 = vmatpush1.msra.mxu0 %v2535
        %3506 = vmatprep.subr.mxu0 0.0
        %3507 = vmatpush1.msra.mxu0 %v2540
        %3508 = vmatprep.subr.mxu0 0.0
        %3509 = vmatpush1.msra.mxu0 %v2545
        %3510 = vmatprep.subr.mxu0 0.0
        %3511 = vmatpush1.msra.mxu0 %v2550
        %3512 = vmatprep.subr.mxu0 0.0
        %3513 = vmatpush1.msra.mxu0 %v2555
        %3514 = vmatprep.subr.mxu0 0.0
        %3515 = vmatpush1.msra.mxu0 %v2560
        %3516 = vmatprep.subr.mxu0 0.0
        %3517 = vmatpush1.msra.mxu0 %v2565
        %3518 = vmatprep.subr.mxu0 0.0
        %3519 = vmatpush1.msra.mxu0 %v2570
        %3520 = vmatprep.subr.mxu0 0.0
        %3521 = vmatpush1.msra.mxu0 %v2575
        %3522 = vmatprep.subr.mxu0 0.0
        %3523 = vmatpush1.msra.mxu0 %v2580
        %3524 = vmatprep.subr.mxu0 0.0
        %3525 = vmatpush1.msra.mxu0 %v2585
        %3526 = vmatprep.subr.mxu0 0.0
        %3527 = vmatpush1.msra.mxu0 %v2590
        %3528 = vmatprep.subr.mxu0 0.0
        %3529 = vmatpush1.msra.mxu0 %v2595
        %3530 = vmatprep.subr.mxu0 0.0
        %3531 = vmatpush1.msra.mxu0 %v2600
        %3532 = vmatprep.mubr.f32.mxu0 %v3405
        %3533 = vmatmul.mubr.f32.gmra.mrb[0].mxu0 %v3404
        %v3534 = vpop.f32.mrb[0].mxu0
        %v3535 = vadd.f32 0.0, %v3534
        %v3536 = vpop.f32.mrb[0].mxu0
        %3537 = vmatprep.mubr.f32.mxu0 %v3407
        %3538 = vmatmul.mubr.f32.gmra.mrb[0].mxu0 %v3406
        %v3539 = vpop.f32.mrb[0].mxu0
        %v3540 = vadd.f32 0.0, %v3539
        %v3541 = vpop.f32.mrb[0].mxu0
        %3542 = vmatprep.mubr.f32.mxu0 %v3409
        %3543 = vmatmul.mubr.f32.gmra.mrb[0].mxu0 %v3408
        %v3544 = vpop.f32.mrb[0].mxu0
        %v3545 = vadd.f32 0.0, %v3544
        %v3546 = vpop.f32.mrb[0].mxu0
        %3547 = vmatprep.mubr.f32.mxu0 %v3411
        %3548 = vmatmul.mubr.f32.gmra.mrb[0].mxu0 %v3410
        %v3549 = vpop.f32.mrb[0].mxu0
        %v3550 = vadd.f32 0.0, %v3549
        %v3551 = vpop.f32.mrb[0].mxu0
        %3552 = vmatprep.mubr.f32.mxu0 %v3413
        %3553 = vmatmul.mubr.f32.gmra.mrb[0].mxu0 %v3412
        %v3554 = vpop.f32.mrb[0].mxu0
        %v3555 = vadd.f32 0.0, %v3554
        %v3556 = vpop.f32.mrb[0].mxu0
        %3557 = vmatprep.mubr.f32.mxu0 %v3415
        %3558 = vmatmul.mubr.f32.gmra.mrb[0].mxu0 %v3414
        %v3559 = vpop.f32.mrb[0].mxu0
        %v3560 = vadd.f32 0.0, %v3559
        %v3561 = vpop.f32.mrb[0].mxu0
        %3562 = vmatprep.mubr.f32.mxu0 %v3417
        %3563 = vmatmul.mubr.f32.gmra.mrb[0].mxu0 %v3416
        %v3564 = vpop.f32.mrb[0].mxu0
        %v3565 = vadd.f32 0.0, %v3564
        %v3566 = vpop.f32.mrb[0].mxu0
        %3567 = vmatprep.mubr.f32.mxu0 %v3419
        %3568 = vmatmul.mubr.f32.gmra.mrb[0].mxu0 %v3418
        %v3569 = vpop.f32.mrb[0].mxu0
        %v3570 = vadd.f32 0.0, %v3569
        %v3571 = vpop.f32.mrb[0].mxu0
        %3572 = vmatprep.mubr.f32.mxu0 %v3421
        %3573 = vmatmul.mubr.f32.gmra.mrb[0].mxu0 %v3420
        %v3574 = vpop.f32.mrb[0].mxu0
        %v3575 = vadd.f32 0.0, %v3574
        %v3576 = vpop.f32.mrb[0].mxu0
        %3577 = vmatprep.mubr.f32.mxu0 %v3423
        %3578 = vmatmul.mubr.f32.gmra.mrb[0].mxu0 %v3422
        %v3579 = vpop.f32.mrb[0].mxu0
        %v3580 = vadd.f32 0.0, %v3579
        %v3581 = vpop.f32.mrb[0].mxu0
        %3582 = vmatprep.mubr.f32.mxu0 %v3425
        %3583 = vmatmul.mubr.f32.gmra.mrb[0].mxu0 %v3424
        %v3584 = vpop.f32.mrb[0].mxu0
        %v3585 = vadd.f32 0.0, %v3584
        %v3586 = vpop.f32.mrb[0].mxu0
        %3587 = vmatprep.mubr.f32.mxu0 %v3427
        %3588 = vmatmul.mubr.f32.gmra.mrb[0].mxu0 %v3426
        %v3589 = vpop.f32.mrb[0].mxu0
        %v3590 = vadd.f32 0.0, %v3589
        %v3591 = vpop.f32.mrb[0].mxu0
        %3592 = vmatprep.mubr.f32.mxu0 %v3429
        %3593 = vmatmul.mubr.f32.gmra.mrb[0].mxu0 %v3428
        %v3594 = vpop.f32.mrb[0].mxu0
        %v3595 = vadd.f32 0.0, %v3594
        %v3596 = vpop.f32.mrb[0].mxu0
        %3597 = vmatprep.mubr.f32.mxu0 %v3431
        %3598 = vmatmul.mubr.f32.gmra.mrb[0].mxu0 %v3430
        %v3599 = vpop.f32.mrb[0].mxu0
        %v3600 = vadd.f32 0.0, %v3599
        %v3601 = vpop.f32.mrb[0].mxu0
        %3602 = vmatprep.mubr.f32.mxu0 %v3433
        %3603 = vmatmul.mubr.f32.gmra.mrb[0].mxu0 %v3432
        %v3604 = vpop.f32.mrb[0].mxu0
        %v3605 = vadd.f32 0.0, %v3604
        %v3606 = vpop.f32.mrb[0].mxu0
        %3607 = vmatprep.mubr.f32.mxu0 %v3435
        %3608 = vmatmul.mubr.f32.gmra.mrb[0].mxu0 %v3434
        %v3609 = vpop.f32.mrb[0].mxu0
        %v3610 = vadd.f32 0.0, %v3609
        %v3611 = vpop.f32.mrb[0].mxu0
        %3612 = vmatprep.mubr.f32.mxu0 %v3437
        %3613 = vmatmul.mubr.f32.gmra.mrb[0].mxu0 %v3436
        %v3614 = vpop.f32.mrb[0].mxu0
        %v3615 = vadd.f32 0.0, %v3614
        %v3616 = vpop.f32.mrb[0].mxu0
        %3617 = vmatprep.mubr.f32.mxu0 %v3439
        %3618 = vmatmul.mubr.f32.gmra.mrb[0].mxu0 %v3438
        %v3619 = vpop.f32.mrb[0].mxu0
        %v3620 = vadd.f32 0.0, %v3619
        %v3621 = vpop.f32.mrb[0].mxu0
        %3622 = vmatprep.mubr.f32.mxu0 %v3441
        %3623 = vmatmul.mubr.f32.gmra.mrb[0].mxu0 %v3440
        %v3624 = vpop.f32.mrb[0].mxu0
        %v3625 = vadd.f32 0.0, %v3624
        %v3626 = vpop.f32.mrb[0].mxu0
        %3627 = vmatprep.mubr.f32.mxu0 %v3443
        %3628 = vmatmul.mubr.f32.gmra.mrb[0].mxu0 %v3442
        %v3629 = vpop.f32.mrb[0].mxu0
        %v3630 = vadd.f32 0.0, %v3629
        %v3631 = vpop.f32.mrb[0].mxu0
        %3632 = vmatprep.mubr.f32.mxu0 %v3445
        %3633 = vmatmul.mubr.f32.gmra.mrb[0].mxu0 %v3444
        %v3634 = vpop.f32.mrb[0].mxu0
        %v3635 = vadd.f32 0.0, %v3634
        %v3636 = vpop.f32.mrb[0].mxu0
        %3637 = vmatprep.mubr.f32.mxu0 %v3447
        %3638 = vmatmul.mubr.f32.gmra.mrb[0].mxu0 %v3446
        %v3639 = vpop.f32.mrb[0].mxu0
        %v3640 = vadd.f32 0.0, %v3639
        %v3641 = vpop.f32.mrb[0].mxu0
        %3642 = vmatprep.mubr.f32.mxu0 %v3449
        %3643 = vmatmul.mubr.f32.gmra.mrb[0].mxu0 %v3448
        %v3644 = vpop.f32.mrb[0].mxu0
        %v3645 = vadd.f32 0.0, %v3644
        %v3646 = vpop.f32.mrb[0].mxu0
        %3647 = vmatprep.mubr.f32.mxu0 %v3451
        %3648 = vmatmul.mubr.f32.gmra.mrb[0].mxu0 %v3450
        %v3649 = vpop.f32.mrb[0].mxu0
        %v3650 = vadd.f32 0.0, %v3649
        %v3651 = vpop.f32.mrb[0].mxu0
        %3652 = vmatprep.mubr.f32.mxu0 %v3453
        %3653 = vmatmul.mubr.f32.gmra.mrb[0].mxu0 %v3452
        %v3654 = vpop.f32.mrb[0].mxu0
        %v3655 = vadd.f32 0.0, %v3654
        %v3656 = vpop.f32.mrb[0].mxu0
        %3657 = vmatprep.mubr.f32.mxu0 %v3455
        %3658 = vmatmul.mubr.f32.gmra.mrb[0].mxu0 %v3454
        %v3659 = vpop.f32.mrb[0].mxu0
        %v3660 = vadd.f32 0.0, %v3659
        %v3661 = vpop.f32.mrb[0].mxu0
        %3662 = vmatprep.mubr.f32.mxu0 %v3457
        %3663 = vmatmul.mubr.f32.gmra.mrb[0].mxu0 %v3456
        %v3664 = vpop.f32.mrb[0].mxu0
        %v3665 = vadd.f32 0.0, %v3664
        %v3666 = vpop.f32.mrb[0].mxu0
        %3667 = vmatprep.mubr.f32.mxu0 %v3459
        %3668 = vmatmul.mubr.f32.gmra.mrb[0].mxu0 %v3458
        %v3669 = vpop.f32.mrb[0].mxu0
        %v3670 = vadd.f32 0.0, %v3669
        %v3671 = vpop.f32.mrb[0].mxu0
        %3672 = vmatprep.mubr.f32.mxu0 %v3461
        %3673 = vmatmul.mubr.f32.gmra.mrb[0].mxu0 %v3460
        %v3674 = vpop.f32.mrb[0].mxu0
        %v3675 = vadd.f32 0.0, %v3674
        %v3676 = vpop.f32.mrb[0].mxu0
        %3677 = vmatprep.mubr.f32.mxu0 %v3463
        %3678 = vmatmul.mubr.f32.gmra.mrb[0].mxu0 %v3462
        %v3679 = vpop.f32.mrb[0].mxu0
        %v3680 = vadd.f32 0.0, %v3679
        %v3681 = vpop.f32.mrb[0].mxu0
        %3682 = vmatprep.mubr.f32.mxu0 %v3465
        %3683 = vmatmul.mubr.f32.gmra.mrb[0].mxu0 %v3464
        %v3684 = vpop.f32.mrb[0].mxu0
        %v3685 = vadd.f32 0.0, %v3684
        %v3686 = vpop.f32.mrb[0].mxu0
        %3687 = vmatprep.mubr.f32.mxu0 %v3467
        %3688 = vmatmul.mubr.f32.gmra.mrb[0].mxu0 %v3466
        %v3689 = vpop.f32.mrb[0].mxu0
        %v3690 = vadd.f32 0.0, %v3689
        %v3691 = vpop.f32.mrb[0].mxu0
        %3692 = vdwg.mxu0
        %v3693 = vadd.f32 %v1898, %v3535
        %v3694 = vadd.f32 %v1903, %v3540
        %v3695 = vadd.f32 %v1908, %v3545
        %v3696 = vadd.f32 %v1913, %v3550
        %v3697 = vadd.f32 %v1918, %v3555
        %v3698 = vadd.f32 %v1923, %v3560
        %v3699 = vadd.f32 %v1928, %v3565
        %v3700 = vadd.f32 %v1933, %v3570
        %v3701 = vadd.f32 %v1938, %v3575
        %v3702 = vadd.f32 %v1943, %v3580
        %v3703 = vadd.f32 %v1948, %v3585
        %v3704 = vadd.f32 %v1953, %v3590
        %v3705 = vadd.f32 %v1958, %v3595
        %v3706 = vadd.f32 %v1963, %v3600
        %v3707 = vadd.f32 %v1968, %v3605
        %v3708 = vadd.f32 %v1973, %v3610
        %v3709 = vadd.f32 %v1978, %v3615
        %v3710 = vadd.f32 %v1983, %v3620
        %v3711 = vadd.f32 %v1988, %v3625
        %v3712 = vadd.f32 %v1993, %v3630
        %v3713 = vadd.f32 %v1998, %v3635
        %v3714 = vadd.f32 %v2003, %v3640
        %v3715 = vadd.f32 %v2008, %v3645
        %v3716 = vadd.f32 %v2013, %v3650
        %v3717 = vadd.f32 %v2018, %v3655
        %v3718 = vadd.f32 %v2023, %v3660
        %v3719 = vadd.f32 %v2028, %v3665
        %v3720 = vadd.f32 %v2033, %v3670
        %v3721 = vadd.f32 %v2038, %v3675
        %v3722 = vadd.f32 %v2043, %v3680
        %v3723 = vadd.f32 %v2048, %v3685
        %v3724 = vadd.f32 %v2053, %v3690
        %3725 = vst [vmem:[%s260] sm:$0xff] %v3693
        %3726 = vst [vmem:[%s260 + $0x8] sm:$0xff] %v3694
        %3727 = vst [vmem:[%s260 + $0x10] sm:$0xff] %v3695
        %3728 = vst [vmem:[%s260 + $0x18] sm:$0xff] %v3696
        %3729 = vst [vmem:[%s260 + $0x20] sm:$0xff] %v3697
        %3730 = vst [vmem:[%s260 + $0x28] sm:$0xff] %v3698
        %3731 = vst [vmem:[%s260 + $0x30] sm:$0xff] %v3699
        %3732 = vst [vmem:[%s260 + $0x38] sm:$0xff] %v3700
        %3733 = vst [vmem:[%s260 + $0x40] sm:$0xff] %v3701
        %3734 = vst [vmem:[%s260 + $0x48] sm:$0xff] %v3702
        %3735 = vst [vmem:[%s260 + $0x50] sm:$0xff] %v3703
        %3736 = vst [vmem:[%s260 + $0x58] sm:$0xff] %v3704
        %3737 = vst [vmem:[%s260 + $0x60] sm:$0xff] %v3705
        %3738 = vst [vmem:[%s260 + $0x68] sm:$0xff] %v3706
        %3739 = vst [vmem:[%s260 + $0x70] sm:$0xff] %v3707
        %3740 = vst [vmem:[%s260 + $0x78] sm:$0xff] %v3708
        %3741 = vst [vmem:[%s260 + $0x80] sm:$0xff] %v3709
        %3742 = vst [vmem:[%s260 + $0x88] sm:$0xff] %v3710
        %3743 = vst [vmem:[%s260 + $0x90] sm:$0xff] %v3711
        %3744 = vst [vmem:[%s260 + $0x98] sm:$0xff] %v3712
        %3745 = vst [vmem:[%s260 + $0xa0] sm:$0xff] %v3713
        %3746 = vst [vmem:[%s260 + $0xa8] sm:$0xff] %v3714
        %3747 = vst [vmem:[%s260 + $0xb0] sm:$0xff] %v3715
        %3748 = vst [vmem:[%s260 + $0xb8] sm:$0xff] %v3716
        %3749 = vst [vmem:[%s260 + $0xc0] sm:$0xff] %v3717
        %3750 = vst [vmem:[%s260 + $0xc8] sm:$0xff] %v3718
        %3751 = vst [vmem:[%s260 + $0xd0] sm:$0xff] %v3719
        %3752 = vst [vmem:[%s260 + $0xd8] sm:$0xff] %v3720
        %3753 = vst [vmem:[%s260 + $0xe0] sm:$0xff] %v3721
        %3754 = vst [vmem:[%s260 + $0xe8] sm:$0xff] %v3722
        %3755 = vst [vmem:[%s260 + $0xf0] sm:$0xff] %v3723
        %3756 = vst [vmem:[%s260 + $0xf8] sm:$0xff] %v3724
        %s3757 = sand.u32 %s160, 1
        %s3758 = scalar_lea.sflag [#allocation4], %s3757
        %s3759 = sand.u32 %s160, 1
        %s3760 = smul.addr %s3759, 256
        %s3761 = scalar_lea.vmem [#allocation5], %s3760
        // Predicated region
        $region49: #{tpu_custom_call.1} parent=43 // pred_check
          %p3762 = pneg %p170
        $region50: #{tpu_custom_call.1} parent=43 // pred_check_branch
          %3764 = sbr.rel (%p3762) target = $region52
        $region51: #{tpu_custom_call.1} parent=43 // pred_region
          %s3765 = smul.u32 32, %s21
          %s3767 = ssub.s32 4096, 4096
          %3768 = vsyncadd %s3758, %s3767
          %s3769 = smul.addr %s3765, 128
          %s3770 = scalar_lea.hbm %s6, %s3769
          %s3771 = sshll.u32 %s3761, 4
          %s3772 = int_to_ptr.vmem [resolvable:$true] %s3771
          %3777 = dma.vmem_to_hbm [thread:$0]  %s3772, 4096, %s3770, %s3758, 128, 128, 8
        $region52: #{tpu_custom_call.1} parent=43 // pred_fallthru
          _
      $region44: #{tpu_custom_call.1} parent=5 // pred_fallthru
        _
      %p3778 = scmp.le.s32.totalorder 2, %s16
      // Predicated region
      $region53: #{tpu_custom_call.1} parent=5 // pred_check
        %p3779 = pneg %p3778
      $region54: #{tpu_custom_call.1} parent=5 // pred_check_branch
        %3781 = sbr.rel (%p3779) target = $region56
      $region55: #{tpu_custom_call.1} parent=5 // pred_region
        %s3782 = ssub.s32 %s16, 2
        // Predicated region
        $region57: #{tpu_custom_call.1} parent=55 // pred_check
          %p3783 = pneg %p176
        $region58: #{tpu_custom_call.1} parent=55 // pred_check_branch
          %3785 = sbr.rel (%p3783) target = $region60
        $region59: #{tpu_custom_call.1} parent=55 // pred_region
          %s3786 = sand.u32 %s161, 1
          %s3787 = scalar_lea.sflag [#allocation4], %s3786
          %s3788 = sand.u32 %s161, 1
          %s3789 = smul.addr %s3788, 256
          %s3790 = scalar_lea.vmem [#allocation5], %s3789
          %3791 = dma.done %s3787, 4096
        $region60: #{tpu_custom_call.1} parent=55 // pred_fallthru
          _
      $region56: #{tpu_custom_call.1} parent=5 // pred_fallthru
        _
    $region6: #{tpu_custom_call.1} parent=1 // loop_footer
      %s20 = sadd.s32 1, %s16
    $region7: #{tpu_custom_call.1} parent=1 // loop_footer_branch
      %15 = sbr.rel target = $region3
    $region8: #{tpu_custom_call.1} parent=1 // loop_exit
      _
    %3792 = vsyncpa [#allocation3], 1
    %s3793 = scalar_lea.sflag [#allocation3], 1
    %3794 = vsyncpa %s3793, 1
    %3795 = vsyncpa [#allocation4], 1
    %s3796 = scalar_lea.sflag [#allocation4], 1
    %3797 = vsyncpa %s3796, 1

</llo_original>
